<compile_context>
chip_gen: v7x
topology: tpu7x:2x2x1
jax: 0.10.0
libtpu: 0.0.40
codegen_flags: <defaults>
</compile_context>

<pallas_src>
import functools

import jax
import jax.numpy as jnp
from jax.experimental import pallas as pl
from jax.experimental.pallas import tpu as pltpu


def ffn_kernel(x_ref, w1_ref, b1_ref, w2_ref, b2_ref, o_ref, *, swish_bf16):
    # --- LayerNorm over the feature dim (affine already folded into w1/b1) ---
    x = x_ref[...]                                        # (TM, D) f32
    mean = jnp.mean(x, axis=-1, keepdims=True)
    xc = x - mean
    var = jnp.mean(xc * xc, axis=-1, keepdims=True)
    xn = xc * jax.lax.rsqrt(var + 1e-5)

    # --- linear_a: D -> H; bf16 MXU operands, f32 accumulation, f32 bias ---
    h = jnp.dot(xn.astype(jnp.bfloat16), w1_ref[...],
                preferred_element_type=jnp.float32) + b1_ref[...]

    # --- Swish: x * sigmoid(x) ---
    if swish_bf16:
        # v6e / v7x: bf16 EUP+VPU; result feeds the second MXU dot directly.
        hb = h.astype(jnp.bfloat16)
        p = hb * jax.nn.sigmoid(hb)
    else:
        # v5e: no bf16 VPU/EUP; keep f32 and route the divide to the EUP.
        sig = pl.reciprocal(1.0 + jnp.exp(-h), approx=True)
        p = (h * sig).astype(jnp.bfloat16)

    # dropout: identity at inference.
    # TODO(synk): training-mode dropout (pltpu.prng_random_bits mask) not implemented.

    # --- linear_b: H -> D ---
    y = jnp.dot(p, w2_ref[...], preferred_element_type=jnp.float32) + b2_ref[...]
    # second dropout: identity at inference.
    o_ref[...] = y.astype(o_ref.dtype)


def prepare_ffn_params(gamma, beta, w1, b1, w2, b2):
    """One-time parameter preparation (keep out of the hot path).

    Folds the LayerNorm affine into linear_a and pre-casts weights to bf16:
        w1' = diag(gamma) @ w1   (bf16)     b1' = b1 + beta @ w1   (f32)
    """
    gamma = gamma.reshape(-1).astype(jnp.float32)
    beta = beta.reshape(1, -1).astype(jnp.float32)
    w1 = w1.astype(jnp.float32)
    w1f = (gamma[:, None] * w1).astype(jnp.bfloat16)
    b1f = b1.reshape(1, -1).astype(jnp.float32) + beta @ w1
    w2f = w2.astype(jnp.bfloat16)
    b2f = b2.reshape(1, -1).astype(jnp.float32)
    return w1f, b1f, w2f, b2f


def _chip_kind():
    try:
        return jax.devices()[0].device_kind.lower()
    except Exception:
        return ""


def _vmem_tm_cap(D, H, vmem_limit):
    # Single-buffered bf16 weights + f32 biases.
    weight_bytes = 2 * D * H * 2 + (H + D) * 4
    # Per token-row VMEM: x + out tiles (f32, double-buffered), f32 hidden slab,
    # bf16 hidden slab, ~2 f32 D-wide LayerNorm temporaries.
    per_row = 2 * (D * 4) * 2 + H * 4 + H * 2 + 2 * D * 4
    budget = int(vmem_limit * 0.75) - weight_bytes
    if budget <= per_row * 8:
        return 8
    return max(8, (budget // per_row) // 8 * 8)


def _choose_tm(M, max_tm):
    """Pick a token-tile size, preferring divisors of M (no pad/slice copies)."""
    if M <= max_tm:
        return M, False                    # one full tile (block == array dim)
    t = (min(max_tm, M) // 8) * 8
    for cand in range(t, 7, -8):           # largest multiple-of-8 divisor
        if M % cand == 0:
            return cand, False
    return max(8, t), True                 # ragged M: fall back to padding


def feed_forward_module(x, params, *, tm=None):
    """x: (B, S, D) float32.  params: output of prepare_ffn_params.

    Returns (B, S, D) float32.
    """
    w1_bf, b1f, w2_bf, b2f = params
    B, S, D = x.shape
    H = w1_bf.shape[1]
    M = B * S

    kind = _chip_kind()
    is_v7 = "v7" in kind
    swish_bf16 = is_v7 or ("v6" in kind)   # v5e and unknown chips stay f32
    # Per-generation VMEM budget: v7x has 64 MiB per TC (weights + tile buffers
    # duplicated per core under megacore); v5e/v6e have 128 MiB.
    vmem_limit = (48 if is_v7 else 100) * 1024 * 1024
    max_tm = tm if tm is not None else (512 if is_v7 else 1024)
    max_tm = min(max_tm, _vmem_tm_cap(D, H, vmem_limit))
    TM, needs_pad = _choose_tm(M, max_tm)

    x2 = x.reshape(M, D)
    Mp = M
    if needs_pad:
        # Padded zero rows stay finite (var=0 -> rsqrt(1e-5)) and are sliced off.
        Mp = pl.cdiv(M, TM) * TM
        x2 = jnp.pad(x2, ((0, Mp - M), (0, 0)))
    grid = (Mp // TM,)

    weight_bytes = 2 * D * H * 2 + (H + D) * 4
    cost = pl.CostEstimate(
        flops=4 * Mp * D * H,                 # two (M,D)x(D,H)-class matmuls
        transcendentals=Mp * (H + 1),         # sigmoid + rsqrt
        bytes_accessed=Mp * D * 4 * 2 + weight_bytes,
    )
    out_shape = jax.ShapeDtypeStruct((Mp, D), jnp.float32)

    def build(single_buffer_weights, swish_in_bf16):
        kernel = functools.partial(ffn_kernel, swish_bf16=swish_in_bf16)

        def resident(shape):
            if single_buffer_weights:
                return pl.BlockSpec(shape, lambda i: (0, 0),
                                    pipeline_mode=pl.Buffered(1))
            return pl.BlockSpec(shape, lambda i: (0, 0))

        return pl.pallas_call(
            kernel,
            out_shape=out_shape,
            grid_spec=pltpu.PrefetchScalarGridSpec(
                num_scalar_prefetch=0,
                grid=grid,
                in_specs=[
                    pl.BlockSpec((TM, D), lambda i: (i, 0)),   # x tile (pipelined)
                    resident((D, H)),                          # w1 (bf16, LN-folded)
                    resident((1, H)),                          # b1 (f32, LN-folded)
                    resident((H, D)),                          # w2 (bf16)
                    resident((1, D)),                          # b2 (f32)
                ],
                out_specs=pl.BlockSpec((TM, D), lambda i: (i, 0)),
            ),
            compiler_params=pltpu.CompilerParams(
                dimension_semantics=("parallel",),   # megacore sharding over tokens
                vmem_limit_bytes=vmem_limit,
            ),
            cost_estimate=cost,
        )

    try:
        out = build(True, swish_bf16)(x2, w1_bf, b1f, w2_bf, b2f)
    except Exception:
        # Conservative fallback: default double-buffered residents, f32 Swish.
        out = build(False, False)(x2, w1_bf, b1f, w2_bf, b2f)

    if needs_pad:
        out = out[:M]
    return out.reshape(B, S, D)


def _ref_forward(x, gamma, beta, w1, b1, w2, b2):
    """Pure-JAX f32 reference (unfolded LayerNorm affine) for correctness."""
    mean = jnp.mean(x, axis=-1, keepdims=True)
    var = jnp.mean((x - mean) ** 2, axis=-1, keepdims=True)
    xn = (x - mean) / jnp.sqrt(var + 1e-5) * gamma.reshape(1, -1) + beta.reshape(1, -1)
    h = xn @ w1 + b1.reshape(1, -1)
    h = h * jax.nn.sigmoid(h)
    return h @ w2 + b2.reshape(1, -1)


if __name__ == "__main__":
    # Small but lane-dense shapes consistent with the module:
    # encoder_dim D = 128 (multiple of 128), expansion_factor = 4 -> H = 512.
    B, S, D, EXP = 2, 128, 128, 4
    H = D * EXP  # 512

    key = jax.random.PRNGKey(0)
    kx, kg, kb, kw1, kb1, kw2, kb2 = jax.random.split(key, 7)

    x = jax.random.normal(kx, (B, S, D), dtype=jnp.float32)
    # Non-trivial LayerNorm affine so the fold into linear_a is exercised.
    gamma = 1.0 + 0.1 * jax.random.normal(kg, (D,), dtype=jnp.float32)
    beta = 0.1 * jax.random.normal(kb, (D,), dtype=jnp.float32)
    w1 = jax.random.normal(kw1, (D, H), dtype=jnp.float32) * (1.0 / jnp.sqrt(D))
    b1 = jax.random.normal(kb1, (H,), dtype=jnp.float32) * 0.01
    w2 = jax.random.normal(kw2, (H, D), dtype=jnp.float32) * (1.0 / jnp.sqrt(H))
    b2 = jax.random.normal(kb2, (D,), dtype=jnp.float32) * 0.01

    params = prepare_ffn_params(gamma, beta, w1, b1, w2, b2)   # one-time prep

    # tm=128 so the small test exercises a multi-step grid
    # (M = 256 -> 2 tiles; 128 | 256 so the no-pad fast path is used).
    out = feed_forward_module(x, params, tm=128)
    out = jax.block_until_ready(out)

    ref = _ref_forward(x.reshape(B * S, D), gamma, beta, w1, b1, w2, b2).reshape(B, S, D)
    assert out.shape == (B, S, D)
    # Tolerance reflects bf16 MXU operands / bf16 Swish with f32 accumulation.
    err = float(jnp.max(jnp.abs(out - ref)))
    assert jnp.allclose(out, ref, atol=5e-2, rtol=5e-2), err

    print("KERNEL_OK")
</pallas_src>

<mosaic_0001>
module attributes {stable_mosaic.version = 11 : i64} {
  func.func @ffn_kernel(%arg0: i32, %arg1: memref<128x128xf32, #tpu.memory_space<vmem>>, %arg2: memref<128x512xbf16, #tpu.memory_space<vmem>>, %arg3: memref<1x512xf32, #tpu.memory_space<vmem>>, %arg4: memref<512x128xbf16, #tpu.memory_space<vmem>>, %arg5: memref<1x128xf32, #tpu.memory_space<vmem>>, %arg6: memref<128x128xf32, #tpu.memory_space<vmem>>) attributes {dimension_semantics = [#tpu.dimension_semantics<parallel>], iteration_bounds = array<i64: 2>, scalar_prefetch = 0 : i64, scratch_operands = 0 : i64, tpu.core_type = #tpu.core_type<tc>, window_params = [{transform_indices = @transform_0, window_bounds = array<i64: 128, 128>}, {pipeline_mode = #tpu.pipeline_mode<synchronous>, transform_indices = @transform_1, window_bounds = array<i64: 128, 512>}, {pipeline_mode = #tpu.pipeline_mode<synchronous>, transform_indices = @transform_2, window_bounds = array<i64: 1, 512>}, {pipeline_mode = #tpu.pipeline_mode<synchronous>, transform_indices = @transform_3, window_bounds = array<i64: 512, 128>}, {pipeline_mode = #tpu.pipeline_mode<synchronous>, transform_indices = @transform_4, window_bounds = array<i64: 1, 128>}, {transform_indices = @transform_5, window_bounds = array<i64: 128, 128>}]} {
    %c0 = arith.constant 0 : index
    %c0_0 = arith.constant 0 : index
    %0 = vector.load %arg1[%c0, %c0_0] : memref<128x128xf32, #tpu.memory_space<vmem>>, vector<128x128xf32>
    %cst = arith.constant dense<0.000000e+00> : vector<128xf32>
    %1 = vector.multi_reduction <add>, %0, %cst [1] : vector<128x128xf32> to vector<128xf32>
    %2 = vector.shape_cast %1 : vector<128xf32> to vector<128x1xf32>
    %cst_1 = arith.constant 1.280000e+02 : f32
    %3 = vector.broadcast %cst_1 : f32 to vector<128x1xf32>
    %4 = arith.divf %2, %3 : vector<128x1xf32>
    %5 = vector.broadcast %4 : vector<128x1xf32> to vector<128x128xf32>
    %6 = arith.subf %0, %5 : vector<128x128xf32>
    %7 = arith.mulf %6, %6 : vector<128x128xf32>
    %cst_2 = arith.constant dense<0.000000e+00> : vector<128xf32>
    %8 = vector.multi_reduction <add>, %7, %cst_2 [1] : vector<128x128xf32> to vector<128xf32>
    %9 = vector.shape_cast %8 : vector<128xf32> to vector<128x1xf32>
    %cst_3 = arith.constant 1.280000e+02 : f32
    %10 = vector.broadcast %cst_3 : f32 to vector<128x1xf32>
    %11 = arith.divf %9, %10 : vector<128x1xf32>
    %cst_4 = arith.constant 9.99999974E-6 : f32
    %12 = vector.broadcast %cst_4 : f32 to vector<128x1xf32>
    %13 = arith.addf %11, %12 : vector<128x1xf32>
    %14 = math.rsqrt %13 : vector<128x1xf32>
    %15 = vector.broadcast %14 : vector<128x1xf32> to vector<128x128xf32>
    %16 = arith.mulf %6, %15 : vector<128x128xf32>
    %17 = arith.truncf %16 : vector<128x128xf32> to vector<128x128xbf16>
    %c0_5 = arith.constant 0 : index
    %c0_6 = arith.constant 0 : index
    %18 = vector.load %arg2[%c0_5, %c0_6] : memref<128x512xbf16, #tpu.memory_space<vmem>>, vector<128x512xbf16>
    %cst_7 = arith.constant dense<0.000000e+00> : vector<128x512xf32>
    %19 = tpu.matmul %17, %18, %cst_7 {dimension_numbers = #tpu.dot_dimension_numbers<[1], [0], [0], [1], [0, 0, 1, 1], [], []>} : vector<128x128xbf16>, vector<128x512xbf16>, vector<128x512xf32> -> vector<128x512xf32>
    %c0_8 = arith.constant 0 : index
    %c0_9 = arith.constant 0 : index
    %20 = vector.load %arg3[%c0_8, %c0_9] : memref<1x512xf32, #tpu.memory_space<vmem>>, vector<1x512xf32>
    %21 = vector.broadcast %20 : vector<1x512xf32> to vector<128x512xf32>
    %22 = arith.addf %19, %21 : vector<128x512xf32>
    %cst_10 = arith.constant 0.000000e+00 : f32
    %23 = vector.broadcast %cst_10 : f32 to vector<128x512xf32>
    %24 = arith.subf %23, %22 : vector<128x512xf32>
    %25 = math.exp %24 : vector<128x512xf32>
    %cst_11 = arith.constant 1.000000e+00 : f32
    %26 = vector.broadcast %cst_11 : f32 to vector<128x512xf32>
    %27 = arith.addf %26, %25 : vector<128x512xf32>
    %28 = tpu.reciprocal %27 {approx = true} : vector<128x512xf32> -> vector<128x512xf32>
    %29 = arith.mulf %22, %28 : vector<128x512xf32>
    %30 = arith.truncf %29 : vector<128x512xf32> to vector<128x512xbf16>
    %c0_12 = arith.constant 0 : index
    %c0_13 = arith.constant 0 : index
    %31 = vector.load %arg4[%c0_12, %c0_13] : memref<512x128xbf16, #tpu.memory_space<vmem>>, vector<512x128xbf16>
    %cst_14 = arith.constant dense<0.000000e+00> : vector<128x128xf32>
    %32 = tpu.matmul %30, %31, %cst_14 {dimension_numbers = #tpu.dot_dimension_numbers<[1], [0], [0], [1], [0, 0, 1, 1], [], []>} : vector<128x512xbf16>, vector<512x128xbf16>, vector<128x128xf32> -> vector<128x128xf32>
    %c0_15 = arith.constant 0 : index
    %c0_16 = arith.constant 0 : index
    %33 = vector.load %arg5[%c0_15, %c0_16] : memref<1x128xf32, #tpu.memory_space<vmem>>, vector<1x128xf32>
    %34 = vector.broadcast %33 : vector<1x128xf32> to vector<128x128xf32>
    %35 = arith.addf %32, %34 : vector<128x128xf32>
    %c0_17 = arith.constant 0 : index
    %c0_18 = arith.constant 0 : index
    %36 = vector.load %arg6[%c0_17, %c0_18] : memref<128x128xf32, #tpu.memory_space<vmem>>, vector<128x128xf32>
    tpu.vector_store %arg6[%c0_17, %c0_18], %35 {strides = array<i32>} : memref<128x128xf32, #tpu.memory_space<vmem>>, vector<128x128xf32>,
    return
  }
  func.func @transform_0(%arg0: i32) -> (i32, i32) {
    %c0_i32 = arith.constant 0 : i32
    %c0_i32_0 = arith.constant 0 : i32
    return %arg0, %c0_i32 : i32, i32
  }
  func.func @transform_1(%arg0: i32) -> (i32, i32) {
    %c0_i32 = arith.constant 0 : i32
    %c0_i32_0 = arith.constant 0 : i32
    %c0_i32_1 = arith.constant 0 : i32
    return %c0_i32, %c0_i32_0 : i32, i32
  }
  func.func @transform_2(%arg0: i32) -> (i32, i32) {
    %c0_i32 = arith.constant 0 : i32
    %c0_i32_0 = arith.constant 0 : i32
    %c0_i32_1 = arith.constant 0 : i32
    return %c0_i32, %c0_i32_0 : i32, i32
  }
  func.func @transform_3(%arg0: i32) -> (i32, i32) {
    %c0_i32 = arith.constant 0 : i32
    %c0_i32_0 = arith.constant 0 : i32
    %c0_i32_1 = arith.constant 0 : i32
    return %c0_i32, %c0_i32_0 : i32, i32
  }
  func.func @transform_4(%arg0: i32) -> (i32, i32) {
    %c0_i32 = arith.constant 0 : i32
    %c0_i32_0 = arith.constant 0 : i32
    %c0_i32_1 = arith.constant 0 : i32
    return %c0_i32, %c0_i32_0 : i32, i32
  }
  func.func @transform_5(%arg0: i32) -> (i32, i32) {
    %c0_i32 = arith.constant 0 : i32
    %c0_i32_0 = arith.constant 0 : i32
    return %arg0, %c0_i32 : i32, i32
  }
}

module attributes {stable_mosaic.version = 11 : i64} {
  func.func @ffn_kernel(%arg0: i32, %arg1: memref<128x128xf32, #tpu.memory_space<vmem>>, %arg2: memref<128x512xbf16, #tpu.memory_space<vmem>>, %arg3: memref<1x512xf32, #tpu.memory_space<vmem>>, %arg4: memref<512x128xbf16, #tpu.memory_space<vmem>>, %arg5: memref<1x128xf32, #tpu.memory_space<vmem>>, %arg6: memref<128x128xf32, #tpu.memory_space<vmem>>) attributes {dimension_semantics = [#tpu.dimension_semantics<parallel>], iteration_bounds = array<i64: 2>, scalar_prefetch = 0 : i64, scratch_operands = 0 : i64, tpu.core_type = #tpu.core_type<tc>, window_params = [{transform_indices = @transform_0, window_bounds = array<i64: 128, 128>}, {pipeline_mode = #tpu.pipeline_mode<synchronous>, transform_indices = @transform_1, window_bounds = array<i64: 128, 512>}, {pipeline_mode = #tpu.pipeline_mode<synchronous>, transform_indices = @transform_2, window_bounds = array<i64: 1, 512>}, {pipeline_mode = #tpu.pipeline_mode<synchronous>, transform_indices = @transform_3, window_bounds = array<i64: 512, 128>}, {pipeline_mode = #tpu.pipeline_mode<synchronous>, transform_indices = @transform_4, window_bounds = array<i64: 1, 128>}, {transform_indices = @transform_5, window_bounds = array<i64: 128, 128>}]} {
    %c0 = arith.constant 0 : index
    %c0_0 = arith.constant 0 : index
    %0 = vector.load %arg1[%c0, %c0_0] : memref<128x128xf32, #tpu.memory_space<vmem>>, vector<128x128xf32>
    %cst = arith.constant dense<0.000000e+00> : vector<128xf32>
    %1 = vector.multi_reduction <add>, %0, %cst [1] : vector<128x128xf32> to vector<128xf32>
    %2 = vector.shape_cast %1 : vector<128xf32> to vector<128x1xf32>
    %cst_1 = arith.constant 1.280000e+02 : f32
    %3 = vector.broadcast %cst_1 : f32 to vector<128x1xf32>
    %4 = arith.divf %2, %3 : vector<128x1xf32>
    %5 = vector.broadcast %4 : vector<128x1xf32> to vector<128x128xf32>
    %6 = arith.subf %0, %5 : vector<128x128xf32>
    %7 = arith.mulf %6, %6 : vector<128x128xf32>
    %cst_2 = arith.constant dense<0.000000e+00> : vector<128xf32>
    %8 = vector.multi_reduction <add>, %7, %cst_2 [1] : vector<128x128xf32> to vector<128xf32>
    %9 = vector.shape_cast %8 : vector<128xf32> to vector<128x1xf32>
    %cst_3 = arith.constant 1.280000e+02 : f32
    %10 = vector.broadcast %cst_3 : f32 to vector<128x1xf32>
    %11 = arith.divf %9, %10 : vector<128x1xf32>
    %cst_4 = arith.constant 9.99999974E-6 : f32
    %12 = vector.broadcast %cst_4 : f32 to vector<128x1xf32>
    %13 = arith.addf %11, %12 : vector<128x1xf32>
    %14 = math.rsqrt %13 : vector<128x1xf32>
    %15 = vector.broadcast %14 : vector<128x1xf32> to vector<128x128xf32>
    %16 = arith.mulf %6, %15 : vector<128x128xf32>
    %17 = arith.truncf %16 : vector<128x128xf32> to vector<128x128xbf16>
    %c0_5 = arith.constant 0 : index
    %c0_6 = arith.constant 0 : index
    %18 = vector.load %arg2[%c0_5, %c0_6] : memref<128x512xbf16, #tpu.memory_space<vmem>>, vector<128x512xbf16>
    %cst_7 = arith.constant dense<0.000000e+00> : vector<128x512xf32>
    %19 = tpu.matmul %17, %18, %cst_7 {dimension_numbers = #tpu.dot_dimension_numbers<[1], [0], [0], [1], [0, 0, 1, 1], [], []>} : vector<128x128xbf16>, vector<128x512xbf16>, vector<128x512xf32> -> vector<128x512xf32>
    %c0_8 = arith.constant 0 : index
    %c0_9 = arith.constant 0 : index
    %20 = vector.load %arg3[%c0_8, %c0_9] : memref<1x512xf32, #tpu.memory_space<vmem>>, vector<1x512xf32>
    %21 = vector.broadcast %20 : vector<1x512xf32> to vector<128x512xf32>
    %22 = arith.addf %19, %21 : vector<128x512xf32>
    %cst_10 = arith.constant 0.000000e+00 : f32
    %23 = vector.broadcast %cst_10 : f32 to vector<128x512xf32>
    %24 = arith.subf %23, %22 : vector<128x512xf32>
    %25 = math.exp %24 : vector<128x512xf32>
    %cst_11 = arith.constant 1.000000e+00 : f32
    %26 = vector.broadcast %cst_11 : f32 to vector<128x512xf32>
    %27 = arith.addf %26, %25 : vector<128x512xf32>
    %28 = tpu.reciprocal %27 {approx = true} : vector<128x512xf32> -> vector<128x512xf32>
    %29 = arith.mulf %22, %28 : vector<128x512xf32>
    %30 = arith.truncf %29 : vector<128x512xf32> to vector<128x512xbf16>
    %c0_12 = arith.constant 0 : index
    %c0_13 = arith.constant 0 : index
    %31 = vector.load %arg4[%c0_12, %c0_13] : memref<512x128xbf16, #tpu.memory_space<vmem>>, vector<512x128xbf16>
    %cst_14 = arith.constant dense<0.000000e+00> : vector<128x128xf32>
    %32 = tpu.matmul %30, %31, %cst_14 {dimension_numbers = #tpu.dot_dimension_numbers<[1], [0], [0], [1], [0, 0, 1, 1], [], []>} : vector<128x512xbf16>, vector<512x128xbf16>, vector<128x128xf32> -> vector<128x128xf32>
    %c0_15 = arith.constant 0 : index
    %c0_16 = arith.constant 0 : index
    %33 = vector.load %arg5[%c0_15, %c0_16] : memref<1x128xf32, #tpu.memory_space<vmem>>, vector<1x128xf32>
    %34 = vector.broadcast %33 : vector<1x128xf32> to vector<128x128xf32>
    %35 = arith.addf %32, %34 : vector<128x128xf32>
    %c0_17 = arith.constant 0 : index
    %c0_18 = arith.constant 0 : index
    %36 = vector.load %arg6[%c0_17, %c0_18] : memref<128x128xf32, #tpu.memory_space<vmem>>, vector<128x128xf32>
    tpu.vector_store %arg6[%c0_17, %c0_18], %35 {strides = array<i32>} : memref<128x128xf32, #tpu.memory_space<vmem>>, vector<128x128xf32>,
    return
  }
  func.func @transform_0(%arg0: i32) -> (i32, i32) {
    %c0_i32 = arith.constant 0 : i32
    %c0_i32_0 = arith.constant 0 : i32
    return %arg0, %c0_i32 : i32, i32
  }
  func.func @transform_1(%arg0: i32) -> (i32, i32) {
    %c0_i32 = arith.constant 0 : i32
    %c0_i32_0 = arith.constant 0 : i32
    %c0_i32_1 = arith.constant 0 : i32
    return %c0_i32, %c0_i32_0 : i32, i32
  }
  func.func @transform_2(%arg0: i32) -> (i32, i32) {
    %c0_i32 = arith.constant 0 : i32
    %c0_i32_0 = arith.constant 0 : i32
    %c0_i32_1 = arith.constant 0 : i32
    return %c0_i32, %c0_i32_0 : i32, i32
  }
  func.func @transform_3(%arg0: i32) -> (i32, i32) {
    %c0_i32 = arith.constant 0 : i32
    %c0_i32_0 = arith.constant 0 : i32
    %c0_i32_1 = arith.constant 0 : i32
    return %c0_i32, %c0_i32_0 : i32, i32
  }
  func.func @transform_4(%arg0: i32) -> (i32, i32) {
    %c0_i32 = arith.constant 0 : i32
    %c0_i32_0 = arith.constant 0 : i32
    %c0_i32_1 = arith.constant 0 : i32
    return %c0_i32, %c0_i32_0 : i32, i32
  }
  func.func @transform_5(%arg0: i32) -> (i32, i32) {
    %c0_i32 = arith.constant 0 : i32
    %c0_i32_0 = arith.constant 0 : i32
    return %arg0, %c0_i32 : i32, i32
  }
}

</mosaic_0001>

<llo_original>
// kernel: tpu_custom_call.1
$region0: #{tpu_custom_call.1}
  #allocation0 [shape = 'u32[]', space=smem, size = 0x4, offset = 0x4, fixed_abs, tag = 'smem constant byte address 0x4 - core index']
  #allocation1 [shape = 'u32[144,128]{1,0:T(1,128)}', space=vmem, size = 0x12000, scoped, tag = 'internal scratch']
  %s0 = inlined_call_operand.hbm [shape: f32[256,128], index: 0, kind: input, shape index: {}]
  %s1 = inlined_call_operand.hbm [shape: bf16[128,512], index: 1, kind: input, shape index: {}]
  %s2 = inlined_call_operand.hbm [shape: f32[1,512], index: 2, kind: input, shape index: {}]
  %s3 = inlined_call_operand.hbm [shape: bf16[512,128], index: 3, kind: input, shape index: {}]
  %s4 = inlined_call_operand.hbm [shape: f32[1,128], index: 4, kind: input, shape index: {}]
  %s5 = inlined_call_operand.hbm [shape: f32[256,128], index: 5, kind: output, shape index: {}]
  %s6 = sld [smem:[#allocation0]]
  $region73: #{tpu_custom_call.1} parent=0
    _
  %s8 = ssub.s32 1, %s6
  %s9 = scalar_select 0, %s8, %s6
  $region1: #{tpu_custom_call.1} parent=0
    #allocation2 [shape = 'u8[131072]{0}', space=vmem, size = 0x20000, scoped, tag = 'input window, operand 0']
    #allocation3 [shape = 's32[2]{0}', space=sflag, size = 0x8, scoped, tag = 'scoped memory for tpu_custom_call.1']
    #allocation4 [shape = 's32[2]{0}', space=sflag, size = 0x8, scoped, tag = 'scoped memory for tpu_custom_call.1']
    #allocation5 [shape = 'u8[131072]{0}', space=vmem, size = 0x20000, scoped, tag = 'input window, operand 1, single buffered']
    #allocation6 [shape = 's32[1]{0}', space=sflag, size = 0x4, scoped, tag = 'scoped memory for tpu_custom_call.1']
    #allocation7 [shape = 'u8[2048]{0}', space=vmem, size = 0x800, scoped, tag = 'input window, operand 2, single buffered']
    #allocation8 [shape = 'u8[131072]{0}', space=vmem, size = 0x20000, scoped, tag = 'input window, operand 3, single buffered']
    #allocation9 [shape = 's32[1]{0}', space=sflag, size = 0x4, scoped, tag = 'scoped memory for tpu_custom_call.1']
    #allocation10 [shape = 'u8[512]{0}', space=vmem, size = 0x400, scoped, tag = 'input window, operand 4, single buffered']
    #allocation11 [shape = 'u8[131072]{0}', space=vmem, size = 0x20000, scoped, tag = 'output window, operand 0']
    %10 = vsyncpa [#allocation3], 0
    %s11 = scalar_lea.sflag [#allocation3], 1
    %12 = vsyncpa %s11, 0
    %13 = vsyncpa [#allocation6], 0
    %14 = vsyncpa [#allocation9], 0
    %15 = vsyncpa [#allocation4], 0
    %s16 = scalar_lea.sflag [#allocation4], 1
    %17 = vsyncpa %s16, 0
    loop: start=0, step=1, limit=4
    $region2: #{tpu_custom_call.1} parent=1 // loop_pre_header
      _
    $region3: #{tpu_custom_call.1} parent=1 // loop_header
      %s19 = sphi 0, %s23
      %p20 = scmp.ge.s32.totalorder %s19, 4
      %s29 = sphi 0, %s31
      %s32 = sphi 0, %s29
      %s33 = sphi 0, %s32
      %s49 = sphi 0, %s33
      %s53 = sphi 0, %s53
      %s55 = sphi 0, %s53
      %s56 = sphi 0, %s55
      %s70 = sphi 0, %s56
      %s74 = sphi 0, %s74
      %s76 = sphi 0, %s74
      %s77 = sphi 0, %s76
      %s91 = sphi 0, %s77
      %s95 = sphi 0, %s95
      %s97 = sphi 0, %s95
      %s98 = sphi 0, %s97
      %s112 = sphi 0, %s98
      %s116 = sphi 0, %s116
      %s118 = sphi 0, %s116
      %s119 = sphi 0, %s118
      %s133 = sphi 0, %s119
      %s139 = sphi 0, %s141
      %s142 = sphi 0, %s139
      %s143 = sphi 0, %s142
      %s159 = sphi 0, %s143
    $region4: #{tpu_custom_call.1} parent=1 // loop_header_branch
      %22 = sbr.rel (%p20) target = $region8
    $region5: #{tpu_custom_call.1} parent=1 // loop_body
      %s24 = ssub.s32 %s19, 1
      %s25 = ssub.s32 %s19, 2
      %s26 = sadd.s32 %s19, 1
      %s27 = ssub.s32 %s19, %s26
      %p28 = scmp.eq.s32.totalorder %s27, 0
      %s30 = sadd.s32 %s29, 1
      %s31 = scalar_select %p28, %s29, %s30
      %p34 = pneg %p28
      %p35 = scmp.eq.s32.totalorder %s19, 1
      %p36 = por %p34, %p35
      %p37 = scmp.ne.s32.totalorder %s29, %s32
      %p38 = scmp.eq.s32.totalorder %s19, 0
      %p39 = por %p37, %p38
      %p40 = scmp.ne.s32.totalorder %s29, %s32
      %p41 = scmp.eq.s32.totalorder %s24, 1
      %p42 = por %p40, %p41
      %p43 = scmp.ne.s32.totalorder %s32, %s33
      %p44 = scmp.eq.s32.totalorder %s24, 0
      %p45 = por %p43, %p44
      %p46 = scmp.ne.s32.totalorder %s32, %s33
      %p47 = scmp.eq.s32.totalorder %s25, 1
      %p48 = por %p46, %p47
      %p50 = scmp.ne.s32.totalorder %s33, %s49
      %p51 = scmp.eq.s32.totalorder %s25, 0
      %p52 = por %p50, %p51
      %s54 = sadd.s32 %s53, 1
      %p57 = scmp.eq.s32.totalorder %s19, 1
      %p58 = scmp.ne.s32.totalorder %s53, %s55
      %p59 = scmp.eq.s32.totalorder %s19, 0
      %p60 = por %p58, %p59
      %p61 = scmp.ne.s32.totalorder %s53, %s55
      %p62 = scmp.eq.s32.totalorder %s24, 1
      %p63 = por %p61, %p62
      %p64 = scmp.ne.s32.totalorder %s55, %s56
      %p65 = scmp.eq.s32.totalorder %s24, 0
      %p66 = por %p64, %p65
      %p67 = scmp.ne.s32.totalorder %s55, %s56
      %p68 = scmp.eq.s32.totalorder %s25, 1
      %p69 = por %p67, %p68
      %p71 = scmp.ne.s32.totalorder %s56, %s70
      %p72 = scmp.eq.s32.totalorder %s25, 0
      %p73 = por %p71, %p72
      %s75 = sadd.s32 %s74, 1
      %p78 = scmp.eq.s32.totalorder %s19, 1
      %p79 = scmp.ne.s32.totalorder %s74, %s76
      %p80 = scmp.eq.s32.totalorder %s19, 0
      %p81 = por %p79, %p80
      %p82 = scmp.ne.s32.totalorder %s74, %s76
      %p83 = scmp.eq.s32.totalorder %s24, 1
      %p84 = por %p82, %p83
      %p85 = scmp.ne.s32.totalorder %s76, %s77
      %p86 = scmp.eq.s32.totalorder %s24, 0
      %p87 = por %p85, %p86
      %p88 = scmp.ne.s32.totalorder %s76, %s77
      %p89 = scmp.eq.s32.totalorder %s25, 1
      %p90 = por %p88, %p89
      %p92 = scmp.ne.s32.totalorder %s77, %s91
      %p93 = scmp.eq.s32.totalorder %s25, 0
      %p94 = por %p92, %p93
      %s96 = sadd.s32 %s95, 1
      %p99 = scmp.eq.s32.totalorder %s19, 1
      %p100 = scmp.ne.s32.totalorder %s95, %s97
      %p101 = scmp.eq.s32.totalorder %s19, 0
      %p102 = por %p100, %p101
      %p103 = scmp.ne.s32.totalorder %s95, %s97
      %p104 = scmp.eq.s32.totalorder %s24, 1
      %p105 = por %p103, %p104
      %p106 = scmp.ne.s32.totalorder %s97, %s98
      %p107 = scmp.eq.s32.totalorder %s24, 0
      %p108 = por %p106, %p107
      %p109 = scmp.ne.s32.totalorder %s97, %s98
      %p110 = scmp.eq.s32.totalorder %s25, 1
      %p111 = por %p109, %p110
      %p113 = scmp.ne.s32.totalorder %s98, %s112
      %p114 = scmp.eq.s32.totalorder %s25, 0
      %p115 = por %p113, %p114
      %s117 = sadd.s32 %s116, 1
      %p120 = scmp.eq.s32.totalorder %s19, 1
      %p121 = scmp.ne.s32.totalorder %s116, %s118
      %p122 = scmp.eq.s32.totalorder %s19, 0
      %p123 = por %p121, %p122
      %p124 = scmp.ne.s32.totalorder %s116, %s118
      %p125 = scmp.eq.s32.totalorder %s24, 1
      %p126 = por %p124, %p125
      %p127 = scmp.ne.s32.totalorder %s118, %s119
      %p128 = scmp.eq.s32.totalorder %s24, 0
      %p129 = por %p127, %p128
      %p130 = scmp.ne.s32.totalorder %s118, %s119
      %p131 = scmp.eq.s32.totalorder %s25, 1
      %p132 = por %p130, %p131
      %p134 = scmp.ne.s32.totalorder %s119, %s133
      %p135 = scmp.eq.s32.totalorder %s25, 0
      %p136 = por %p134, %p135
      %s137 = ssub.s32 %s19, %s26
      %p138 = scmp.eq.s32.totalorder %s137, 0
      %s140 = sadd.s32 %s139, 1
      %s141 = scalar_select %p138, %s139, %s140
      %p144 = pneg %p138
      %p145 = scmp.eq.s32.totalorder %s19, 1
      %p146 = por %p144, %p145
      %p147 = scmp.ne.s32.totalorder %s139, %s142
      %p148 = scmp.eq.s32.totalorder %s19, 0
      %p149 = por %p147, %p148
      %p150 = scmp.ne.s32.totalorder %s139, %s142
      %p151 = scmp.eq.s32.totalorder %s24, 1
      %p152 = por %p150, %p151
      %p153 = scmp.ne.s32.totalorder %s142, %s143
      %p154 = scmp.eq.s32.totalorder %s24, 0
      %p155 = por %p153, %p154
      %p156 = scmp.ne.s32.totalorder %s142, %s143
      %p157 = scmp.eq.s32.totalorder %s25, 1
      %p158 = por %p156, %p157
      %p160 = scmp.ne.s32.totalorder %s143, %s159
      %p161 = scmp.eq.s32.totalorder %s25, 0
      %p162 = por %p160, %p161
      %p163 = scmp.le.s32.totalorder 1, %s19
      %p164 = scmp.lt.s32.totalorder %s19, 3
      %p165 = pnand %p163, %p164
      %p166 = pneg %p165
      // Predicated region
      $region9: #{tpu_custom_call.1} parent=5 // pred_check
        _
      $region10: #{tpu_custom_call.1} parent=5 // pred_check_branch
        %168 = sbr.rel (%p165) target = $region12
      $region11: #{tpu_custom_call.1} parent=5 // pred_region
        %s169 = ssub.s32 %s19, 1
        // Predicated region
        $region13: #{tpu_custom_call.1} parent=11 // pred_check
          %p170 = pneg %p66
        $region14: #{tpu_custom_call.1} parent=11 // pred_check_branch
          %172 = sbr.rel (%p170) target = $region16
        $region15: #{tpu_custom_call.1} parent=11 // pred_region
          %s174 = ssub.s32 4096, 4096
          %175 = vsyncadd [#allocation6], %s174
          %s176 = sshll.u32 [#allocation5], 4
          %s177 = int_to_ptr.vmem [resolvable:$true] %s176
          %182 = dma.hbm_to_vmem [thread:$0]  %s1, 4096, %s177, [#allocation6], 256, 256, 16
        $region16: #{tpu_custom_call.1} parent=11 // pred_fallthru
          _
        // Predicated region
        $region17: #{tpu_custom_call.1} parent=11 // pred_check
          %p183 = pneg %p87
        $region18: #{tpu_custom_call.1} parent=11 // pred_check_branch
          %185 = sbr.rel (%p183) target = $region20
        $region19: #{tpu_custom_call.1} parent=11 // pred_region
          %s187 = ssub.s32 64, 64
          %188 = vsyncadd [#allocation6], %s187
          %s190 = sshll.u32 [#allocation7], 4
          %s191 = int_to_ptr.vmem [resolvable:$true] %s190
          %193 = dma.hbm_to_vmem [thread:$0]  %s2, 64, %s191, [#allocation6]
        $region20: #{tpu_custom_call.1} parent=11 // pred_fallthru
          _
        // Predicated region
        $region21: #{tpu_custom_call.1} parent=11 // pred_check
          %p194 = pneg %p108
        $region22: #{tpu_custom_call.1} parent=11 // pred_check_branch
          %196 = sbr.rel (%p194) target = $region24
        $region23: #{tpu_custom_call.1} parent=11 // pred_region
          %s198 = ssub.s32 4096, 4096
          %199 = vsyncadd [#allocation9], %s198
          %s200 = sshll.u32 [#allocation8], 4
          %s201 = int_to_ptr.vmem [resolvable:$true] %s200
          %206 = dma.hbm_to_vmem [thread:$0]  %s3, 4096, %s201, [#allocation9], 64, 64, 4
        $region24: #{tpu_custom_call.1} parent=11 // pred_fallthru
          _
        // Predicated region
        $region25: #{tpu_custom_call.1} parent=11 // pred_check
          %p207 = pneg %p129
        $region26: #{tpu_custom_call.1} parent=11 // pred_check_branch
          %209 = sbr.rel (%p207) target = $region28
        $region27: #{tpu_custom_call.1} parent=11 // pred_region
          %s211 = ssub.s32 16, 16
          %212 = vsyncadd [#allocation9], %s211
          %s214 = sshll.u32 [#allocation10], 4
          %s215 = int_to_ptr.vmem [resolvable:$true] %s214
          %217 = dma.hbm_to_vmem [thread:$0]  %s4, 16, %s215, [#allocation9]
        $region28: #{tpu_custom_call.1} parent=11 // pred_fallthru
          _
      $region12: #{tpu_custom_call.1} parent=5 // pred_fallthru
        _
      %p218 = scmp.lt.s32.totalorder %s19, 2
      // Predicated region
      $region29: #{tpu_custom_call.1} parent=5 // pred_check
        %p219 = pneg %p218
      $region30: #{tpu_custom_call.1} parent=5 // pred_check_branch
        %221 = sbr.rel (%p219) target = $region32
      $region31: #{tpu_custom_call.1} parent=5 // pred_region
        // Predicated region
        $region33: #{tpu_custom_call.1} parent=31 // pred_check
          %p222 = pneg %p39
        $region34: #{tpu_custom_call.1} parent=31 // pred_check_branch
          %224 = sbr.rel (%p222) target = $region36
        $region35: #{tpu_custom_call.1} parent=31 // pred_region
          %s225 = sand.u32 %s29, 1
          %s226 = scalar_lea.sflag [#allocation3], %s225
          %s227 = sand.u32 %s29, 1
          %s228 = smul.addr %s227, 128
          %s229 = scalar_lea.vmem [#allocation2], %s228
          %s230 = smul.u32 16, %s19
          %s232 = ssub.s32 2048, 2048
          %233 = vsyncadd %s226, %s232
          %s234 = smul.addr %s230, 128
          %s235 = scalar_lea.hbm %s0, %s234
          %s236 = sshll.u32 %s229, 4
          %s237 = int_to_ptr.vmem [resolvable:$true] %s236
          %242 = dma.hbm_to_vmem [thread:$0]  %s235, 2048, %s237, %s226, 128, 128, 8
        $region36: #{tpu_custom_call.1} parent=31 // pred_fallthru
          _
      $region32: #{tpu_custom_call.1} parent=5 // pred_fallthru
        _
      %p243 = scmp.le.s32.totalorder 1, %s19
      %p244 = scmp.lt.s32.totalorder %s19, 3
      %p245 = pnand %p243, %p244
      %p246 = pneg %p245
      // Predicated region
      $region37: #{tpu_custom_call.1} parent=5 // pred_check
        _
      $region38: #{tpu_custom_call.1} parent=5 // pred_check_branch
        %248 = sbr.rel (%p245) target = $region40
      $region39: #{tpu_custom_call.1} parent=5 // pred_region
        %s249 = ssub.s32 %s19, 1
        %s250 = sand.u32 %s32, 1
        %s251 = scalar_lea.sflag [#allocation3], %s250
        %s252 = sand.u32 %s32, 1
        %s253 = smul.addr %s252, 128
        %s254 = scalar_lea.vmem [#allocation2], %s253
        // Predicated region
        $region41: #{tpu_custom_call.1} parent=39 // pred_check
          %p255 = pneg %p45
        $region42: #{tpu_custom_call.1} parent=39 // pred_check_branch
          %257 = sbr.rel (%p255) target = $region44
        $region43: #{tpu_custom_call.1} parent=39 // pred_region
          %258 = dma.done %s251, 2048
        $region44: #{tpu_custom_call.1} parent=39 // pred_fallthru
          _
        // Predicated region
        $region45: #{tpu_custom_call.1} parent=39 // pred_check
          %p259 = pneg %p66
        $region46: #{tpu_custom_call.1} parent=39 // pred_check_branch
          %261 = sbr.rel (%p259) target = $region48
        $region47: #{tpu_custom_call.1} parent=39 // pred_region
          %262 = dma.done [#allocation6], 4096
        $region48: #{tpu_custom_call.1} parent=39 // pred_fallthru
          _
        // Predicated region
        $region49: #{tpu_custom_call.1} parent=39 // pred_check
          %p263 = pneg %p87
        $region50: #{tpu_custom_call.1} parent=39 // pred_check_branch
          %265 = sbr.rel (%p263) target = $region52
        $region51: #{tpu_custom_call.1} parent=39 // pred_region
          %266 = dma.done [#allocation6], 64
        $region52: #{tpu_custom_call.1} parent=39 // pred_fallthru
          _
        // Predicated region
        $region53: #{tpu_custom_call.1} parent=39 // pred_check
          %p267 = pneg %p108
        $region54: #{tpu_custom_call.1} parent=39 // pred_check_branch
          %269 = sbr.rel (%p267) target = $region56
        $region55: #{tpu_custom_call.1} parent=39 // pred_region
          %270 = dma.done [#allocation9], 4096
        $region56: #{tpu_custom_call.1} parent=39 // pred_fallthru
          _
        // Predicated region
        $region57: #{tpu_custom_call.1} parent=39 // pred_check
          %p271 = pneg %p129
        $region58: #{tpu_custom_call.1} parent=39 // pred_check_branch
          %273 = sbr.rel (%p271) target = $region60
        $region59: #{tpu_custom_call.1} parent=39 // pred_region
          %274 = dma.done [#allocation9], 16
        $region60: #{tpu_custom_call.1} parent=39 // pred_fallthru
          _
        %s275 = sand.u32 %s32, 1
        %s276 = scalar_lea.sflag [#allocation3], %s275
        %s277 = sand.u32 %s32, 1
        %s278 = smul.addr %s277, 128
        %s279 = scalar_lea.vmem [#allocation2], %s278
        %p280 = pneg %p45
        %p281 = pneg %p42
        %p282 = pneg %p66
        %p283 = pneg %p63
        %p284 = pneg %p87
        %p285 = pneg %p84
        %p286 = pneg %p108
        %p287 = pneg %p105
        %p288 = pneg %p129
        %p289 = pneg %p126
        %p290 = pneg %p155
        %p291 = pneg %p152
        %s292 = sand.u32 %s142, 1
        %s293 = scalar_lea.sflag [#allocation4], %s292
        %s294 = sand.u32 %s142, 1
        %s295 = smul.addr %s294, 128
        %s296 = scalar_lea.vmem [#allocation11], %s295
        %s297 = smul.u32 16, %s24
        %s298 = smul.u32 16, %s24
        %v300 = vld [vmem:[%s254] sm:$0xff]
        %v301 = vld [vmem:[%s254 + $0x8] sm:$0xff]
        %v302 = vld [vmem:[%s254 + $0x10] sm:$0xff]
        %v303 = vld [vmem:[%s254 + $0x18] sm:$0xff]
        %v304 = vld [vmem:[%s254 + $0x20] sm:$0xff]
        %v305 = vld [vmem:[%s254 + $0x28] sm:$0xff]
        %v306 = vld [vmem:[%s254 + $0x30] sm:$0xff]
        %v307 = vld [vmem:[%s254 + $0x38] sm:$0xff]
        %v308 = vld [vmem:[%s254 + $0x40] sm:$0xff]
        %v309 = vld [vmem:[%s254 + $0x48] sm:$0xff]
        %v310 = vld [vmem:[%s254 + $0x50] sm:$0xff]
        %v311 = vld [vmem:[%s254 + $0x58] sm:$0xff]
        %v312 = vld [vmem:[%s254 + $0x60] sm:$0xff]
        %v313 = vld [vmem:[%s254 + $0x68] sm:$0xff]
        %v314 = vld [vmem:[%s254 + $0x70] sm:$0xff]
        %v315 = vld [vmem:[%s254 + $0x78] sm:$0xff]
        %316 = vadd.xlane.f32.xlu0 %v300
        %v317 = vpop.xlane.xlu0 %316
        %318 = vadd.xlane.f32.xlu0 %v301
        %v319 = vpop.xlane.xlu0 %318
        %320 = vadd.xlane.f32.xlu0 %v302
        %v321 = vpop.xlane.xlu0 %320
        %322 = vadd.xlane.f32.xlu0 %v303
        %v323 = vpop.xlane.xlu0 %322
        %324 = vadd.xlane.f32.xlu0 %v304
        %v325 = vpop.xlane.xlu0 %324
        %326 = vadd.xlane.f32.xlu0 %v305
        %v327 = vpop.xlane.xlu0 %326
        %328 = vadd.xlane.f32.xlu0 %v306
        %v329 = vpop.xlane.xlu0 %328
        %330 = vadd.xlane.f32.xlu0 %v307
        %v331 = vpop.xlane.xlu0 %330
        %332 = vadd.xlane.f32.xlu0 %v308
        %v333 = vpop.xlane.xlu0 %332
        %334 = vadd.xlane.f32.xlu0 %v309
        %v335 = vpop.xlane.xlu0 %334
        %336 = vadd.xlane.f32.xlu0 %v310
        %v337 = vpop.xlane.xlu0 %336
        %338 = vadd.xlane.f32.xlu0 %v311
        %v339 = vpop.xlane.xlu0 %338
        %340 = vadd.xlane.f32.xlu0 %v312
        %v341 = vpop.xlane.xlu0 %340
        %342 = vadd.xlane.f32.xlu0 %v313
        %v343 = vpop.xlane.xlu0 %342
        %344 = vadd.xlane.f32.xlu0 %v314
        %v345 = vpop.xlane.xlu0 %344
        %346 = vadd.xlane.f32.xlu0 %v315
        %v347 = vpop.xlane.xlu0 %346
        %v348 = vrcp.pop 128.0
        %v349 = vmul.f32 %v317, %v348
        %v350 = vmul.f32 %v319, %v348
        %v351 = vmul.f32 %v321, %v348
        %v352 = vmul.f32 %v323, %v348
        %v353 = vmul.f32 %v325, %v348
        %v354 = vmul.f32 %v327, %v348
        %v355 = vmul.f32 %v329, %v348
        %v356 = vmul.f32 %v331, %v348
        %v357 = vmul.f32 %v333, %v348
        %v358 = vmul.f32 %v335, %v348
        %v359 = vmul.f32 %v337, %v348
        %v360 = vmul.f32 %v339, %v348
        %v361 = vmul.f32 %v341, %v348
        %v362 = vmul.f32 %v343, %v348
        %v363 = vmul.f32 %v345, %v348
        %v364 = vmul.f32 %v347, %v348
        %v365 = vsub.f32 %v300, %v349
        %v366 = vsub.f32 %v301, %v350
        %v367 = vsub.f32 %v302, %v351
        %v368 = vsub.f32 %v303, %v352
        %v369 = vsub.f32 %v304, %v353
        %v370 = vsub.f32 %v305, %v354
        %v371 = vsub.f32 %v306, %v355
        %v372 = vsub.f32 %v307, %v356
        %v373 = vsub.f32 %v308, %v357
        %v374 = vsub.f32 %v309, %v358
        %v375 = vsub.f32 %v310, %v359
        %v376 = vsub.f32 %v311, %v360
        %v377 = vsub.f32 %v312, %v361
        %v378 = vsub.f32 %v313, %v362
        %v379 = vsub.f32 %v314, %v363
        %v380 = vsub.f32 %v315, %v364
        %v381 = vmul.f32 %v365, %v365
        %v382 = vmul.f32 %v366, %v366
        %v383 = vmul.f32 %v367, %v367
        %v384 = vmul.f32 %v368, %v368
        %v385 = vmul.f32 %v369, %v369
        %v386 = vmul.f32 %v370, %v370
        %v387 = vmul.f32 %v371, %v371
        %v388 = vmul.f32 %v372, %v372
        %v389 = vmul.f32 %v373, %v373
        %v390 = vmul.f32 %v374, %v374
        %v391 = vmul.f32 %v375, %v375
        %v392 = vmul.f32 %v376, %v376
        %v393 = vmul.f32 %v377, %v377
        %v394 = vmul.f32 %v378, %v378
        %v395 = vmul.f32 %v379, %v379
        %v396 = vmul.f32 %v380, %v380
        %397 = vadd.xlane.f32.xlu0 %v381
        %v398 = vpop.xlane.xlu0 %397
        %399 = vadd.xlane.f32.xlu0 %v382
        %v400 = vpop.xlane.xlu0 %399
        %401 = vadd.xlane.f32.xlu0 %v383
        %v402 = vpop.xlane.xlu0 %401
        %403 = vadd.xlane.f32.xlu0 %v384
        %v404 = vpop.xlane.xlu0 %403
        %405 = vadd.xlane.f32.xlu0 %v385
        %v406 = vpop.xlane.xlu0 %405
        %407 = vadd.xlane.f32.xlu0 %v386
        %v408 = vpop.xlane.xlu0 %407
        %409 = vadd.xlane.f32.xlu0 %v387
        %v410 = vpop.xlane.xlu0 %409
        %411 = vadd.xlane.f32.xlu0 %v388
        %v412 = vpop.xlane.xlu0 %411
        %413 = vadd.xlane.f32.xlu0 %v389
        %v414 = vpop.xlane.xlu0 %413
        %415 = vadd.xlane.f32.xlu0 %v390
        %v416 = vpop.xlane.xlu0 %415
        %417 = vadd.xlane.f32.xlu0 %v391
        %v418 = vpop.xlane.xlu0 %417
        %419 = vadd.xlane.f32.xlu0 %v392
        %v420 = vpop.xlane.xlu0 %419
        %421 = vadd.xlane.f32.xlu0 %v393
        %v422 = vpop.xlane.xlu0 %421
        %423 = vadd.xlane.f32.xlu0 %v394
        %v424 = vpop.xlane.xlu0 %423
        %425 = vadd.xlane.f32.xlu0 %v395
        %v426 = vpop.xlane.xlu0 %425
        %427 = vadd.xlane.f32.xlu0 %v396
        %v428 = vpop.xlane.xlu0 %427
        %v429 = vmul.f32 %v398, %v348
        %v430 = vmul.f32 %v400, %v348
        %v431 = vmul.f32 %v402, %v348
        %v432 = vmul.f32 %v404, %v348
        %v433 = vmul.f32 %v406, %v348
        %v434 = vmul.f32 %v408, %v348
        %v435 = vmul.f32 %v410, %v348
        %v436 = vmul.f32 %v412, %v348
        %v437 = vmul.f32 %v414, %v348
        %v438 = vmul.f32 %v416, %v348
        %v439 = vmul.f32 %v418, %v348
        %v440 = vmul.f32 %v420, %v348
        %v441 = vmul.f32 %v422, %v348
        %v442 = vmul.f32 %v424, %v348
        %v443 = vmul.f32 %v426, %v348
        %v444 = vmul.f32 %v428, %v348
        %v445 = vadd.f32 %v429, 1e-05
        %v446 = vadd.f32 %v430, 1e-05
        %v447 = vadd.f32 %v431, 1e-05
        %v448 = vadd.f32 %v432, 1e-05
        %v449 = vadd.f32 %v433, 1e-05
        %v450 = vadd.f32 %v434, 1e-05
        %v451 = vadd.f32 %v435, 1e-05
        %v452 = vadd.f32 %v436, 1e-05
        %v453 = vadd.f32 %v437, 1e-05
        %v454 = vadd.f32 %v438, 1e-05
        %v455 = vadd.f32 %v439, 1e-05
        %v456 = vadd.f32 %v440, 1e-05
        %v457 = vadd.f32 %v441, 1e-05
        %v458 = vadd.f32 %v442, 1e-05
        %v459 = vadd.f32 %v443, 1e-05
        %v460 = vadd.f32 %v444, 1e-05
        %v461 = vrsqrt.pop %v445
        %v462 = vrsqrt.pop %v446
        %v463 = vrsqrt.pop %v447
        %v464 = vrsqrt.pop %v448
        %v465 = vrsqrt.pop %v449
        %v466 = vrsqrt.pop %v450
        %v467 = vrsqrt.pop %v451
        %v468 = vrsqrt.pop %v452
        %v469 = vrsqrt.pop %v453
        %v470 = vrsqrt.pop %v454
        %v471 = vrsqrt.pop %v455
        %v472 = vrsqrt.pop %v456
        %v473 = vrsqrt.pop %v457
        %v474 = vrsqrt.pop %v458
        %v475 = vrsqrt.pop %v459
        %v476 = vrsqrt.pop %v460
        %v477 = vmul.f32 %v365, %v461
        %v478 = vmul.f32 %v366, %v462
        %v479 = vmul.f32 %v367, %v463
        %v480 = vmul.f32 %v368, %v464
        %v481 = vmul.f32 %v369, %v465
        %v482 = vmul.f32 %v370, %v466
        %v483 = vmul.f32 %v371, %v467
        %v484 = vmul.f32 %v372, %v468
        %v485 = vmul.f32 %v373, %v469
        %v486 = vmul.f32 %v374, %v470
        %v487 = vmul.f32 %v375, %v471
        %v488 = vmul.f32 %v376, %v472
        %v489 = vmul.f32 %v377, %v473
        %v490 = vmul.f32 %v378, %v474
        %v491 = vmul.f32 %v379, %v475
        %v492 = vmul.f32 %v380, %v476
        %v493 = vpack.c.bf16 %v478, %v477
        %v494 = vpack.c.bf16 %v480, %v479
        %v495 = vpack.c.bf16 %v482, %v481
        %v496 = vpack.c.bf16 %v484, %v483
        %v497 = vpack.c.bf16 %v486, %v485
        %v498 = vpack.c.bf16 %v488, %v487
        %v499 = vpack.c.bf16 %v490, %v489
        %v500 = vpack.c.bf16 %v492, %v491
        %v501 = vld [vmem:[#allocation5] sm:$0xff]
        %v502 = vld [vmem:[#allocation5 + $0x8] sm:$0xff]
        %v503 = vld [vmem:[#allocation5 + $0x10] sm:$0xff]
        %v504 = vld [vmem:[#allocation5 + $0x18] sm:$0xff]
        %v505 = vld [vmem:[#allocation5 + $0x20] sm:$0xff]
        %v506 = vld [vmem:[#allocation5 + $0x28] sm:$0xff]
        %v507 = vld [vmem:[#allocation5 + $0x30] sm:$0xff]
        %v508 = vld [vmem:[#allocation5 + $0x38] sm:$0xff]
        %v509 = vld [vmem:[#allocation5 + $0x40] sm:$0xff]
        %v510 = vld [vmem:[#allocation5 + $0x48] sm:$0xff]
        %v511 = vld [vmem:[#allocation5 + $0x50] sm:$0xff]
        %v512 = vld [vmem:[#allocation5 + $0x58] sm:$0xff]
        %v513 = vld [vmem:[#allocation5 + $0x60] sm:$0xff]
        %v514 = vld [vmem:[#allocation5 + $0x68] sm:$0xff]
        %v515 = vld [vmem:[#allocation5 + $0x70] sm:$0xff]
        %v516 = vld [vmem:[#allocation5 + $0x78] sm:$0xff]
        %v517 = vld [vmem:[#allocation5 + $0x80] sm:$0xff]
        %v518 = vld [vmem:[#allocation5 + $0x88] sm:$0xff]
        %v519 = vld [vmem:[#allocation5 + $0x90] sm:$0xff]
        %v520 = vld [vmem:[#allocation5 + $0x98] sm:$0xff]
        %v521 = vld [vmem:[#allocation5 + $0xa0] sm:$0xff]
        %v522 = vld [vmem:[#allocation5 + $0xa8] sm:$0xff]
        %v523 = vld [vmem:[#allocation5 + $0xb0] sm:$0xff]
        %v524 = vld [vmem:[#allocation5 + $0xb8] sm:$0xff]
        %v525 = vld [vmem:[#allocation5 + $0xc0] sm:$0xff]
        %v526 = vld [vmem:[#allocation5 + $0xc8] sm:$0xff]
        %v527 = vld [vmem:[#allocation5 + $0xd0] sm:$0xff]
        %v528 = vld [vmem:[#allocation5 + $0xd8] sm:$0xff]
        %v529 = vld [vmem:[#allocation5 + $0xe0] sm:$0xff]
        %v530 = vld [vmem:[#allocation5 + $0xe8] sm:$0xff]
        %v531 = vld [vmem:[#allocation5 + $0xf0] sm:$0xff]
        %v532 = vld [vmem:[#allocation5 + $0xf8] sm:$0xff]
        %v533 = vld [vmem:[#allocation7] sm:$0xf]
        %v535 = vlaneseq
        %v536 = vshrl.u32 %v535, 7
        %v537 = vsub.s32 0, %v536
        %v538 = vrot.slane %v533, %v537
        %v539 = vlaneseq
        %v540 = vshrl.u32 %v539, 7
        %v541 = vsub.s32 1, %v540
        %v542 = vrot.slane %v533, %v541
        %v543 = vlaneseq
        %v544 = vshrl.u32 %v543, 7
        %v545 = vsub.s32 2, %v544
        %v546 = vrot.slane %v533, %v545
        %v547 = vlaneseq
        %v548 = vshrl.u32 %v547, 7
        %v549 = vsub.s32 3, %v548
        %v550 = vrot.slane %v533, %v549
        %v587 = vunpack.c.l.b16 %v501
        %v588 = vunpack.c.h.b16 %v501
        %v589 = vunpack.c.l.b16 %v502
        %v590 = vunpack.c.h.b16 %v502
        %v591 = vunpack.c.l.b16 %v503
        %v592 = vunpack.c.h.b16 %v503
        %v593 = vunpack.c.l.b16 %v504
        %v594 = vunpack.c.h.b16 %v504
        %v595 = vunpack.c.l.b16 %v505
        %v596 = vunpack.c.h.b16 %v505
        %v597 = vunpack.c.l.b16 %v506
        %v598 = vunpack.c.h.b16 %v506
        %v599 = vunpack.c.l.b16 %v507
        %v600 = vunpack.c.h.b16 %v507
        %v601 = vunpack.c.l.b16 %v508
        %v602 = vunpack.c.h.b16 %v508
        %v603 = vunpack.c.l.b16 %v509
        %v604 = vunpack.c.h.b16 %v509
        %v605 = vunpack.c.l.b16 %v510
        %v606 = vunpack.c.h.b16 %v510
        %v607 = vunpack.c.l.b16 %v511
        %v608 = vunpack.c.h.b16 %v511
        %v609 = vunpack.c.l.b16 %v512
        %v610 = vunpack.c.h.b16 %v512
        %v611 = vunpack.c.l.b16 %v513
        %v612 = vunpack.c.h.b16 %v513
        %v613 = vunpack.c.l.b16 %v514
        %v614 = vunpack.c.h.b16 %v514
        %v615 = vunpack.c.l.b16 %v515
        %v616 = vunpack.c.h.b16 %v515
        %v617 = vunpack.c.l.b16 %v516
        %v618 = vunpack.c.h.b16 %v516
        %v619 = vunpack.c.l.b16 %v517
        %v620 = vunpack.c.h.b16 %v517
        %v621 = vunpack.c.l.b16 %v518
        %v622 = vunpack.c.h.b16 %v518
        %v623 = vunpack.c.l.b16 %v519
        %v624 = vunpack.c.h.b16 %v519
        %v625 = vunpack.c.l.b16 %v520
        %v626 = vunpack.c.h.b16 %v520
        %v627 = vunpack.c.l.b16 %v521
        %v628 = vunpack.c.h.b16 %v521
        %v629 = vunpack.c.l.b16 %v522
        %v630 = vunpack.c.h.b16 %v522
        %v631 = vunpack.c.l.b16 %v523
        %v632 = vunpack.c.h.b16 %v523
        %v633 = vunpack.c.l.b16 %v524
        %v634 = vunpack.c.h.b16 %v524
        %v635 = vunpack.c.l.b16 %v525
        %v636 = vunpack.c.h.b16 %v525
        %v637 = vunpack.c.l.b16 %v526
        %v638 = vunpack.c.h.b16 %v526
        %v639 = vunpack.c.l.b16 %v527
        %v640 = vunpack.c.h.b16 %v527
        %v641 = vunpack.c.l.b16 %v528
        %v642 = vunpack.c.h.b16 %v528
        %v643 = vunpack.c.l.b16 %v529
        %v644 = vunpack.c.h.b16 %v529
        %v645 = vunpack.c.l.b16 %v530
        %v646 = vunpack.c.h.b16 %v530
        %v647 = vunpack.c.l.b16 %v531
        %v648 = vunpack.c.h.b16 %v531
        %v649 = vunpack.c.l.b16 %v532
        %v650 = vunpack.c.h.b16 %v532
        %v651 = vpack.c.b16 %v591, %v587
        %v652 = vpack.c.b16 %v592, %v588
        %v653 = vpack.c.b16 %v593, %v589
        %v654 = vpack.c.b16 %v594, %v590
        %v655 = vpack.c.b16 %v599, %v595
        %v656 = vpack.c.b16 %v600, %v596
        %v657 = vpack.c.b16 %v601, %v597
        %v658 = vpack.c.b16 %v602, %v598
        %v659 = vpack.c.b16 %v607, %v603
        %v660 = vpack.c.b16 %v608, %v604
        %v661 = vpack.c.b16 %v609, %v605
        %v662 = vpack.c.b16 %v610, %v606
        %v663 = vpack.c.b16 %v615, %v611
        %v664 = vpack.c.b16 %v616, %v612
        %v665 = vpack.c.b16 %v617, %v613
        %v666 = vpack.c.b16 %v618, %v614
        %v667 = vpack.c.b16 %v623, %v619
        %v668 = vpack.c.b16 %v624, %v620
        %v669 = vpack.c.b16 %v625, %v621
        %v670 = vpack.c.b16 %v626, %v622
        %v671 = vpack.c.b16 %v631, %v627
        %v672 = vpack.c.b16 %v632, %v628
        %v673 = vpack.c.b16 %v633, %v629
        %v674 = vpack.c.b16 %v634, %v630
        %v675 = vpack.c.b16 %v639, %v635
        %v676 = vpack.c.b16 %v640, %v636
        %v677 = vpack.c.b16 %v641, %v637
        %v678 = vpack.c.b16 %v642, %v638
        %v679 = vpack.c.b16 %v647, %v643
        %v680 = vpack.c.b16 %v648, %v644
        %v681 = vpack.c.b16 %v649, %v645
        %v682 = vpack.c.b16 %v650, %v646
        %715 = vmatprep.subr.bf16.mxu0 %v652
        %716 = vmatpush1.bf16.msra.mxu0 %v651
        %717 = vmatprep.subr.bf16.mxu0 %v656
        %718 = vmatpush1.bf16.msra.mxu0 %v655
        %719 = vmatprep.subr.bf16.mxu0 %v660
        %720 = vmatpush1.bf16.msra.mxu0 %v659
        %721 = vmatprep.subr.bf16.mxu0 %v664
        %722 = vmatpush1.bf16.msra.mxu0 %v663
        %723 = vmatprep.subr.bf16.mxu0 %v668
        %724 = vmatpush1.bf16.msra.mxu0 %v667
        %725 = vmatprep.subr.bf16.mxu0 %v672
        %726 = vmatpush1.bf16.msra.mxu0 %v671
        %727 = vmatprep.subr.bf16.mxu0 %v676
        %728 = vmatpush1.bf16.msra.mxu0 %v675
        %729 = vmatprep.subr.bf16.mxu0 %v680
        %730 = vmatpush1.bf16.msra.mxu0 %v679
        %731 = vmatprep.subr.bf16.mxu0 0
        %732 = vmatpush1.bf16.msra.mxu0 0
        %733 = vmatprep.subr.bf16.mxu0 0
        %734 = vmatpush1.bf16.msra.mxu0 0
        %735 = vmatprep.subr.bf16.mxu0 0
        %736 = vmatpush1.bf16.msra.mxu0 0
        %737 = vmatprep.subr.bf16.mxu0 0
        %738 = vmatpush1.bf16.msra.mxu0 0
        %739 = vmatprep.subr.bf16.mxu0 0
        %740 = vmatpush1.bf16.msra.mxu0 0
        %741 = vmatprep.subr.bf16.mxu0 0
        %742 = vmatpush1.bf16.msra.mxu0 0
        %743 = vmatprep.subr.bf16.mxu0 0
        %744 = vmatpush1.bf16.msra.mxu0 0
        %745 = vmatprep.subr.bf16.mxu0 0
        %746 = vmatpush1.bf16.msra.mxu0 0
        %747 = vmatprep.mubr.bf16.mxu0 0
        %748 = vmatmul.mubr.bf16.gmra.mrb[0].mxu0 %v493
        %v749 = vpop.f32.mrb[0].mxu0
        %v750 = vadd.f32 %v538, %v749
        %v751 = vpop.f32.mrb[0].mxu0
        %v752 = vadd.f32 %v542, %v751
        %v753 = vpop.f32.mrb[0].mxu0
        %v754 = vadd.f32 %v538, %v753
        %v755 = vpop.f32.mrb[0].mxu0
        %v756 = vadd.f32 %v542, %v755
        %757 = vmatprep.mubr.bf16.mxu0 0
        %758 = vmatmul.mubr.bf16.gmra.mrb[0].mxu0 %v494
        %v759 = vpop.f32.mrb[0].mxu0
        %v760 = vadd.f32 %v538, %v759
        %v761 = vpop.f32.mrb[0].mxu0
        %v762 = vadd.f32 %v542, %v761
        %v763 = vpop.f32.mrb[0].mxu0
        %v764 = vadd.f32 %v538, %v763
        %v765 = vpop.f32.mrb[0].mxu0
        %v766 = vadd.f32 %v542, %v765
        %767 = vmatprep.mubr.bf16.mxu0 0
        %768 = vmatmul.mubr.bf16.gmra.mrb[0].mxu0 %v495
        %v769 = vpop.f32.mrb[0].mxu0
        %v770 = vadd.f32 %v538, %v769
        %v771 = vpop.f32.mrb[0].mxu0
        %v772 = vadd.f32 %v542, %v771
        %v773 = vpop.f32.mrb[0].mxu0
        %v774 = vadd.f32 %v538, %v773
        %v775 = vpop.f32.mrb[0].mxu0
        %v776 = vadd.f32 %v542, %v775
        %777 = vmatprep.mubr.bf16.mxu0 0
        %778 = vmatmul.mubr.bf16.gmra.mrb[0].mxu0 %v496
        %v779 = vpop.f32.mrb[0].mxu0
        %v780 = vadd.f32 %v538, %v779
        %v781 = vpop.f32.mrb[0].mxu0
        %v782 = vadd.f32 %v542, %v781
        %v783 = vpop.f32.mrb[0].mxu0
        %v784 = vadd.f32 %v538, %v783
        %v785 = vpop.f32.mrb[0].mxu0
        %v786 = vadd.f32 %v542, %v785
        %787 = vmatprep.mubr.bf16.mxu0 0
        %788 = vmatmul.mubr.bf16.gmra.mrb[0].mxu0 %v497
        %v789 = vpop.f32.mrb[0].mxu0
        %v790 = vadd.f32 %v538, %v789
        %v791 = vpop.f32.mrb[0].mxu0
        %v792 = vadd.f32 %v542, %v791
        %v793 = vpop.f32.mrb[0].mxu0
        %v794 = vadd.f32 %v538, %v793
        %v795 = vpop.f32.mrb[0].mxu0
        %v796 = vadd.f32 %v542, %v795
        %797 = vmatprep.mubr.bf16.mxu0 0
        %798 = vmatmul.mubr.bf16.gmra.mrb[0].mxu0 %v498
        %v799 = vpop.f32.mrb[0].mxu0
        %v800 = vadd.f32 %v538, %v799
        %v801 = vpop.f32.mrb[0].mxu0
        %v802 = vadd.f32 %v542, %v801
        %v803 = vpop.f32.mrb[0].mxu0
        %v804 = vadd.f32 %v538, %v803
        %v805 = vpop.f32.mrb[0].mxu0
        %v806 = vadd.f32 %v542, %v805
        %807 = vmatprep.mubr.bf16.mxu0 0
        %808 = vmatmul.mubr.bf16.gmra.mrb[0].mxu0 %v499
        %v809 = vpop.f32.mrb[0].mxu0
        %v810 = vadd.f32 %v538, %v809
        %v811 = vpop.f32.mrb[0].mxu0
        %v812 = vadd.f32 %v542, %v811
        %v813 = vpop.f32.mrb[0].mxu0
        %v814 = vadd.f32 %v538, %v813
        %v815 = vpop.f32.mrb[0].mxu0
        %v816 = vadd.f32 %v542, %v815
        %817 = vmatprep.mubr.bf16.mxu0 0
        %818 = vmatmul.mubr.bf16.gmra.mrb[0].mxu0 %v500
        %v819 = vpop.f32.mrb[0].mxu0
        %v820 = vadd.f32 %v538, %v819
        %v821 = vpop.f32.mrb[0].mxu0
        %v822 = vadd.f32 %v542, %v821
        %v823 = vpop.f32.mrb[0].mxu0
        %v824 = vadd.f32 %v538, %v823
        %v825 = vpop.f32.mrb[0].mxu0
        %v826 = vadd.f32 %v542, %v825
        %827 = vdwg.mxu0
        %828 = vmatprep.subr.bf16.mxu0 %v654
        %829 = vmatpush1.bf16.msra.mxu0 %v653
        %830 = vmatprep.subr.bf16.mxu0 %v658
        %831 = vmatpush1.bf16.msra.mxu0 %v657
        %832 = vmatprep.subr.bf16.mxu0 %v662
        %833 = vmatpush1.bf16.msra.mxu0 %v661
        %834 = vmatprep.subr.bf16.mxu0 %v666
        %835 = vmatpush1.bf16.msra.mxu0 %v665
        %836 = vmatprep.subr.bf16.mxu0 %v670
        %837 = vmatpush1.bf16.msra.mxu0 %v669
        %838 = vmatprep.subr.bf16.mxu0 %v674
        %839 = vmatpush1.bf16.msra.mxu0 %v673
        %840 = vmatprep.subr.bf16.mxu0 %v678
        %841 = vmatpush1.bf16.msra.mxu0 %v677
        %842 = vmatprep.subr.bf16.mxu0 %v682
        %843 = vmatpush1.bf16.msra.mxu0 %v681
        %844 = vmatprep.subr.bf16.mxu0 0
        %845 = vmatpush1.bf16.msra.mxu0 0
        %846 = vmatprep.subr.bf16.mxu0 0
        %847 = vmatpush1.bf16.msra.mxu0 0
        %848 = vmatprep.subr.bf16.mxu0 0
        %849 = vmatpush1.bf16.msra.mxu0 0
        %850 = vmatprep.subr.bf16.mxu0 0
        %851 = vmatpush1.bf16.msra.mxu0 0
        %852 = vmatprep.subr.bf16.mxu0 0
        %853 = vmatpush1.bf16.msra.mxu0 0
        %854 = vmatprep.subr.bf16.mxu0 0
        %855 = vmatpush1.bf16.msra.mxu0 0
        %856 = vmatprep.subr.bf16.mxu0 0
        %857 = vmatpush1.bf16.msra.mxu0 0
        %858 = vmatprep.subr.bf16.mxu0 0
        %859 = vmatpush1.bf16.msra.mxu0 0
        %860 = vmatprep.mubr.bf16.mxu0 0
        %861 = vmatmul.mubr.bf16.gmra.mrb[0].mxu0 %v493
        %v862 = vpop.f32.mrb[0].mxu0
        %v863 = vadd.f32 %v546, %v862
        %v864 = vpop.f32.mrb[0].mxu0
        %v865 = vadd.f32 %v550, %v864
        %v866 = vpop.f32.mrb[0].mxu0
        %v867 = vadd.f32 %v546, %v866
        %v868 = vpop.f32.mrb[0].mxu0
        %v869 = vadd.f32 %v550, %v868
        %870 = vmatprep.mubr.bf16.mxu0 0
        %871 = vmatmul.mubr.bf16.gmra.mrb[0].mxu0 %v494
        %v872 = vpop.f32.mrb[0].mxu0
        %v873 = vadd.f32 %v546, %v872
        %v874 = vpop.f32.mrb[0].mxu0
        %v875 = vadd.f32 %v550, %v874
        %v876 = vpop.f32.mrb[0].mxu0
        %v877 = vadd.f32 %v546, %v876
        %v878 = vpop.f32.mrb[0].mxu0
        %v879 = vadd.f32 %v550, %v878
        %880 = vmatprep.mubr.bf16.mxu0 0
        %881 = vmatmul.mubr.bf16.gmra.mrb[0].mxu0 %v495
        %v882 = vpop.f32.mrb[0].mxu0
        %v883 = vadd.f32 %v546, %v882
        %v884 = vpop.f32.mrb[0].mxu0
        %v885 = vadd.f32 %v550, %v884
        %v886 = vpop.f32.mrb[0].mxu0
        %v887 = vadd.f32 %v546, %v886
        %v888 = vpop.f32.mrb[0].mxu0
        %v889 = vadd.f32 %v550, %v888
        %890 = vmatprep.mubr.bf16.mxu0 0
        %891 = vmatmul.mubr.bf16.gmra.mrb[0].mxu0 %v496
        %v892 = vpop.f32.mrb[0].mxu0
        %v893 = vadd.f32 %v546, %v892
        %v894 = vpop.f32.mrb[0].mxu0
        %v895 = vadd.f32 %v550, %v894
        %v896 = vpop.f32.mrb[0].mxu0
        %v897 = vadd.f32 %v546, %v896
        %v898 = vpop.f32.mrb[0].mxu0
        %v899 = vadd.f32 %v550, %v898
        %900 = vmatprep.mubr.bf16.mxu0 0
        %901 = vmatmul.mubr.bf16.gmra.mrb[0].mxu0 %v497
        %v902 = vpop.f32.mrb[0].mxu0
        %v903 = vadd.f32 %v546, %v902
        %v904 = vpop.f32.mrb[0].mxu0
        %v905 = vadd.f32 %v550, %v904
        %v906 = vpop.f32.mrb[0].mxu0
        %v907 = vadd.f32 %v546, %v906
        %v908 = vpop.f32.mrb[0].mxu0
        %v909 = vadd.f32 %v550, %v908
        %910 = vmatprep.mubr.bf16.mxu0 0
        %911 = vmatmul.mubr.bf16.gmra.mrb[0].mxu0 %v498
        %v912 = vpop.f32.mrb[0].mxu0
        %v913 = vadd.f32 %v546, %v912
        %v914 = vpop.f32.mrb[0].mxu0
        %v915 = vadd.f32 %v550, %v914
        %v916 = vpop.f32.mrb[0].mxu0
        %v917 = vadd.f32 %v546, %v916
        %v918 = vpop.f32.mrb[0].mxu0
        %v919 = vadd.f32 %v550, %v918
        %920 = vmatprep.mubr.bf16.mxu0 0
        %921 = vmatmul.mubr.bf16.gmra.mrb[0].mxu0 %v499
        %v922 = vpop.f32.mrb[0].mxu0
        %v923 = vadd.f32 %v546, %v922
        %v924 = vpop.f32.mrb[0].mxu0
        %v925 = vadd.f32 %v550, %v924
        %v926 = vpop.f32.mrb[0].mxu0
        %v927 = vadd.f32 %v546, %v926
        %v928 = vpop.f32.mrb[0].mxu0
        %v929 = vadd.f32 %v550, %v928
        %930 = vmatprep.mubr.bf16.mxu0 0
        %931 = vmatmul.mubr.bf16.gmra.mrb[0].mxu0 %v500
        %v932 = vpop.f32.mrb[0].mxu0
        %v933 = vadd.f32 %v546, %v932
        %v934 = vpop.f32.mrb[0].mxu0
        %v935 = vadd.f32 %v550, %v934
        %v936 = vpop.f32.mrb[0].mxu0
        %v937 = vadd.f32 %v546, %v936
        %v938 = vpop.f32.mrb[0].mxu0
        %v939 = vadd.f32 %v550, %v938
        %940 = vdwg.mxu0
        %v941 = vsub.f32 0.0, %v750
        %v942 = vsub.f32 0.0, %v752
        %v943 = vsub.f32 0.0, %v863
        %v944 = vsub.f32 0.0, %v865
        %v945 = vsub.f32 0.0, %v754
        %v946 = vsub.f32 0.0, %v756
        %v947 = vsub.f32 0.0, %v867
        %v948 = vsub.f32 0.0, %v869
        %v949 = vsub.f32 0.0, %v760
        %v950 = vsub.f32 0.0, %v762
        %v951 = vsub.f32 0.0, %v873
        %v952 = vsub.f32 0.0, %v875
        %v953 = vsub.f32 0.0, %v764
        %v954 = vsub.f32 0.0, %v766
        %v955 = vsub.f32 0.0, %v877
        %v956 = vsub.f32 0.0, %v879
        %v957 = vsub.f32 0.0, %v770
        %v958 = vsub.f32 0.0, %v772
        %v959 = vsub.f32 0.0, %v883
        %v960 = vsub.f32 0.0, %v885
        %v961 = vsub.f32 0.0, %v774
        %v962 = vsub.f32 0.0, %v776
        %v963 = vsub.f32 0.0, %v887
        %v964 = vsub.f32 0.0, %v889
        %v965 = vsub.f32 0.0, %v780
        %v966 = vsub.f32 0.0, %v782
        %v967 = vsub.f32 0.0, %v893
        %v968 = vsub.f32 0.0, %v895
        %v969 = vsub.f32 0.0, %v784
        %v970 = vsub.f32 0.0, %v786
        %v971 = vsub.f32 0.0, %v897
        %v972 = vsub.f32 0.0, %v899
        %v973 = vsub.f32 0.0, %v790
        %v974 = vsub.f32 0.0, %v792
        %v975 = vsub.f32 0.0, %v903
        %v976 = vsub.f32 0.0, %v905
        %v977 = vsub.f32 0.0, %v794
        %v978 = vsub.f32 0.0, %v796
        %v979 = vsub.f32 0.0, %v907
        %v980 = vsub.f32 0.0, %v909
        %v981 = vsub.f32 0.0, %v800
        %v982 = vsub.f32 0.0, %v802
        %v983 = vsub.f32 0.0, %v913
        %v984 = vsub.f32 0.0, %v915
        %v985 = vsub.f32 0.0, %v804
        %v986 = vsub.f32 0.0, %v806
        %v987 = vsub.f32 0.0, %v917
        %v988 = vsub.f32 0.0, %v919
        %v989 = vsub.f32 0.0, %v810
        %v990 = vsub.f32 0.0, %v812
        %v991 = vsub.f32 0.0, %v923
        %v992 = vsub.f32 0.0, %v925
        %v993 = vsub.f32 0.0, %v814
        %v994 = vsub.f32 0.0, %v816
        %v995 = vsub.f32 0.0, %v927
        %v996 = vsub.f32 0.0, %v929
        %v997 = vsub.f32 0.0, %v820
        %v998 = vsub.f32 0.0, %v822
        %v999 = vsub.f32 0.0, %v933
        %v1000 = vsub.f32 0.0, %v935
        %v1001 = vsub.f32 0.0, %v824
        %v1002 = vsub.f32 0.0, %v826
        %v1003 = vsub.f32 0.0, %v937
        %v1004 = vsub.f32 0.0, %v939
        %v1005 = vmul.f32 %v941, 1.442695
        %v1006 = vpow.pop %v1005
        %v1007 = vmul.f32 %v942, 1.442695
        %v1008 = vpow.pop %v1007
        %v1009 = vmul.f32 %v943, 1.442695
        %v1010 = vpow.pop %v1009
        %v1011 = vmul.f32 %v944, 1.442695
        %v1012 = vpow.pop %v1011
        %v1013 = vmul.f32 %v945, 1.442695
        %v1014 = vpow.pop %v1013
        %v1015 = vmul.f32 %v946, 1.442695
        %v1016 = vpow.pop %v1015
        %v1017 = vmul.f32 %v947, 1.442695
        %v1018 = vpow.pop %v1017
        %v1019 = vmul.f32 %v948, 1.442695
        %v1020 = vpow.pop %v1019
        %v1021 = vmul.f32 %v949, 1.442695
        %v1022 = vpow.pop %v1021
        %v1023 = vmul.f32 %v950, 1.442695
        %v1024 = vpow.pop %v1023
        %v1025 = vmul.f32 %v951, 1.442695
        %v1026 = vpow.pop %v1025
        %v1027 = vmul.f32 %v952, 1.442695
        %v1028 = vpow.pop %v1027
        %v1029 = vmul.f32 %v953, 1.442695
        %v1030 = vpow.pop %v1029
        %v1031 = vmul.f32 %v954, 1.442695
        %v1032 = vpow.pop %v1031
        %v1033 = vmul.f32 %v955, 1.442695
        %v1034 = vpow.pop %v1033
        %v1035 = vmul.f32 %v956, 1.442695
        %v1036 = vpow.pop %v1035
        %v1037 = vmul.f32 %v957, 1.442695
        %v1038 = vpow.pop %v1037
        %v1039 = vmul.f32 %v958, 1.442695
        %v1040 = vpow.pop %v1039
        %v1041 = vmul.f32 %v959, 1.442695
        %v1042 = vpow.pop %v1041
        %v1043 = vmul.f32 %v960, 1.442695
        %v1044 = vpow.pop %v1043
        %v1045 = vmul.f32 %v961, 1.442695
        %v1046 = vpow.pop %v1045
        %v1047 = vmul.f32 %v962, 1.442695
        %v1048 = vpow.pop %v1047
        %v1049 = vmul.f32 %v963, 1.442695
        %v1050 = vpow.pop %v1049
        %v1051 = vmul.f32 %v964, 1.442695
        %v1052 = vpow.pop %v1051
        %v1053 = vmul.f32 %v965, 1.442695
        %v1054 = vpow.pop %v1053
        %v1055 = vmul.f32 %v966, 1.442695
        %v1056 = vpow.pop %v1055
        %v1057 = vmul.f32 %v967, 1.442695
        %v1058 = vpow.pop %v1057
        %v1059 = vmul.f32 %v968, 1.442695
        %v1060 = vpow.pop %v1059
        %v1061 = vmul.f32 %v969, 1.442695
        %v1062 = vpow.pop %v1061
        %v1063 = vmul.f32 %v970, 1.442695
        %v1064 = vpow.pop %v1063
        %v1065 = vmul.f32 %v971, 1.442695
        %v1066 = vpow.pop %v1065
        %v1067 = vmul.f32 %v972, 1.442695
        %v1068 = vpow.pop %v1067
        %v1069 = vmul.f32 %v973, 1.442695
        %v1070 = vpow.pop %v1069
        %v1071 = vmul.f32 %v974, 1.442695
        %v1072 = vpow.pop %v1071
        %v1073 = vmul.f32 %v975, 1.442695
        %v1074 = vpow.pop %v1073
        %v1075 = vmul.f32 %v976, 1.442695
        %v1076 = vpow.pop %v1075
        %v1077 = vmul.f32 %v977, 1.442695
        %v1078 = vpow.pop %v1077
        %v1079 = vmul.f32 %v978, 1.442695
        %v1080 = vpow.pop %v1079
        %v1081 = vmul.f32 %v979, 1.442695
        %v1082 = vpow.pop %v1081
        %v1083 = vmul.f32 %v980, 1.442695
        %v1084 = vpow.pop %v1083
        %v1085 = vmul.f32 %v981, 1.442695
        %v1086 = vpow.pop %v1085
        %v1087 = vmul.f32 %v982, 1.442695
        %v1088 = vpow.pop %v1087
        %v1089 = vmul.f32 %v983, 1.442695
        %v1090 = vpow.pop %v1089
        %v1091 = vmul.f32 %v984, 1.442695
        %v1092 = vpow.pop %v1091
        %v1093 = vmul.f32 %v985, 1.442695
        %v1094 = vpow.pop %v1093
        %v1095 = vmul.f32 %v986, 1.442695
        %v1096 = vpow.pop %v1095
        %v1097 = vmul.f32 %v987, 1.442695
        %v1098 = vpow.pop %v1097
        %v1099 = vmul.f32 %v988, 1.442695
        %v1100 = vpow.pop %v1099
        %v1101 = vmul.f32 %v989, 1.442695
        %v1102 = vpow.pop %v1101
        %v1103 = vmul.f32 %v990, 1.442695
        %v1104 = vpow.pop %v1103
        %v1105 = vmul.f32 %v991, 1.442695
        %v1106 = vpow.pop %v1105
        %v1107 = vmul.f32 %v992, 1.442695
        %v1108 = vpow.pop %v1107
        %v1109 = vmul.f32 %v993, 1.442695
        %v1110 = vpow.pop %v1109
        %v1111 = vmul.f32 %v994, 1.442695
        %v1112 = vpow.pop %v1111
        %v1113 = vmul.f32 %v995, 1.442695
        %v1114 = vpow.pop %v1113
        %v1115 = vmul.f32 %v996, 1.442695
        %v1116 = vpow.pop %v1115
        %v1117 = vmul.f32 %v997, 1.442695
        %v1118 = vpow.pop %v1117
        %v1119 = vmul.f32 %v998, 1.442695
        %v1120 = vpow.pop %v1119
        %v1121 = vmul.f32 %v999, 1.442695
        %v1122 = vpow.pop %v1121
        %v1123 = vmul.f32 %v1000, 1.442695
        %v1124 = vpow.pop %v1123
        %v1125 = vmul.f32 %v1001, 1.442695
        %v1126 = vpow.pop %v1125
        %v1127 = vmul.f32 %v1002, 1.442695
        %v1128 = vpow.pop %v1127
        %v1129 = vmul.f32 %v1003, 1.442695
        %v1130 = vpow.pop %v1129
        %v1131 = vmul.f32 %v1004, 1.442695
        %v1132 = vpow.pop %v1131
        %v1133 = vadd.f32 %v1006, 1.0
        %v1134 = vadd.f32 %v1008, 1.0
        %v1135 = vadd.f32 %v1010, 1.0
        %v1136 = vadd.f32 %v1012, 1.0
        %v1137 = vadd.f32 %v1014, 1.0
        %v1138 = vadd.f32 %v1016, 1.0
        %v1139 = vadd.f32 %v1018, 1.0
        %v1140 = vadd.f32 %v1020, 1.0
        %v1141 = vadd.f32 %v1022, 1.0
        %v1142 = vadd.f32 %v1024, 1.0
        %v1143 = vadd.f32 %v1026, 1.0
        %v1144 = vadd.f32 %v1028, 1.0
        %v1145 = vadd.f32 %v1030, 1.0
        %v1146 = vadd.f32 %v1032, 1.0
        %v1147 = vadd.f32 %v1034, 1.0
        %v1148 = vadd.f32 %v1036, 1.0
        %v1149 = vadd.f32 %v1038, 1.0
        %v1150 = vadd.f32 %v1040, 1.0
        %v1151 = vadd.f32 %v1042, 1.0
        %v1152 = vadd.f32 %v1044, 1.0
        %v1153 = vadd.f32 %v1046, 1.0
        %v1154 = vadd.f32 %v1048, 1.0
        %v1155 = vadd.f32 %v1050, 1.0
        %v1156 = vadd.f32 %v1052, 1.0
        %v1157 = vadd.f32 %v1054, 1.0
        %v1158 = vadd.f32 %v1056, 1.0
        %v1159 = vadd.f32 %v1058, 1.0
        %v1160 = vadd.f32 %v1060, 1.0
        %v1161 = vadd.f32 %v1062, 1.0
        %v1162 = vadd.f32 %v1064, 1.0
        %v1163 = vadd.f32 %v1066, 1.0
        %v1164 = vadd.f32 %v1068, 1.0
        %v1165 = vadd.f32 %v1070, 1.0
        %v1166 = vadd.f32 %v1072, 1.0
        %v1167 = vadd.f32 %v1074, 1.0
        %v1168 = vadd.f32 %v1076, 1.0
        %v1169 = vadd.f32 %v1078, 1.0
        %v1170 = vadd.f32 %v1080, 1.0
        %v1171 = vadd.f32 %v1082, 1.0
        %v1172 = vadd.f32 %v1084, 1.0
        %v1173 = vadd.f32 %v1086, 1.0
        %v1174 = vadd.f32 %v1088, 1.0
        %v1175 = vadd.f32 %v1090, 1.0
        %v1176 = vadd.f32 %v1092, 1.0
        %v1177 = vadd.f32 %v1094, 1.0
        %v1178 = vadd.f32 %v1096, 1.0
        %v1179 = vadd.f32 %v1098, 1.0
        %v1180 = vadd.f32 %v1100, 1.0
        %v1181 = vadd.f32 %v1102, 1.0
        %v1182 = vadd.f32 %v1104, 1.0
        %v1183 = vadd.f32 %v1106, 1.0
        %v1184 = vadd.f32 %v1108, 1.0
        %v1185 = vadd.f32 %v1110, 1.0
        %v1186 = vadd.f32 %v1112, 1.0
        %v1187 = vadd.f32 %v1114, 1.0
        %v1188 = vadd.f32 %v1116, 1.0
        %v1189 = vadd.f32 %v1118, 1.0
        %v1190 = vadd.f32 %v1120, 1.0
        %v1191 = vadd.f32 %v1122, 1.0
        %v1192 = vadd.f32 %v1124, 1.0
        %v1193 = vadd.f32 %v1126, 1.0
        %v1194 = vadd.f32 %v1128, 1.0
        %v1195 = vadd.f32 %v1130, 1.0
        %v1196 = vadd.f32 %v1132, 1.0
        %v1197 = vrcp.pop %v1133
        %v1198 = vrcp.pop %v1134
        %v1199 = vrcp.pop %v1135
        %v1200 = vrcp.pop %v1136
        %v1201 = vrcp.pop %v1137
        %v1202 = vrcp.pop %v1138
        %v1203 = vrcp.pop %v1139
        %v1204 = vrcp.pop %v1140
        %v1205 = vrcp.pop %v1141
        %v1206 = vrcp.pop %v1142
        %v1207 = vrcp.pop %v1143
        %v1208 = vrcp.pop %v1144
        %v1209 = vrcp.pop %v1145
        %v1210 = vrcp.pop %v1146
        %v1211 = vrcp.pop %v1147
        %v1212 = vrcp.pop %v1148
        %v1213 = vrcp.pop %v1149
        %v1214 = vrcp.pop %v1150
        %v1215 = vrcp.pop %v1151
        %v1216 = vrcp.pop %v1152
        %v1217 = vrcp.pop %v1153
        %v1218 = vrcp.pop %v1154
        %v1219 = vrcp.pop %v1155
        %v1220 = vrcp.pop %v1156
        %v1221 = vrcp.pop %v1157
        %v1222 = vrcp.pop %v1158
        %v1223 = vrcp.pop %v1159
        %v1224 = vrcp.pop %v1160
        %v1225 = vrcp.pop %v1161
        %v1226 = vrcp.pop %v1162
        %v1227 = vrcp.pop %v1163
        %v1228 = vrcp.pop %v1164
        %v1229 = vrcp.pop %v1165
        %v1230 = vrcp.pop %v1166
        %v1231 = vrcp.pop %v1167
        %v1232 = vrcp.pop %v1168
        %v1233 = vrcp.pop %v1169
        %v1234 = vrcp.pop %v1170
        %v1235 = vrcp.pop %v1171
        %v1236 = vrcp.pop %v1172
        %v1237 = vrcp.pop %v1173
        %v1238 = vrcp.pop %v1174
        %v1239 = vrcp.pop %v1175
        %v1240 = vrcp.pop %v1176
        %v1241 = vrcp.pop %v1177
        %v1242 = vrcp.pop %v1178
        %v1243 = vrcp.pop %v1179
        %v1244 = vrcp.pop %v1180
        %v1245 = vrcp.pop %v1181
        %v1246 = vrcp.pop %v1182
        %v1247 = vrcp.pop %v1183
        %v1248 = vrcp.pop %v1184
        %v1249 = vrcp.pop %v1185
        %v1250 = vrcp.pop %v1186
        %v1251 = vrcp.pop %v1187
        %v1252 = vrcp.pop %v1188
        %v1253 = vrcp.pop %v1189
        %v1254 = vrcp.pop %v1190
        %v1255 = vrcp.pop %v1191
        %v1256 = vrcp.pop %v1192
        %v1257 = vrcp.pop %v1193
        %v1258 = vrcp.pop %v1194
        %v1259 = vrcp.pop %v1195
        %v1260 = vrcp.pop %v1196
        %v1261 = vmul.f32 %v750, %v1197
        %v1262 = vmul.f32 %v752, %v1198
        %v1263 = vmul.f32 %v863, %v1199
        %v1264 = vmul.f32 %v865, %v1200
        %v1265 = vmul.f32 %v754, %v1201
        %v1266 = vmul.f32 %v756, %v1202
        %v1267 = vmul.f32 %v867, %v1203
        %v1268 = vmul.f32 %v869, %v1204
        %v1269 = vmul.f32 %v760, %v1205
        %v1270 = vmul.f32 %v762, %v1206
        %v1271 = vmul.f32 %v873, %v1207
        %v1272 = vmul.f32 %v875, %v1208
        %v1273 = vmul.f32 %v764, %v1209
        %v1274 = vmul.f32 %v766, %v1210
        %v1275 = vmul.f32 %v877, %v1211
        %v1276 = vmul.f32 %v879, %v1212
        %v1277 = vmul.f32 %v770, %v1213
        %v1278 = vmul.f32 %v772, %v1214
        %v1279 = vmul.f32 %v883, %v1215
        %v1280 = vmul.f32 %v885, %v1216
        %v1281 = vmul.f32 %v774, %v1217
        %v1282 = vmul.f32 %v776, %v1218
        %v1283 = vmul.f32 %v887, %v1219
        %v1284 = vmul.f32 %v889, %v1220
        %v1285 = vmul.f32 %v780, %v1221
        %v1286 = vmul.f32 %v782, %v1222
        %v1287 = vmul.f32 %v893, %v1223
        %v1288 = vmul.f32 %v895, %v1224
        %v1289 = vmul.f32 %v784, %v1225
        %v1290 = vmul.f32 %v786, %v1226
        %v1291 = vmul.f32 %v897, %v1227
        %v1292 = vmul.f32 %v899, %v1228
        %v1293 = vmul.f32 %v790, %v1229
        %v1294 = vmul.f32 %v792, %v1230
        %v1295 = vmul.f32 %v903, %v1231
        %v1296 = vmul.f32 %v905, %v1232
        %v1297 = vmul.f32 %v794, %v1233
        %v1298 = vmul.f32 %v796, %v1234
        %v1299 = vmul.f32 %v907, %v1235
        %v1300 = vmul.f32 %v909, %v1236
        %v1301 = vmul.f32 %v800, %v1237
        %v1302 = vmul.f32 %v802, %v1238
        %v1303 = vmul.f32 %v913, %v1239
        %v1304 = vmul.f32 %v915, %v1240
        %v1305 = vmul.f32 %v804, %v1241
        %v1306 = vmul.f32 %v806, %v1242
        %v1307 = vmul.f32 %v917, %v1243
        %v1308 = vmul.f32 %v919, %v1244
        %v1309 = vmul.f32 %v810, %v1245
        %v1310 = vmul.f32 %v812, %v1246
        %v1311 = vmul.f32 %v923, %v1247
        %v1312 = vmul.f32 %v925, %v1248
        %v1313 = vmul.f32 %v814, %v1249
        %v1314 = vmul.f32 %v816, %v1250
        %v1315 = vmul.f32 %v927, %v1251
        %v1316 = vmul.f32 %v929, %v1252
        %v1317 = vmul.f32 %v820, %v1253
        %v1318 = vmul.f32 %v822, %v1254
        %v1319 = vmul.f32 %v933, %v1255
        %v1320 = vmul.f32 %v935, %v1256
        %v1321 = vmul.f32 %v824, %v1257
        %v1322 = vmul.f32 %v826, %v1258
        %v1323 = vmul.f32 %v937, %v1259
        %v1324 = vmul.f32 %v939, %v1260
        %v1325 = vpack.c.bf16 %v1265, %v1261
        %v1326 = vpack.c.bf16 %v1266, %v1262
        %v1327 = vpack.c.bf16 %v1267, %v1263
        %v1328 = vpack.c.bf16 %v1268, %v1264
        %v1329 = vpack.c.bf16 %v1273, %v1269
        %v1330 = vpack.c.bf16 %v1274, %v1270
        %v1331 = vpack.c.bf16 %v1275, %v1271
        %v1332 = vpack.c.bf16 %v1276, %v1272
        %v1333 = vpack.c.bf16 %v1281, %v1277
        %v1334 = vpack.c.bf16 %v1282, %v1278
        %v1335 = vpack.c.bf16 %v1283, %v1279
        %v1336 = vpack.c.bf16 %v1284, %v1280
        %v1337 = vpack.c.bf16 %v1289, %v1285
        %v1338 = vpack.c.bf16 %v1290, %v1286
        %v1339 = vpack.c.bf16 %v1291, %v1287
        %v1340 = vpack.c.bf16 %v1292, %v1288
        %v1341 = vpack.c.bf16 %v1297, %v1293
        %v1342 = vpack.c.bf16 %v1298, %v1294
        %v1343 = vpack.c.bf16 %v1299, %v1295
        %v1344 = vpack.c.bf16 %v1300, %v1296
        %v1345 = vpack.c.bf16 %v1305, %v1301
        %v1346 = vpack.c.bf16 %v1306, %v1302
        %v1347 = vpack.c.bf16 %v1307, %v1303
        %v1348 = vpack.c.bf16 %v1308, %v1304
        %v1349 = vpack.c.bf16 %v1313, %v1309
        %v1350 = vpack.c.bf16 %v1314, %v1310
        %v1351 = vpack.c.bf16 %v1315, %v1311
        %v1352 = vpack.c.bf16 %v1316, %v1312
        %v1353 = vpack.c.bf16 %v1321, %v1317
        %v1354 = vpack.c.bf16 %v1322, %v1318
        %v1355 = vpack.c.bf16 %v1323, %v1319
        %v1356 = vpack.c.bf16 %v1324, %v1320
        %v1357 = vld [vmem:[#allocation8] sm:$0xf]
        %v1358 = vld [vmem:[#allocation8 + $0x4] sm:$0xf]
        %v1359 = vld [vmem:[#allocation8 + $0x8] sm:$0xf]
        %v1360 = vld [vmem:[#allocation8 + $0xc] sm:$0xf]
        %v1361 = vld [vmem:[#allocation8 + $0x10] sm:$0xf]
        %v1362 = vld [vmem:[#allocation8 + $0x14] sm:$0xf]
        %v1363 = vld [vmem:[#allocation8 + $0x18] sm:$0xf]
        %v1364 = vld [vmem:[#allocation8 + $0x1c] sm:$0xf]
        %v1365 = vld [vmem:[#allocation8 + $0x20] sm:$0xf]
        %v1366 = vld [vmem:[#allocation8 + $0x24] sm:$0xf]
        %v1367 = vld [vmem:[#allocation8 + $0x28] sm:$0xf]
        %v1368 = vld [vmem:[#allocation8 + $0x2c] sm:$0xf]
        %v1369 = vld [vmem:[#allocation8 + $0x30] sm:$0xf]
        %v1370 = vld [vmem:[#allocation8 + $0x34] sm:$0xf]
        %v1371 = vld [vmem:[#allocation8 + $0x38] sm:$0xf]
        %v1372 = vld [vmem:[#allocation8 + $0x3c] sm:$0xf]
        %v1373 = vld [vmem:[#allocation8 + $0x40] sm:$0xf]
        %v1374 = vld [vmem:[#allocation8 + $0x44] sm:$0xf]
        %v1375 = vld [vmem:[#allocation8 + $0x48] sm:$0xf]
        %v1376 = vld [vmem:[#allocation8 + $0x4c] sm:$0xf]
        %v1377 = vld [vmem:[#allocation8 + $0x50] sm:$0xf]
        %v1378 = vld [vmem:[#allocation8 + $0x54] sm:$0xf]
        %v1379 = vld [vmem:[#allocation8 + $0x58] sm:$0xf]
        %v1380 = vld [vmem:[#allocation8 + $0x5c] sm:$0xf]
        %v1381 = vld [vmem:[#allocation8 + $0x60] sm:$0xf]
        %v1382 = vld [vmem:[#allocation8 + $0x64] sm:$0xf]
        %v1383 = vld [vmem:[#allocation8 + $0x68] sm:$0xf]
        %v1384 = vld [vmem:[#allocation8 + $0x6c] sm:$0xf]
        %v1385 = vld [vmem:[#allocation8 + $0x70] sm:$0xf]
        %v1386 = vld [vmem:[#allocation8 + $0x74] sm:$0xf]
        %v1387 = vld [vmem:[#allocation8 + $0x78] sm:$0xf]
        %v1388 = vld [vmem:[#allocation8 + $0x7c] sm:$0xf]
        %v1389 = vld [vmem:[#allocation8 + $0x80] sm:$0xf]
        %v1390 = vld [vmem:[#allocation8 + $0x84] sm:$0xf]
        %v1391 = vld [vmem:[#allocation8 + $0x88] sm:$0xf]
        %v1392 = vld [vmem:[#allocation8 + $0x8c] sm:$0xf]
        %v1393 = vld [vmem:[#allocation8 + $0x90] sm:$0xf]
        %v1394 = vld [vmem:[#allocation8 + $0x94] sm:$0xf]
        %v1395 = vld [vmem:[#allocation8 + $0x98] sm:$0xf]
        %v1396 = vld [vmem:[#allocation8 + $0x9c] sm:$0xf]
        %v1397 = vld [vmem:[#allocation8 + $0xa0] sm:$0xf]
        %v1398 = vld [vmem:[#allocation8 + $0xa4] sm:$0xf]
        %v1399 = vld [vmem:[#allocation8 + $0xa8] sm:$0xf]
        %v1400 = vld [vmem:[#allocation8 + $0xac] sm:$0xf]
        %v1401 = vld [vmem:[#allocation8 + $0xb0] sm:$0xf]
        %v1402 = vld [vmem:[#allocation8 + $0xb4] sm:$0xf]
        %v1403 = vld [vmem:[#allocation8 + $0xb8] sm:$0xf]
        %v1404 = vld [vmem:[#allocation8 + $0xbc] sm:$0xf]
        %v1405 = vld [vmem:[#allocation8 + $0xc0] sm:$0xf]
        %v1406 = vld [vmem:[#allocation8 + $0xc4] sm:$0xf]
        %v1407 = vld [vmem:[#allocation8 + $0xc8] sm:$0xf]
        %v1408 = vld [vmem:[#allocation8 + $0xcc] sm:$0xf]
        %v1409 = vld [vmem:[#allocation8 + $0xd0] sm:$0xf]
        %v1410 = vld [vmem:[#allocation8 + $0xd4] sm:$0xf]
        %v1411 = vld [vmem:[#allocation8 + $0xd8] sm:$0xf]
        %v1412 = vld [vmem:[#allocation8 + $0xdc] sm:$0xf]
        %v1413 = vld [vmem:[#allocation8 + $0xe0] sm:$0xf]
        %v1414 = vld [vmem:[#allocation8 + $0xe4] sm:$0xf]
        %v1415 = vld [vmem:[#allocation8 + $0xe8] sm:$0xf]
        %v1416 = vld [vmem:[#allocation8 + $0xec] sm:$0xf]
        %v1417 = vld [vmem:[#allocation8 + $0xf0] sm:$0xf]
        %v1418 = vld [vmem:[#allocation8 + $0xf4] sm:$0xf]
        %v1419 = vld [vmem:[#allocation8 + $0xf8] sm:$0xf]
        %v1420 = vld [vmem:[#allocation8 + $0xfc] sm:$0xf]
        %v1421 = vld [vmem:[#allocation10] sm:$0x1]
        %v1423 = vlaneseq
        %v1424 = vshrl.u32 %v1423, 7
        %v1425 = vsub.s32 0, %v1424
        %v1426 = vrot.slane %v1421, %v1425
        %v1492 = vunpack.c.l.b16 %v1357
        %v1493 = vunpack.c.l.b16 %v1358
        %v1494 = vunpack.c.l.b16 %v1359
        %v1495 = vunpack.c.l.b16 %v1360
        %v1496 = vunpack.c.l.b16 %v1361
        %v1497 = vunpack.c.l.b16 %v1362
        %v1498 = vunpack.c.l.b16 %v1363
        %v1499 = vunpack.c.l.b16 %v1364
        %v1500 = vunpack.c.l.b16 %v1365
        %v1501 = vunpack.c.l.b16 %v1366
        %v1502 = vunpack.c.l.b16 %v1367
        %v1503 = vunpack.c.l.b16 %v1368
        %v1504 = vunpack.c.l.b16 %v1369
        %v1505 = vunpack.c.l.b16 %v1370
        %v1506 = vunpack.c.l.b16 %v1371
        %v1507 = vunpack.c.l.b16 %v1372
        %v1508 = vunpack.c.l.b16 %v1373
        %v1509 = vunpack.c.l.b16 %v1374
        %v1510 = vunpack.c.l.b16 %v1375
        %v1511 = vunpack.c.l.b16 %v1376
        %v1512 = vunpack.c.l.b16 %v1377
        %v1513 = vunpack.c.l.b16 %v1378
        %v1514 = vunpack.c.l.b16 %v1379
        %v1515 = vunpack.c.l.b16 %v1380
        %v1516 = vunpack.c.l.b16 %v1381
        %v1517 = vunpack.c.l.b16 %v1382
        %v1518 = vunpack.c.l.b16 %v1383
        %v1519 = vunpack.c.l.b16 %v1384
        %v1520 = vunpack.c.l.b16 %v1385
        %v1521 = vunpack.c.l.b16 %v1386
        %v1522 = vunpack.c.l.b16 %v1387
        %v1523 = vunpack.c.l.b16 %v1388
        %v1524 = vunpack.c.l.b16 %v1389
        %v1525 = vunpack.c.l.b16 %v1390
        %v1526 = vunpack.c.l.b16 %v1391
        %v1527 = vunpack.c.l.b16 %v1392
        %v1528 = vunpack.c.l.b16 %v1393
        %v1529 = vunpack.c.l.b16 %v1394
        %v1530 = vunpack.c.l.b16 %v1395
        %v1531 = vunpack.c.l.b16 %v1396
        %v1532 = vunpack.c.l.b16 %v1397
        %v1533 = vunpack.c.l.b16 %v1398
        %v1534 = vunpack.c.l.b16 %v1399
        %v1535 = vunpack.c.l.b16 %v1400
        %v1536 = vunpack.c.l.b16 %v1401
        %v1537 = vunpack.c.l.b16 %v1402
        %v1538 = vunpack.c.l.b16 %v1403
        %v1539 = vunpack.c.l.b16 %v1404
        %v1540 = vunpack.c.l.b16 %v1405
        %v1541 = vunpack.c.l.b16 %v1406
        %v1542 = vunpack.c.l.b16 %v1407
        %v1543 = vunpack.c.l.b16 %v1408
        %v1544 = vunpack.c.l.b16 %v1409
        %v1545 = vunpack.c.l.b16 %v1410
        %v1546 = vunpack.c.l.b16 %v1411
        %v1547 = vunpack.c.l.b16 %v1412
        %v1548 = vunpack.c.l.b16 %v1413
        %v1549 = vunpack.c.l.b16 %v1414
        %v1550 = vunpack.c.l.b16 %v1415
        %v1551 = vunpack.c.l.b16 %v1416
        %v1552 = vunpack.c.l.b16 %v1417
        %v1553 = vunpack.c.l.b16 %v1418
        %v1554 = vunpack.c.l.b16 %v1419
        %v1555 = vunpack.c.l.b16 %v1420
        %v1556 = vpack.c.b16 %v1493, %v1492
        %v1557 = vpack.c.b16 %v1495, %v1494
        %v1558 = vpack.c.b16 %v1497, %v1496
        %v1559 = vpack.c.b16 %v1499, %v1498
        %v1560 = vpack.c.b16 %v1501, %v1500
        %v1561 = vpack.c.b16 %v1503, %v1502
        %v1562 = vpack.c.b16 %v1505, %v1504
        %v1563 = vpack.c.b16 %v1507, %v1506
        %v1564 = vpack.c.b16 %v1509, %v1508
        %v1565 = vpack.c.b16 %v1511, %v1510
        %v1566 = vpack.c.b16 %v1513, %v1512
        %v1567 = vpack.c.b16 %v1515, %v1514
        %v1568 = vpack.c.b16 %v1517, %v1516
        %v1569 = vpack.c.b16 %v1519, %v1518
        %v1570 = vpack.c.b16 %v1521, %v1520
        %v1571 = vpack.c.b16 %v1523, %v1522
        %v1572 = vpack.c.b16 %v1525, %v1524
        %v1573 = vpack.c.b16 %v1527, %v1526
        %v1574 = vpack.c.b16 %v1529, %v1528
        %v1575 = vpack.c.b16 %v1531, %v1530
        %v1576 = vpack.c.b16 %v1533, %v1532
        %v1577 = vpack.c.b16 %v1535, %v1534
        %v1578 = vpack.c.b16 %v1537, %v1536
        %v1579 = vpack.c.b16 %v1539, %v1538
        %v1580 = vpack.c.b16 %v1541, %v1540
        %v1581 = vpack.c.b16 %v1543, %v1542
        %v1582 = vpack.c.b16 %v1545, %v1544
        %v1583 = vpack.c.b16 %v1547, %v1546
        %v1584 = vpack.c.b16 %v1549, %v1548
        %v1585 = vpack.c.b16 %v1551, %v1550
        %v1586 = vpack.c.b16 %v1553, %v1552
        %v1587 = vpack.c.b16 %v1555, %v1554
        %1620 = vmatprep.subr.bf16.mxu0 0
        %1621 = vmatpush1.bf16.msra.mxu0 %v1556
        %1622 = vmatprep.subr.bf16.mxu0 0
        %1623 = vmatpush1.bf16.msra.mxu0 %v1557
        %1624 = vmatprep.subr.bf16.mxu0 0
        %1625 = vmatpush1.bf16.msra.mxu0 %v1558
        %1626 = vmatprep.subr.bf16.mxu0 0
        %1627 = vmatpush1.bf16.msra.mxu0 %v1559
        %1628 = vmatprep.subr.bf16.mxu0 0
        %1629 = vmatpush1.bf16.msra.mxu0 %v1560
        %1630 = vmatprep.subr.bf16.mxu0 0
        %1631 = vmatpush1.bf16.msra.mxu0 %v1561
        %1632 = vmatprep.subr.bf16.mxu0 0
        %1633 = vmatpush1.bf16.msra.mxu0 %v1562
        %1634 = vmatprep.subr.bf16.mxu0 0
        %1635 = vmatpush1.bf16.msra.mxu0 %v1563
        %1636 = vmatprep.subr.bf16.mxu0 0
        %1637 = vmatpush1.bf16.msra.mxu0 %v1564
        %1638 = vmatprep.subr.bf16.mxu0 0
        %1639 = vmatpush1.bf16.msra.mxu0 %v1565
        %1640 = vmatprep.subr.bf16.mxu0 0
        %1641 = vmatpush1.bf16.msra.mxu0 %v1566
        %1642 = vmatprep.subr.bf16.mxu0 0
        %1643 = vmatpush1.bf16.msra.mxu0 %v1567
        %1644 = vmatprep.subr.bf16.mxu0 0
        %1645 = vmatpush1.bf16.msra.mxu0 %v1568
        %1646 = vmatprep.subr.bf16.mxu0 0
        %1647 = vmatpush1.bf16.msra.mxu0 %v1569
        %1648 = vmatprep.subr.bf16.mxu0 0
        %1649 = vmatpush1.bf16.msra.mxu0 %v1570
        %1650 = vmatprep.subr.bf16.mxu0 0
        %1651 = vmatpush1.bf16.msra.mxu0 %v1571
        %1652 = vmatprep.mubr.bf16.mxu0 %v1326
        %1653 = vmatmul.mubr.bf16.gmra.mrb[0].mxu0 %v1325
        %v1654 = vpop.f32.mrb[0].mxu0
        %v1655 = vadd.f32 %v1426, %v1654
        %v1656 = vpop.f32.mrb[0].mxu0
        %v1657 = vpop.f32.mrb[0].mxu0
        %v1658 = vadd.f32 %v1426, %v1657
        %v1659 = vpop.f32.mrb[0].mxu0
        %1660 = vmatprep.mubr.bf16.mxu0 %v1330
        %1661 = vmatmul.mubr.bf16.gmra.mrb[0].mxu0 %v1329
        %v1662 = vpop.f32.mrb[0].mxu0
        %v1663 = vadd.f32 %v1426, %v1662
        %v1664 = vpop.f32.mrb[0].mxu0
        %v1665 = vpop.f32.mrb[0].mxu0
        %v1666 = vadd.f32 %v1426, %v1665
        %v1667 = vpop.f32.mrb[0].mxu0
        %1668 = vmatprep.mubr.bf16.mxu0 %v1334
        %1669 = vmatmul.mubr.bf16.gmra.mrb[0].mxu0 %v1333
        %v1670 = vpop.f32.mrb[0].mxu0
        %v1671 = vadd.f32 %v1426, %v1670
        %v1672 = vpop.f32.mrb[0].mxu0
        %v1673 = vpop.f32.mrb[0].mxu0
        %v1674 = vadd.f32 %v1426, %v1673
        %v1675 = vpop.f32.mrb[0].mxu0
        %1676 = vmatprep.mubr.bf16.mxu0 %v1338
        %1677 = vmatmul.mubr.bf16.gmra.mrb[0].mxu0 %v1337
        %v1678 = vpop.f32.mrb[0].mxu0
        %v1679 = vadd.f32 %v1426, %v1678
        %v1680 = vpop.f32.mrb[0].mxu0
        %v1681 = vpop.f32.mrb[0].mxu0
        %v1682 = vadd.f32 %v1426, %v1681
        %v1683 = vpop.f32.mrb[0].mxu0
        %1684 = vmatprep.mubr.bf16.mxu0 %v1342
        %1685 = vmatmul.mubr.bf16.gmra.mrb[0].mxu0 %v1341
        %v1686 = vpop.f32.mrb[0].mxu0
        %v1687 = vadd.f32 %v1426, %v1686
        %v1688 = vpop.f32.mrb[0].mxu0
        %v1689 = vpop.f32.mrb[0].mxu0
        %v1690 = vadd.f32 %v1426, %v1689
        %v1691 = vpop.f32.mrb[0].mxu0
        %1692 = vmatprep.mubr.bf16.mxu0 %v1346
        %1693 = vmatmul.mubr.bf16.gmra.mrb[0].mxu0 %v1345
        %v1694 = vpop.f32.mrb[0].mxu0
        %v1695 = vadd.f32 %v1426, %v1694
        %v1696 = vpop.f32.mrb[0].mxu0
        %v1697 = vpop.f32.mrb[0].mxu0
        %v1698 = vadd.f32 %v1426, %v1697
        %v1699 = vpop.f32.mrb[0].mxu0
        %1700 = vmatprep.mubr.bf16.mxu0 %v1350
        %1701 = vmatmul.mubr.bf16.gmra.mrb[0].mxu0 %v1349
        %v1702 = vpop.f32.mrb[0].mxu0
        %v1703 = vadd.f32 %v1426, %v1702
        %v1704 = vpop.f32.mrb[0].mxu0
        %v1705 = vpop.f32.mrb[0].mxu0
        %v1706 = vadd.f32 %v1426, %v1705
        %v1707 = vpop.f32.mrb[0].mxu0
        %1708 = vmatprep.mubr.bf16.mxu0 %v1354
        %1709 = vmatmul.mubr.bf16.gmra.mrb[0].mxu0 %v1353
        %v1710 = vpop.f32.mrb[0].mxu0
        %v1711 = vadd.f32 %v1426, %v1710
        %v1712 = vpop.f32.mrb[0].mxu0
        %v1713 = vpop.f32.mrb[0].mxu0
        %v1714 = vadd.f32 %v1426, %v1713
        %v1715 = vpop.f32.mrb[0].mxu0
        %1716 = vdwg.mxu0
        %1717 = vmatprep.subr.bf16.mxu0 0
        %1718 = vmatpush1.bf16.msra.mxu0 %v1572
        %1719 = vmatprep.subr.bf16.mxu0 0
        %1720 = vmatpush1.bf16.msra.mxu0 %v1573
        %1721 = vmatprep.subr.bf16.mxu0 0
        %1722 = vmatpush1.bf16.msra.mxu0 %v1574
        %1723 = vmatprep.subr.bf16.mxu0 0
        %1724 = vmatpush1.bf16.msra.mxu0 %v1575
        %1725 = vmatprep.subr.bf16.mxu0 0
        %1726 = vmatpush1.bf16.msra.mxu0 %v1576
        %1727 = vmatprep.subr.bf16.mxu0 0
        %1728 = vmatpush1.bf16.msra.mxu0 %v1577
        %1729 = vmatprep.subr.bf16.mxu0 0
        %1730 = vmatpush1.bf16.msra.mxu0 %v1578
        %1731 = vmatprep.subr.bf16.mxu0 0
        %1732 = vmatpush1.bf16.msra.mxu0 %v1579
        %1733 = vmatprep.subr.bf16.mxu0 0
        %1734 = vmatpush1.bf16.msra.mxu0 %v1580
        %1735 = vmatprep.subr.bf16.mxu0 0
        %1736 = vmatpush1.bf16.msra.mxu0 %v1581
        %1737 = vmatprep.subr.bf16.mxu0 0
        %1738 = vmatpush1.bf16.msra.mxu0 %v1582
        %1739 = vmatprep.subr.bf16.mxu0 0
        %1740 = vmatpush1.bf16.msra.mxu0 %v1583
        %1741 = vmatprep.subr.bf16.mxu0 0
        %1742 = vmatpush1.bf16.msra.mxu0 %v1584
        %1743 = vmatprep.subr.bf16.mxu0 0
        %1744 = vmatpush1.bf16.msra.mxu0 %v1585
        %1745 = vmatprep.subr.bf16.mxu0 0
        %1746 = vmatpush1.bf16.msra.mxu0 %v1586
        %1747 = vmatprep.subr.bf16.mxu0 0
        %1748 = vmatpush1.bf16.msra.mxu0 %v1587
        %1749 = vmatprep.mubr.bf16.mxu0 %v1328
        %1750 = vmatmul.mubr.bf16.gmra.mrb[0].mxu0 %v1327
        %v1751 = vpop.f32.mrb[0].mxu0
        %v1752 = vadd.f32 %v1655, %v1751
        %v1753 = vpop.f32.mrb[0].mxu0
        %v1754 = vpop.f32.mrb[0].mxu0
        %v1755 = vadd.f32 %v1658, %v1754
        %v1756 = vpop.f32.mrb[0].mxu0
        %1757 = vmatprep.mubr.bf16.mxu0 %v1332
        %1758 = vmatmul.mubr.bf16.gmra.mrb[0].mxu0 %v1331
        %v1759 = vpop.f32.mrb[0].mxu0
        %v1760 = vadd.f32 %v1663, %v1759
        %v1761 = vpop.f32.mrb[0].mxu0
        %v1762 = vpop.f32.mrb[0].mxu0
        %v1763 = vadd.f32 %v1666, %v1762
        %v1764 = vpop.f32.mrb[0].mxu0
        %1765 = vmatprep.mubr.bf16.mxu0 %v1336
        %1766 = vmatmul.mubr.bf16.gmra.mrb[0].mxu0 %v1335
        %v1767 = vpop.f32.mrb[0].mxu0
        %v1768 = vadd.f32 %v1671, %v1767
        %v1769 = vpop.f32.mrb[0].mxu0
        %v1770 = vpop.f32.mrb[0].mxu0
        %v1771 = vadd.f32 %v1674, %v1770
        %v1772 = vpop.f32.mrb[0].mxu0
        %1773 = vmatprep.mubr.bf16.mxu0 %v1340
        %1774 = vmatmul.mubr.bf16.gmra.mrb[0].mxu0 %v1339
        %v1775 = vpop.f32.mrb[0].mxu0
        %v1776 = vadd.f32 %v1679, %v1775
        %v1777 = vpop.f32.mrb[0].mxu0
        %v1778 = vpop.f32.mrb[0].mxu0
        %v1779 = vadd.f32 %v1682, %v1778
        %v1780 = vpop.f32.mrb[0].mxu0
        %1781 = vmatprep.mubr.bf16.mxu0 %v1344
        %1782 = vmatmul.mubr.bf16.gmra.mrb[0].mxu0 %v1343
        %v1783 = vpop.f32.mrb[0].mxu0
        %v1784 = vadd.f32 %v1687, %v1783
        %v1785 = vpop.f32.mrb[0].mxu0
        %v1786 = vpop.f32.mrb[0].mxu0
        %v1787 = vadd.f32 %v1690, %v1786
        %v1788 = vpop.f32.mrb[0].mxu0
        %1789 = vmatprep.mubr.bf16.mxu0 %v1348
        %1790 = vmatmul.mubr.bf16.gmra.mrb[0].mxu0 %v1347
        %v1791 = vpop.f32.mrb[0].mxu0
        %v1792 = vadd.f32 %v1695, %v1791
        %v1793 = vpop.f32.mrb[0].mxu0
        %v1794 = vpop.f32.mrb[0].mxu0
        %v1795 = vadd.f32 %v1698, %v1794
        %v1796 = vpop.f32.mrb[0].mxu0
        %1797 = vmatprep.mubr.bf16.mxu0 %v1352
        %1798 = vmatmul.mubr.bf16.gmra.mrb[0].mxu0 %v1351
        %v1799 = vpop.f32.mrb[0].mxu0
        %v1800 = vadd.f32 %v1703, %v1799
        %v1801 = vpop.f32.mrb[0].mxu0
        %v1802 = vpop.f32.mrb[0].mxu0
        %v1803 = vadd.f32 %v1706, %v1802
        %v1804 = vpop.f32.mrb[0].mxu0
        %1805 = vmatprep.mubr.bf16.mxu0 %v1356
        %1806 = vmatmul.mubr.bf16.gmra.mrb[0].mxu0 %v1355
        %v1807 = vpop.f32.mrb[0].mxu0
        %v1808 = vadd.f32 %v1711, %v1807
        %v1809 = vpop.f32.mrb[0].mxu0
        %v1810 = vpop.f32.mrb[0].mxu0
        %v1811 = vadd.f32 %v1714, %v1810
        %v1812 = vpop.f32.mrb[0].mxu0
        %1813 = vdwg.mxu0
        %1814 = vst [vmem:[%s296] sm:$0xff] %v1752
        %1815 = vst [vmem:[%s296 + $0x8] sm:$0xff] %v1755
        %1816 = vst [vmem:[%s296 + $0x10] sm:$0xff] %v1760
        %1817 = vst [vmem:[%s296 + $0x18] sm:$0xff] %v1763
        %1818 = vst [vmem:[%s296 + $0x20] sm:$0xff] %v1768
        %1819 = vst [vmem:[%s296 + $0x28] sm:$0xff] %v1771
        %1820 = vst [vmem:[%s296 + $0x30] sm:$0xff] %v1776
        %1821 = vst [vmem:[%s296 + $0x38] sm:$0xff] %v1779
        %1822 = vst [vmem:[%s296 + $0x40] sm:$0xff] %v1784
        %1823 = vst [vmem:[%s296 + $0x48] sm:$0xff] %v1787
        %1824 = vst [vmem:[%s296 + $0x50] sm:$0xff] %v1792
        %1825 = vst [vmem:[%s296 + $0x58] sm:$0xff] %v1795
        %1826 = vst [vmem:[%s296 + $0x60] sm:$0xff] %v1800
        %1827 = vst [vmem:[%s296 + $0x68] sm:$0xff] %v1803
        %1828 = vst [vmem:[%s296 + $0x70] sm:$0xff] %v1808
        %1829 = vst [vmem:[%s296 + $0x78] sm:$0xff] %v1811
        %s1830 = sand.u32 %s142, 1
        %s1831 = scalar_lea.sflag [#allocation4], %s1830
        %s1832 = sand.u32 %s142, 1
        %s1833 = smul.addr %s1832, 128
        %s1834 = scalar_lea.vmem [#allocation11], %s1833
        // Predicated region
        $region61: #{tpu_custom_call.1} parent=39 // pred_check
          %p1835 = pneg %p152
        $region62: #{tpu_custom_call.1} parent=39 // pred_check_branch
          %1837 = sbr.rel (%p1835) target = $region64
        $region63: #{tpu_custom_call.1} parent=39 // pred_region
          %s1838 = smul.u32 16, %s24
          %s1840 = ssub.s32 2048, 2048
          %1841 = vsyncadd %s1831, %s1840
          %s1842 = smul.addr %s1838, 128
          %s1843 = scalar_lea.hbm %s5, %s1842
          %s1844 = sshll.u32 %s1834, 4
          %s1845 = int_to_ptr.vmem [resolvable:$true] %s1844
          %1850 = dma.vmem_to_hbm [thread:$0]  %s1845, 2048, %s1843, %s1831, 128, 128, 8
        $region64: #{tpu_custom_call.1} parent=39 // pred_fallthru
          _
      $region40: #{tpu_custom_call.1} parent=5 // pred_fallthru
        _
      %p1851 = scmp.le.s32.totalorder 2, %s19
      // Predicated region
      $region65: #{tpu_custom_call.1} parent=5 // pred_check
        %p1852 = pneg %p1851
      $region66: #{tpu_custom_call.1} parent=5 // pred_check_branch
        %1854 = sbr.rel (%p1852) target = $region68
      $region67: #{tpu_custom_call.1} parent=5 // pred_region
        %s1855 = ssub.s32 %s19, 2
        // Predicated region
        $region69: #{tpu_custom_call.1} parent=67 // pred_check
          %p1856 = pneg %p158
        $region70: #{tpu_custom_call.1} parent=67 // pred_check_branch
          %1858 = sbr.rel (%p1856) target = $region72
        $region71: #{tpu_custom_call.1} parent=67 // pred_region
          %s1859 = sand.u32 %s143, 1
          %s1860 = scalar_lea.sflag [#allocation4], %s1859
          %s1861 = sand.u32 %s143, 1
          %s1862 = smul.addr %s1861, 128
          %s1863 = scalar_lea.vmem [#allocation11], %s1862
          %1864 = dma.done %s1860, 2048
        $region72: #{tpu_custom_call.1} parent=67 // pred_fallthru
          _
      $region68: #{tpu_custom_call.1} parent=5 // pred_fallthru
        _
    $region6: #{tpu_custom_call.1} parent=1 // loop_footer
      %s23 = sadd.s32 1, %s19
    $region7: #{tpu_custom_call.1} parent=1 // loop_footer_branch
      %18 = sbr.rel target = $region3
    $region8: #{tpu_custom_call.1} parent=1 // loop_exit
      _
    %1865 = vsyncpa [#allocation3], 1
    %s1866 = scalar_lea.sflag [#allocation3], 1
    %1867 = vsyncpa %s1866, 1
    %1868 = vsyncpa [#allocation6], 1
    %1869 = vsyncpa [#allocation9], 1
    %1870 = vsyncpa [#allocation4], 1
    %s1871 = scalar_lea.sflag [#allocation4], 1
    %1872 = vsyncpa %s1871, 1

// kernel: tpu_custom_call.1
$region0: #{tpu_custom_call.1}
  #allocation0 [shape = 'u32[]', space=smem, size = 0x4, offset = 0x4, fixed_abs, tag = 'smem constant byte address 0x4 - core index']
  #allocation1 [shape = 'u32[144,128]{1,0:T(1,128)}', space=vmem, size = 0x12000, scoped, tag = 'internal scratch']
  %s0 = inlined_call_operand.hbm [shape: f32[256,128], index: 0, kind: input, shape index: {}]
  %s1 = inlined_call_operand.hbm [shape: bf16[128,512], index: 1, kind: input, shape index: {}]
  %s2 = inlined_call_operand.hbm [shape: f32[1,512], index: 2, kind: input, shape index: {}]
  %s3 = inlined_call_operand.hbm [shape: bf16[512,128], index: 3, kind: input, shape index: {}]
  %s4 = inlined_call_operand.hbm [shape: f32[1,128], index: 4, kind: input, shape index: {}]
  %s5 = inlined_call_operand.hbm [shape: f32[256,128], index: 5, kind: output, shape index: {}]
  %s6 = sld [smem:[#allocation0]]
  $region73: #{tpu_custom_call.1} parent=0
    _
  %s8 = ssub.s32 1, %s6
  %s9 = scalar_select 0, %s8, %s6
  $region1: #{tpu_custom_call.1} parent=0
    #allocation2 [shape = 'u8[131072]{0}', space=vmem, size = 0x20000, scoped, tag = 'input window, operand 0']
    #allocation3 [shape = 's32[2]{0}', space=sflag, size = 0x8, scoped, tag = 'scoped memory for tpu_custom_call.1']
    #allocation4 [shape = 's32[2]{0}', space=sflag, size = 0x8, scoped, tag = 'scoped memory for tpu_custom_call.1']
    #allocation5 [shape = 'u8[131072]{0}', space=vmem, size = 0x20000, scoped, tag = 'input window, operand 1, single buffered']
    #allocation6 [shape = 's32[1]{0}', space=sflag, size = 0x4, scoped, tag = 'scoped memory for tpu_custom_call.1']
    #allocation7 [shape = 'u8[2048]{0}', space=vmem, size = 0x800, scoped, tag = 'input window, operand 2, single buffered']
    #allocation8 [shape = 'u8[131072]{0}', space=vmem, size = 0x20000, scoped, tag = 'input window, operand 3, single buffered']
    #allocation9 [shape = 's32[1]{0}', space=sflag, size = 0x4, scoped, tag = 'scoped memory for tpu_custom_call.1']
    #allocation10 [shape = 'u8[512]{0}', space=vmem, size = 0x400, scoped, tag = 'input window, operand 4, single buffered']
    #allocation11 [shape = 'u8[131072]{0}', space=vmem, size = 0x20000, scoped, tag = 'output window, operand 0']
    %10 = vsyncpa [#allocation3], 0
    %s11 = scalar_lea.sflag [#allocation3], 1
    %12 = vsyncpa %s11, 0
    %13 = vsyncpa [#allocation6], 0
    %14 = vsyncpa [#allocation9], 0
    %15 = vsyncpa [#allocation4], 0
    %s16 = scalar_lea.sflag [#allocation4], 1
    %17 = vsyncpa %s16, 0
    loop: start=0, step=1, limit=4
    $region2: #{tpu_custom_call.1} parent=1 // loop_pre_header
      _
    $region3: #{tpu_custom_call.1} parent=1 // loop_header
      %s19 = sphi 0, %s23
      %p20 = scmp.ge.s32.totalorder %s19, 4
      %s29 = sphi 0, %s31
      %s32 = sphi 0, %s29
      %s33 = sphi 0, %s32
      %s49 = sphi 0, %s33
      %s53 = sphi 0, %s53
      %s55 = sphi 0, %s53
      %s56 = sphi 0, %s55
      %s70 = sphi 0, %s56
      %s74 = sphi 0, %s74
      %s76 = sphi 0, %s74
      %s77 = sphi 0, %s76
      %s91 = sphi 0, %s77
      %s95 = sphi 0, %s95
      %s97 = sphi 0, %s95
      %s98 = sphi 0, %s97
      %s112 = sphi 0, %s98
      %s116 = sphi 0, %s116
      %s118 = sphi 0, %s116
      %s119 = sphi 0, %s118
      %s133 = sphi 0, %s119
      %s139 = sphi 0, %s141
      %s142 = sphi 0, %s139
      %s143 = sphi 0, %s142
      %s159 = sphi 0, %s143
    $region4: #{tpu_custom_call.1} parent=1 // loop_header_branch
      %22 = sbr.rel (%p20) target = $region8
    $region5: #{tpu_custom_call.1} parent=1 // loop_body
      %s24 = ssub.s32 %s19, 1
      %s25 = ssub.s32 %s19, 2
      %s26 = sadd.s32 %s19, 1
      %s27 = ssub.s32 %s19, %s26
      %p28 = scmp.eq.s32.totalorder %s27, 0
      %s30 = sadd.s32 %s29, 1
      %s31 = scalar_select %p28, %s29, %s30
      %p34 = pneg %p28
      %p35 = scmp.eq.s32.totalorder %s19, 1
      %p36 = por %p34, %p35
      %p37 = scmp.ne.s32.totalorder %s29, %s32
      %p38 = scmp.eq.s32.totalorder %s19, 0
      %p39 = por %p37, %p38
      %p40 = scmp.ne.s32.totalorder %s29, %s32
      %p41 = scmp.eq.s32.totalorder %s24, 1
      %p42 = por %p40, %p41
      %p43 = scmp.ne.s32.totalorder %s32, %s33
      %p44 = scmp.eq.s32.totalorder %s24, 0
      %p45 = por %p43, %p44
      %p46 = scmp.ne.s32.totalorder %s32, %s33
      %p47 = scmp.eq.s32.totalorder %s25, 1
      %p48 = por %p46, %p47
      %p50 = scmp.ne.s32.totalorder %s33, %s49
      %p51 = scmp.eq.s32.totalorder %s25, 0
      %p52 = por %p50, %p51
      %s54 = sadd.s32 %s53, 1
      %p57 = scmp.eq.s32.totalorder %s19, 1
      %p58 = scmp.ne.s32.totalorder %s53, %s55
      %p59 = scmp.eq.s32.totalorder %s19, 0
      %p60 = por %p58, %p59
      %p61 = scmp.ne.s32.totalorder %s53, %s55
      %p62 = scmp.eq.s32.totalorder %s24, 1
      %p63 = por %p61, %p62
      %p64 = scmp.ne.s32.totalorder %s55, %s56
      %p65 = scmp.eq.s32.totalorder %s24, 0
      %p66 = por %p64, %p65
      %p67 = scmp.ne.s32.totalorder %s55, %s56
      %p68 = scmp.eq.s32.totalorder %s25, 1
      %p69 = por %p67, %p68
      %p71 = scmp.ne.s32.totalorder %s56, %s70
      %p72 = scmp.eq.s32.totalorder %s25, 0
      %p73 = por %p71, %p72
      %s75 = sadd.s32 %s74, 1
      %p78 = scmp.eq.s32.totalorder %s19, 1
      %p79 = scmp.ne.s32.totalorder %s74, %s76
      %p80 = scmp.eq.s32.totalorder %s19, 0
      %p81 = por %p79, %p80
      %p82 = scmp.ne.s32.totalorder %s74, %s76
      %p83 = scmp.eq.s32.totalorder %s24, 1
      %p84 = por %p82, %p83
      %p85 = scmp.ne.s32.totalorder %s76, %s77
      %p86 = scmp.eq.s32.totalorder %s24, 0
      %p87 = por %p85, %p86
      %p88 = scmp.ne.s32.totalorder %s76, %s77
      %p89 = scmp.eq.s32.totalorder %s25, 1
      %p90 = por %p88, %p89
      %p92 = scmp.ne.s32.totalorder %s77, %s91
      %p93 = scmp.eq.s32.totalorder %s25, 0
      %p94 = por %p92, %p93
      %s96 = sadd.s32 %s95, 1
      %p99 = scmp.eq.s32.totalorder %s19, 1
      %p100 = scmp.ne.s32.totalorder %s95, %s97
      %p101 = scmp.eq.s32.totalorder %s19, 0
      %p102 = por %p100, %p101
      %p103 = scmp.ne.s32.totalorder %s95, %s97
      %p104 = scmp.eq.s32.totalorder %s24, 1
      %p105 = por %p103, %p104
      %p106 = scmp.ne.s32.totalorder %s97, %s98
      %p107 = scmp.eq.s32.totalorder %s24, 0
      %p108 = por %p106, %p107
      %p109 = scmp.ne.s32.totalorder %s97, %s98
      %p110 = scmp.eq.s32.totalorder %s25, 1
      %p111 = por %p109, %p110
      %p113 = scmp.ne.s32.totalorder %s98, %s112
      %p114 = scmp.eq.s32.totalorder %s25, 0
      %p115 = por %p113, %p114
      %s117 = sadd.s32 %s116, 1
      %p120 = scmp.eq.s32.totalorder %s19, 1
      %p121 = scmp.ne.s32.totalorder %s116, %s118
      %p122 = scmp.eq.s32.totalorder %s19, 0
      %p123 = por %p121, %p122
      %p124 = scmp.ne.s32.totalorder %s116, %s118
      %p125 = scmp.eq.s32.totalorder %s24, 1
      %p126 = por %p124, %p125
      %p127 = scmp.ne.s32.totalorder %s118, %s119
      %p128 = scmp.eq.s32.totalorder %s24, 0
      %p129 = por %p127, %p128
      %p130 = scmp.ne.s32.totalorder %s118, %s119
      %p131 = scmp.eq.s32.totalorder %s25, 1
      %p132 = por %p130, %p131
      %p134 = scmp.ne.s32.totalorder %s119, %s133
      %p135 = scmp.eq.s32.totalorder %s25, 0
      %p136 = por %p134, %p135
      %s137 = ssub.s32 %s19, %s26
      %p138 = scmp.eq.s32.totalorder %s137, 0
      %s140 = sadd.s32 %s139, 1
      %s141 = scalar_select %p138, %s139, %s140
      %p144 = pneg %p138
      %p145 = scmp.eq.s32.totalorder %s19, 1
      %p146 = por %p144, %p145
      %p147 = scmp.ne.s32.totalorder %s139, %s142
      %p148 = scmp.eq.s32.totalorder %s19, 0
      %p149 = por %p147, %p148
      %p150 = scmp.ne.s32.totalorder %s139, %s142
      %p151 = scmp.eq.s32.totalorder %s24, 1
      %p152 = por %p150, %p151
      %p153 = scmp.ne.s32.totalorder %s142, %s143
      %p154 = scmp.eq.s32.totalorder %s24, 0
      %p155 = por %p153, %p154
      %p156 = scmp.ne.s32.totalorder %s142, %s143
      %p157 = scmp.eq.s32.totalorder %s25, 1
      %p158 = por %p156, %p157
      %p160 = scmp.ne.s32.totalorder %s143, %s159
      %p161 = scmp.eq.s32.totalorder %s25, 0
      %p162 = por %p160, %p161
      %p163 = scmp.le.s32.totalorder 1, %s19
      %p164 = scmp.lt.s32.totalorder %s19, 3
      %p165 = pnand %p163, %p164
      %p166 = pneg %p165
      // Predicated region
      $region9: #{tpu_custom_call.1} parent=5 // pred_check
        _
      $region10: #{tpu_custom_call.1} parent=5 // pred_check_branch
        %168 = sbr.rel (%p165) target = $region12
      $region11: #{tpu_custom_call.1} parent=5 // pred_region
        %s169 = ssub.s32 %s19, 1
        // Predicated region
        $region13: #{tpu_custom_call.1} parent=11 // pred_check
          %p170 = pneg %p66
        $region14: #{tpu_custom_call.1} parent=11 // pred_check_branch
          %172 = sbr.rel (%p170) target = $region16
        $region15: #{tpu_custom_call.1} parent=11 // pred_region
          %s174 = ssub.s32 4096, 4096
          %175 = vsyncadd [#allocation6], %s174
          %s176 = sshll.u32 [#allocation5], 4
          %s177 = int_to_ptr.vmem [resolvable:$true] %s176
          %182 = dma.hbm_to_vmem [thread:$0]  %s1, 4096, %s177, [#allocation6], 256, 256, 16
        $region16: #{tpu_custom_call.1} parent=11 // pred_fallthru
          _
        // Predicated region
        $region17: #{tpu_custom_call.1} parent=11 // pred_check
          %p183 = pneg %p87
        $region18: #{tpu_custom_call.1} parent=11 // pred_check_branch
          %185 = sbr.rel (%p183) target = $region20
        $region19: #{tpu_custom_call.1} parent=11 // pred_region
          %s187 = ssub.s32 64, 64
          %188 = vsyncadd [#allocation6], %s187
          %s190 = sshll.u32 [#allocation7], 4
          %s191 = int_to_ptr.vmem [resolvable:$true] %s190
          %193 = dma.hbm_to_vmem [thread:$0]  %s2, 64, %s191, [#allocation6]
        $region20: #{tpu_custom_call.1} parent=11 // pred_fallthru
          _
        // Predicated region
        $region21: #{tpu_custom_call.1} parent=11 // pred_check
          %p194 = pneg %p108
        $region22: #{tpu_custom_call.1} parent=11 // pred_check_branch
          %196 = sbr.rel (%p194) target = $region24
        $region23: #{tpu_custom_call.1} parent=11 // pred_region
          %s198 = ssub.s32 4096, 4096
          %199 = vsyncadd [#allocation9], %s198
          %s200 = sshll.u32 [#allocation8], 4
          %s201 = int_to_ptr.vmem [resolvable:$true] %s200
          %206 = dma.hbm_to_vmem [thread:$0]  %s3, 4096, %s201, [#allocation9], 64, 64, 4
        $region24: #{tpu_custom_call.1} parent=11 // pred_fallthru
          _
        // Predicated region
        $region25: #{tpu_custom_call.1} parent=11 // pred_check
          %p207 = pneg %p129
        $region26: #{tpu_custom_call.1} parent=11 // pred_check_branch
          %209 = sbr.rel (%p207) target = $region28
        $region27: #{tpu_custom_call.1} parent=11 // pred_region
          %s211 = ssub.s32 16, 16
          %212 = vsyncadd [#allocation9], %s211
          %s214 = sshll.u32 [#allocation10], 4
          %s215 = int_to_ptr.vmem [resolvable:$true] %s214
          %217 = dma.hbm_to_vmem [thread:$0]  %s4, 16, %s215, [#allocation9]
        $region28: #{tpu_custom_call.1} parent=11 // pred_fallthru
          _
      $region12: #{tpu_custom_call.1} parent=5 // pred_fallthru
        _
      %p218 = scmp.lt.s32.totalorder %s19, 2
      // Predicated region
      $region29: #{tpu_custom_call.1} parent=5 // pred_check
        %p219 = pneg %p218
      $region30: #{tpu_custom_call.1} parent=5 // pred_check_branch
        %221 = sbr.rel (%p219) target = $region32
      $region31: #{tpu_custom_call.1} parent=5 // pred_region
        // Predicated region
        $region33: #{tpu_custom_call.1} parent=31 // pred_check
          %p222 = pneg %p39
        $region34: #{tpu_custom_call.1} parent=31 // pred_check_branch
          %224 = sbr.rel (%p222) target = $region36
        $region35: #{tpu_custom_call.1} parent=31 // pred_region
          %s225 = sand.u32 %s29, 1
          %s226 = scalar_lea.sflag [#allocation3], %s225
          %s227 = sand.u32 %s29, 1
          %s228 = smul.addr %s227, 128
          %s229 = scalar_lea.vmem [#allocation2], %s228
          %s230 = smul.u32 16, %s19
          %s232 = ssub.s32 2048, 2048
          %233 = vsyncadd %s226, %s232
          %s234 = smul.addr %s230, 128
          %s235 = scalar_lea.hbm %s0, %s234
          %s236 = sshll.u32 %s229, 4
          %s237 = int_to_ptr.vmem [resolvable:$true] %s236
          %242 = dma.hbm_to_vmem [thread:$0]  %s235, 2048, %s237, %s226, 128, 128, 8
        $region36: #{tpu_custom_call.1} parent=31 // pred_fallthru
          _
      $region32: #{tpu_custom_call.1} parent=5 // pred_fallthru
        _
      %p243 = scmp.le.s32.totalorder 1, %s19
      %p244 = scmp.lt.s32.totalorder %s19, 3
      %p245 = pnand %p243, %p244
      %p246 = pneg %p245
      // Predicated region
      $region37: #{tpu_custom_call.1} parent=5 // pred_check
        _
      $region38: #{tpu_custom_call.1} parent=5 // pred_check_branch
        %248 = sbr.rel (%p245) target = $region40
      $region39: #{tpu_custom_call.1} parent=5 // pred_region
        %s249 = ssub.s32 %s19, 1
        %s250 = sand.u32 %s32, 1
        %s251 = scalar_lea.sflag [#allocation3], %s250
        %s252 = sand.u32 %s32, 1
        %s253 = smul.addr %s252, 128
        %s254 = scalar_lea.vmem [#allocation2], %s253
        // Predicated region
        $region41: #{tpu_custom_call.1} parent=39 // pred_check
          %p255 = pneg %p45
        $region42: #{tpu_custom_call.1} parent=39 // pred_check_branch
          %257 = sbr.rel (%p255) target = $region44
        $region43: #{tpu_custom_call.1} parent=39 // pred_region
          %258 = dma.done %s251, 2048
        $region44: #{tpu_custom_call.1} parent=39 // pred_fallthru
          _
        // Predicated region
        $region45: #{tpu_custom_call.1} parent=39 // pred_check
          %p259 = pneg %p66
        $region46: #{tpu_custom_call.1} parent=39 // pred_check_branch
          %261 = sbr.rel (%p259) target = $region48
        $region47: #{tpu_custom_call.1} parent=39 // pred_region
          %262 = dma.done [#allocation6], 4096
        $region48: #{tpu_custom_call.1} parent=39 // pred_fallthru
          _
        // Predicated region
        $region49: #{tpu_custom_call.1} parent=39 // pred_check
          %p263 = pneg %p87
        $region50: #{tpu_custom_call.1} parent=39 // pred_check_branch
          %265 = sbr.rel (%p263) target = $region52
        $region51: #{tpu_custom_call.1} parent=39 // pred_region
          %266 = dma.done [#allocation6], 64
        $region52: #{tpu_custom_call.1} parent=39 // pred_fallthru
          _
        // Predicated region
        $region53: #{tpu_custom_call.1} parent=39 // pred_check
          %p267 = pneg %p108
        $region54: #{tpu_custom_call.1} parent=39 // pred_check_branch
          %269 = sbr.rel (%p267) target = $region56
        $region55: #{tpu_custom_call.1} parent=39 // pred_region
          %270 = dma.done [#allocation9], 4096
        $region56: #{tpu_custom_call.1} parent=39 // pred_fallthru
          _
        // Predicated region
        $region57: #{tpu_custom_call.1} parent=39 // pred_check
          %p271 = pneg %p129
        $region58: #{tpu_custom_call.1} parent=39 // pred_check_branch
          %273 = sbr.rel (%p271) target = $region60
        $region59: #{tpu_custom_call.1} parent=39 // pred_region
          %274 = dma.done [#allocation9], 16
        $region60: #{tpu_custom_call.1} parent=39 // pred_fallthru
          _
        %s275 = sand.u32 %s32, 1
        %s276 = scalar_lea.sflag [#allocation3], %s275
        %s277 = sand.u32 %s32, 1
        %s278 = smul.addr %s277, 128
        %s279 = scalar_lea.vmem [#allocation2], %s278
        %p280 = pneg %p45
        %p281 = pneg %p42
        %p282 = pneg %p66
        %p283 = pneg %p63
        %p284 = pneg %p87
        %p285 = pneg %p84
        %p286 = pneg %p108
        %p287 = pneg %p105
        %p288 = pneg %p129
        %p289 = pneg %p126
        %p290 = pneg %p155
        %p291 = pneg %p152
        %s292 = sand.u32 %s142, 1
        %s293 = scalar_lea.sflag [#allocation4], %s292
        %s294 = sand.u32 %s142, 1
        %s295 = smul.addr %s294, 128
        %s296 = scalar_lea.vmem [#allocation11], %s295
        %s297 = smul.u32 16, %s24
        %s298 = smul.u32 16, %s24
        %v300 = vld [vmem:[%s254] sm:$0xff]
        %v301 = vld [vmem:[%s254 + $0x8] sm:$0xff]
        %v302 = vld [vmem:[%s254 + $0x10] sm:$0xff]
        %v303 = vld [vmem:[%s254 + $0x18] sm:$0xff]
        %v304 = vld [vmem:[%s254 + $0x20] sm:$0xff]
        %v305 = vld [vmem:[%s254 + $0x28] sm:$0xff]
        %v306 = vld [vmem:[%s254 + $0x30] sm:$0xff]
        %v307 = vld [vmem:[%s254 + $0x38] sm:$0xff]
        %v308 = vld [vmem:[%s254 + $0x40] sm:$0xff]
        %v309 = vld [vmem:[%s254 + $0x48] sm:$0xff]
        %v310 = vld [vmem:[%s254 + $0x50] sm:$0xff]
        %v311 = vld [vmem:[%s254 + $0x58] sm:$0xff]
        %v312 = vld [vmem:[%s254 + $0x60] sm:$0xff]
        %v313 = vld [vmem:[%s254 + $0x68] sm:$0xff]
        %v314 = vld [vmem:[%s254 + $0x70] sm:$0xff]
        %v315 = vld [vmem:[%s254 + $0x78] sm:$0xff]
        %316 = vadd.xlane.f32.xlu0 %v300
        %v317 = vpop.xlane.xlu0 %316
        %318 = vadd.xlane.f32.xlu0 %v301
        %v319 = vpop.xlane.xlu0 %318
        %320 = vadd.xlane.f32.xlu0 %v302
        %v321 = vpop.xlane.xlu0 %320
        %322 = vadd.xlane.f32.xlu0 %v303
        %v323 = vpop.xlane.xlu0 %322
        %324 = vadd.xlane.f32.xlu0 %v304
        %v325 = vpop.xlane.xlu0 %324
        %326 = vadd.xlane.f32.xlu0 %v305
        %v327 = vpop.xlane.xlu0 %326
        %328 = vadd.xlane.f32.xlu0 %v306
        %v329 = vpop.xlane.xlu0 %328
        %330 = vadd.xlane.f32.xlu0 %v307
        %v331 = vpop.xlane.xlu0 %330
        %332 = vadd.xlane.f32.xlu0 %v308
        %v333 = vpop.xlane.xlu0 %332
        %334 = vadd.xlane.f32.xlu0 %v309
        %v335 = vpop.xlane.xlu0 %334
        %336 = vadd.xlane.f32.xlu0 %v310
        %v337 = vpop.xlane.xlu0 %336
        %338 = vadd.xlane.f32.xlu0 %v311
        %v339 = vpop.xlane.xlu0 %338
        %340 = vadd.xlane.f32.xlu0 %v312
        %v341 = vpop.xlane.xlu0 %340
        %342 = vadd.xlane.f32.xlu0 %v313
        %v343 = vpop.xlane.xlu0 %342
        %344 = vadd.xlane.f32.xlu0 %v314
        %v345 = vpop.xlane.xlu0 %344
        %346 = vadd.xlane.f32.xlu0 %v315
        %v347 = vpop.xlane.xlu0 %346
        %v348 = vrcp.pop 128.0
        %v349 = vmul.f32 %v317, %v348
        %v350 = vmul.f32 %v319, %v348
        %v351 = vmul.f32 %v321, %v348
        %v352 = vmul.f32 %v323, %v348
        %v353 = vmul.f32 %v325, %v348
        %v354 = vmul.f32 %v327, %v348
        %v355 = vmul.f32 %v329, %v348
        %v356 = vmul.f32 %v331, %v348
        %v357 = vmul.f32 %v333, %v348
        %v358 = vmul.f32 %v335, %v348
        %v359 = vmul.f32 %v337, %v348
        %v360 = vmul.f32 %v339, %v348
        %v361 = vmul.f32 %v341, %v348
        %v362 = vmul.f32 %v343, %v348
        %v363 = vmul.f32 %v345, %v348
        %v364 = vmul.f32 %v347, %v348
        %v365 = vsub.f32 %v300, %v349
        %v366 = vsub.f32 %v301, %v350
        %v367 = vsub.f32 %v302, %v351
        %v368 = vsub.f32 %v303, %v352
        %v369 = vsub.f32 %v304, %v353
        %v370 = vsub.f32 %v305, %v354
        %v371 = vsub.f32 %v306, %v355
        %v372 = vsub.f32 %v307, %v356
        %v373 = vsub.f32 %v308, %v357
        %v374 = vsub.f32 %v309, %v358
        %v375 = vsub.f32 %v310, %v359
        %v376 = vsub.f32 %v311, %v360
        %v377 = vsub.f32 %v312, %v361
        %v378 = vsub.f32 %v313, %v362
        %v379 = vsub.f32 %v314, %v363
        %v380 = vsub.f32 %v315, %v364
        %v381 = vmul.f32 %v365, %v365
        %v382 = vmul.f32 %v366, %v366
        %v383 = vmul.f32 %v367, %v367
        %v384 = vmul.f32 %v368, %v368
        %v385 = vmul.f32 %v369, %v369
        %v386 = vmul.f32 %v370, %v370
        %v387 = vmul.f32 %v371, %v371
        %v388 = vmul.f32 %v372, %v372
        %v389 = vmul.f32 %v373, %v373
        %v390 = vmul.f32 %v374, %v374
        %v391 = vmul.f32 %v375, %v375
        %v392 = vmul.f32 %v376, %v376
        %v393 = vmul.f32 %v377, %v377
        %v394 = vmul.f32 %v378, %v378
        %v395 = vmul.f32 %v379, %v379
        %v396 = vmul.f32 %v380, %v380
        %397 = vadd.xlane.f32.xlu0 %v381
        %v398 = vpop.xlane.xlu0 %397
        %399 = vadd.xlane.f32.xlu0 %v382
        %v400 = vpop.xlane.xlu0 %399
        %401 = vadd.xlane.f32.xlu0 %v383
        %v402 = vpop.xlane.xlu0 %401
        %403 = vadd.xlane.f32.xlu0 %v384
        %v404 = vpop.xlane.xlu0 %403
        %405 = vadd.xlane.f32.xlu0 %v385
        %v406 = vpop.xlane.xlu0 %405
        %407 = vadd.xlane.f32.xlu0 %v386
        %v408 = vpop.xlane.xlu0 %407
        %409 = vadd.xlane.f32.xlu0 %v387
        %v410 = vpop.xlane.xlu0 %409
        %411 = vadd.xlane.f32.xlu0 %v388
        %v412 = vpop.xlane.xlu0 %411
        %413 = vadd.xlane.f32.xlu0 %v389
        %v414 = vpop.xlane.xlu0 %413
        %415 = vadd.xlane.f32.xlu0 %v390
        %v416 = vpop.xlane.xlu0 %415
        %417 = vadd.xlane.f32.xlu0 %v391
        %v418 = vpop.xlane.xlu0 %417
        %419 = vadd.xlane.f32.xlu0 %v392
        %v420 = vpop.xlane.xlu0 %419
        %421 = vadd.xlane.f32.xlu0 %v393
        %v422 = vpop.xlane.xlu0 %421
        %423 = vadd.xlane.f32.xlu0 %v394
        %v424 = vpop.xlane.xlu0 %423
        %425 = vadd.xlane.f32.xlu0 %v395
        %v426 = vpop.xlane.xlu0 %425
        %427 = vadd.xlane.f32.xlu0 %v396
        %v428 = vpop.xlane.xlu0 %427
        %v429 = vmul.f32 %v398, %v348
        %v430 = vmul.f32 %v400, %v348
        %v431 = vmul.f32 %v402, %v348
        %v432 = vmul.f32 %v404, %v348
        %v433 = vmul.f32 %v406, %v348
        %v434 = vmul.f32 %v408, %v348
        %v435 = vmul.f32 %v410, %v348
        %v436 = vmul.f32 %v412, %v348
        %v437 = vmul.f32 %v414, %v348
        %v438 = vmul.f32 %v416, %v348
        %v439 = vmul.f32 %v418, %v348
        %v440 = vmul.f32 %v420, %v348
        %v441 = vmul.f32 %v422, %v348
        %v442 = vmul.f32 %v424, %v348
        %v443 = vmul.f32 %v426, %v348
        %v444 = vmul.f32 %v428, %v348
        %v445 = vadd.f32 %v429, 1e-05
        %v446 = vadd.f32 %v430, 1e-05
        %v447 = vadd.f32 %v431, 1e-05
        %v448 = vadd.f32 %v432, 1e-05
        %v449 = vadd.f32 %v433, 1e-05
        %v450 = vadd.f32 %v434, 1e-05
        %v451 = vadd.f32 %v435, 1e-05
        %v452 = vadd.f32 %v436, 1e-05
        %v453 = vadd.f32 %v437, 1e-05
        %v454 = vadd.f32 %v438, 1e-05
        %v455 = vadd.f32 %v439, 1e-05
        %v456 = vadd.f32 %v440, 1e-05
        %v457 = vadd.f32 %v441, 1e-05
        %v458 = vadd.f32 %v442, 1e-05
        %v459 = vadd.f32 %v443, 1e-05
        %v460 = vadd.f32 %v444, 1e-05
        %v461 = vrsqrt.pop %v445
        %v462 = vrsqrt.pop %v446
        %v463 = vrsqrt.pop %v447
        %v464 = vrsqrt.pop %v448
        %v465 = vrsqrt.pop %v449
        %v466 = vrsqrt.pop %v450
        %v467 = vrsqrt.pop %v451
        %v468 = vrsqrt.pop %v452
        %v469 = vrsqrt.pop %v453
        %v470 = vrsqrt.pop %v454
        %v471 = vrsqrt.pop %v455
        %v472 = vrsqrt.pop %v456
        %v473 = vrsqrt.pop %v457
        %v474 = vrsqrt.pop %v458
        %v475 = vrsqrt.pop %v459
        %v476 = vrsqrt.pop %v460
        %v477 = vmul.f32 %v365, %v461
        %v478 = vmul.f32 %v366, %v462
        %v479 = vmul.f32 %v367, %v463
        %v480 = vmul.f32 %v368, %v464
        %v481 = vmul.f32 %v369, %v465
        %v482 = vmul.f32 %v370, %v466
        %v483 = vmul.f32 %v371, %v467
        %v484 = vmul.f32 %v372, %v468
        %v485 = vmul.f32 %v373, %v469
        %v486 = vmul.f32 %v374, %v470
        %v487 = vmul.f32 %v375, %v471
        %v488 = vmul.f32 %v376, %v472
        %v489 = vmul.f32 %v377, %v473
        %v490 = vmul.f32 %v378, %v474
        %v491 = vmul.f32 %v379, %v475
        %v492 = vmul.f32 %v380, %v476
        %v493 = vpack.c.bf16 %v478, %v477
        %v494 = vpack.c.bf16 %v480, %v479
        %v495 = vpack.c.bf16 %v482, %v481
        %v496 = vpack.c.bf16 %v484, %v483
        %v497 = vpack.c.bf16 %v486, %v485
        %v498 = vpack.c.bf16 %v488, %v487
        %v499 = vpack.c.bf16 %v490, %v489
        %v500 = vpack.c.bf16 %v492, %v491
        %v501 = vld [vmem:[#allocation5] sm:$0xff]
        %v502 = vld [vmem:[#allocation5 + $0x8] sm:$0xff]
        %v503 = vld [vmem:[#allocation5 + $0x10] sm:$0xff]
        %v504 = vld [vmem:[#allocation5 + $0x18] sm:$0xff]
        %v505 = vld [vmem:[#allocation5 + $0x20] sm:$0xff]
        %v506 = vld [vmem:[#allocation5 + $0x28] sm:$0xff]
        %v507 = vld [vmem:[#allocation5 + $0x30] sm:$0xff]
        %v508 = vld [vmem:[#allocation5 + $0x38] sm:$0xff]
        %v509 = vld [vmem:[#allocation5 + $0x40] sm:$0xff]
        %v510 = vld [vmem:[#allocation5 + $0x48] sm:$0xff]
        %v511 = vld [vmem:[#allocation5 + $0x50] sm:$0xff]
        %v512 = vld [vmem:[#allocation5 + $0x58] sm:$0xff]
        %v513 = vld [vmem:[#allocation5 + $0x60] sm:$0xff]
        %v514 = vld [vmem:[#allocation5 + $0x68] sm:$0xff]
        %v515 = vld [vmem:[#allocation5 + $0x70] sm:$0xff]
        %v516 = vld [vmem:[#allocation5 + $0x78] sm:$0xff]
        %v517 = vld [vmem:[#allocation5 + $0x80] sm:$0xff]
        %v518 = vld [vmem:[#allocation5 + $0x88] sm:$0xff]
        %v519 = vld [vmem:[#allocation5 + $0x90] sm:$0xff]
        %v520 = vld [vmem:[#allocation5 + $0x98] sm:$0xff]
        %v521 = vld [vmem:[#allocation5 + $0xa0] sm:$0xff]
        %v522 = vld [vmem:[#allocation5 + $0xa8] sm:$0xff]
        %v523 = vld [vmem:[#allocation5 + $0xb0] sm:$0xff]
        %v524 = vld [vmem:[#allocation5 + $0xb8] sm:$0xff]
        %v525 = vld [vmem:[#allocation5 + $0xc0] sm:$0xff]
        %v526 = vld [vmem:[#allocation5 + $0xc8] sm:$0xff]
        %v527 = vld [vmem:[#allocation5 + $0xd0] sm:$0xff]
        %v528 = vld [vmem:[#allocation5 + $0xd8] sm:$0xff]
        %v529 = vld [vmem:[#allocation5 + $0xe0] sm:$0xff]
        %v530 = vld [vmem:[#allocation5 + $0xe8] sm:$0xff]
        %v531 = vld [vmem:[#allocation5 + $0xf0] sm:$0xff]
        %v532 = vld [vmem:[#allocation5 + $0xf8] sm:$0xff]
        %v533 = vld [vmem:[#allocation7] sm:$0xf]
        %v535 = vlaneseq
        %v536 = vshrl.u32 %v535, 7
        %v537 = vsub.s32 0, %v536
        %v538 = vrot.slane %v533, %v537
        %v539 = vlaneseq
        %v540 = vshrl.u32 %v539, 7
        %v541 = vsub.s32 1, %v540
        %v542 = vrot.slane %v533, %v541
        %v543 = vlaneseq
        %v544 = vshrl.u32 %v543, 7
        %v545 = vsub.s32 2, %v544
        %v546 = vrot.slane %v533, %v545
        %v547 = vlaneseq
        %v548 = vshrl.u32 %v547, 7
        %v549 = vsub.s32 3, %v548
        %v550 = vrot.slane %v533, %v549
        %v587 = vunpack.c.l.b16 %v501
        %v588 = vunpack.c.h.b16 %v501
        %v589 = vunpack.c.l.b16 %v502
        %v590 = vunpack.c.h.b16 %v502
        %v591 = vunpack.c.l.b16 %v503
        %v592 = vunpack.c.h.b16 %v503
        %v593 = vunpack.c.l.b16 %v504
        %v594 = vunpack.c.h.b16 %v504
        %v595 = vunpack.c.l.b16 %v505
        %v596 = vunpack.c.h.b16 %v505
        %v597 = vunpack.c.l.b16 %v506
        %v598 = vunpack.c.h.b16 %v506
        %v599 = vunpack.c.l.b16 %v507
        %v600 = vunpack.c.h.b16 %v507
        %v601 = vunpack.c.l.b16 %v508
        %v602 = vunpack.c.h.b16 %v508
        %v603 = vunpack.c.l.b16 %v509
        %v604 = vunpack.c.h.b16 %v509
        %v605 = vunpack.c.l.b16 %v510
        %v606 = vunpack.c.h.b16 %v510
        %v607 = vunpack.c.l.b16 %v511
        %v608 = vunpack.c.h.b16 %v511
        %v609 = vunpack.c.l.b16 %v512
        %v610 = vunpack.c.h.b16 %v512
        %v611 = vunpack.c.l.b16 %v513
        %v612 = vunpack.c.h.b16 %v513
        %v613 = vunpack.c.l.b16 %v514
        %v614 = vunpack.c.h.b16 %v514
        %v615 = vunpack.c.l.b16 %v515
        %v616 = vunpack.c.h.b16 %v515
        %v617 = vunpack.c.l.b16 %v516
        %v618 = vunpack.c.h.b16 %v516
        %v619 = vunpack.c.l.b16 %v517
        %v620 = vunpack.c.h.b16 %v517
        %v621 = vunpack.c.l.b16 %v518
        %v622 = vunpack.c.h.b16 %v518
        %v623 = vunpack.c.l.b16 %v519
        %v624 = vunpack.c.h.b16 %v519
        %v625 = vunpack.c.l.b16 %v520
        %v626 = vunpack.c.h.b16 %v520
        %v627 = vunpack.c.l.b16 %v521
        %v628 = vunpack.c.h.b16 %v521
        %v629 = vunpack.c.l.b16 %v522
        %v630 = vunpack.c.h.b16 %v522
        %v631 = vunpack.c.l.b16 %v523
        %v632 = vunpack.c.h.b16 %v523
        %v633 = vunpack.c.l.b16 %v524
        %v634 = vunpack.c.h.b16 %v524
        %v635 = vunpack.c.l.b16 %v525
        %v636 = vunpack.c.h.b16 %v525
        %v637 = vunpack.c.l.b16 %v526
        %v638 = vunpack.c.h.b16 %v526
        %v639 = vunpack.c.l.b16 %v527
        %v640 = vunpack.c.h.b16 %v527
        %v641 = vunpack.c.l.b16 %v528
        %v642 = vunpack.c.h.b16 %v528
        %v643 = vunpack.c.l.b16 %v529
        %v644 = vunpack.c.h.b16 %v529
        %v645 = vunpack.c.l.b16 %v530
        %v646 = vunpack.c.h.b16 %v530
        %v647 = vunpack.c.l.b16 %v531
        %v648 = vunpack.c.h.b16 %v531
        %v649 = vunpack.c.l.b16 %v532
        %v650 = vunpack.c.h.b16 %v532
        %v651 = vpack.c.b16 %v591, %v587
        %v652 = vpack.c.b16 %v592, %v588
        %v653 = vpack.c.b16 %v593, %v589
        %v654 = vpack.c.b16 %v594, %v590
        %v655 = vpack.c.b16 %v599, %v595
        %v656 = vpack.c.b16 %v600, %v596
        %v657 = vpack.c.b16 %v601, %v597
        %v658 = vpack.c.b16 %v602, %v598
        %v659 = vpack.c.b16 %v607, %v603
        %v660 = vpack.c.b16 %v608, %v604
        %v661 = vpack.c.b16 %v609, %v605
        %v662 = vpack.c.b16 %v610, %v606
        %v663 = vpack.c.b16 %v615, %v611
        %v664 = vpack.c.b16 %v616, %v612
        %v665 = vpack.c.b16 %v617, %v613
        %v666 = vpack.c.b16 %v618, %v614
        %v667 = vpack.c.b16 %v623, %v619
        %v668 = vpack.c.b16 %v624, %v620
        %v669 = vpack.c.b16 %v625, %v621
        %v670 = vpack.c.b16 %v626, %v622
        %v671 = vpack.c.b16 %v631, %v627
        %v672 = vpack.c.b16 %v632, %v628
        %v673 = vpack.c.b16 %v633, %v629
        %v674 = vpack.c.b16 %v634, %v630
        %v675 = vpack.c.b16 %v639, %v635
        %v676 = vpack.c.b16 %v640, %v636
        %v677 = vpack.c.b16 %v641, %v637
        %v678 = vpack.c.b16 %v642, %v638
        %v679 = vpack.c.b16 %v647, %v643
        %v680 = vpack.c.b16 %v648, %v644
        %v681 = vpack.c.b16 %v649, %v645
        %v682 = vpack.c.b16 %v650, %v646
        %715 = vmatprep.subr.bf16.mxu0 %v652
        %716 = vmatpush1.bf16.msra.mxu0 %v651
        %717 = vmatprep.subr.bf16.mxu0 %v656
        %718 = vmatpush1.bf16.msra.mxu0 %v655
        %719 = vmatprep.subr.bf16.mxu0 %v660
        %720 = vmatpush1.bf16.msra.mxu0 %v659
        %721 = vmatprep.subr.bf16.mxu0 %v664
        %722 = vmatpush1.bf16.msra.mxu0 %v663
        %723 = vmatprep.subr.bf16.mxu0 %v668
        %724 = vmatpush1.bf16.msra.mxu0 %v667
        %725 = vmatprep.subr.bf16.mxu0 %v672
        %726 = vmatpush1.bf16.msra.mxu0 %v671
        %727 = vmatprep.subr.bf16.mxu0 %v676
        %728 = vmatpush1.bf16.msra.mxu0 %v675
        %729 = vmatprep.subr.bf16.mxu0 %v680
        %730 = vmatpush1.bf16.msra.mxu0 %v679
        %731 = vmatprep.subr.bf16.mxu0 0
        %732 = vmatpush1.bf16.msra.mxu0 0
        %733 = vmatprep.subr.bf16.mxu0 0
        %734 = vmatpush1.bf16.msra.mxu0 0
        %735 = vmatprep.subr.bf16.mxu0 0
        %736 = vmatpush1.bf16.msra.mxu0 0
        %737 = vmatprep.subr.bf16.mxu0 0
        %738 = vmatpush1.bf16.msra.mxu0 0
        %739 = vmatprep.subr.bf16.mxu0 0
        %740 = vmatpush1.bf16.msra.mxu0 0
        %741 = vmatprep.subr.bf16.mxu0 0
        %742 = vmatpush1.bf16.msra.mxu0 0
        %743 = vmatprep.subr.bf16.mxu0 0
        %744 = vmatpush1.bf16.msra.mxu0 0
        %745 = vmatprep.subr.bf16.mxu0 0
        %746 = vmatpush1.bf16.msra.mxu0 0
        %747 = vmatprep.mubr.bf16.mxu0 0
        %748 = vmatmul.mubr.bf16.gmra.mrb[0].mxu0 %v493
        %v749 = vpop.f32.mrb[0].mxu0
        %v750 = vadd.f32 %v538, %v749
        %v751 = vpop.f32.mrb[0].mxu0
        %v752 = vadd.f32 %v542, %v751
        %v753 = vpop.f32.mrb[0].mxu0
        %v754 = vadd.f32 %v538, %v753
        %v755 = vpop.f32.mrb[0].mxu0
        %v756 = vadd.f32 %v542, %v755
        %757 = vmatprep.mubr.bf16.mxu0 0
        %758 = vmatmul.mubr.bf16.gmra.mrb[0].mxu0 %v494
        %v759 = vpop.f32.mrb[0].mxu0
        %v760 = vadd.f32 %v538, %v759
        %v761 = vpop.f32.mrb[0].mxu0
        %v762 = vadd.f32 %v542, %v761
        %v763 = vpop.f32.mrb[0].mxu0
        %v764 = vadd.f32 %v538, %v763
        %v765 = vpop.f32.mrb[0].mxu0
        %v766 = vadd.f32 %v542, %v765
        %767 = vmatprep.mubr.bf16.mxu0 0
        %768 = vmatmul.mubr.bf16.gmra.mrb[0].mxu0 %v495
        %v769 = vpop.f32.mrb[0].mxu0
        %v770 = vadd.f32 %v538, %v769
        %v771 = vpop.f32.mrb[0].mxu0
        %v772 = vadd.f32 %v542, %v771
        %v773 = vpop.f32.mrb[0].mxu0
        %v774 = vadd.f32 %v538, %v773
        %v775 = vpop.f32.mrb[0].mxu0
        %v776 = vadd.f32 %v542, %v775
        %777 = vmatprep.mubr.bf16.mxu0 0
        %778 = vmatmul.mubr.bf16.gmra.mrb[0].mxu0 %v496
        %v779 = vpop.f32.mrb[0].mxu0
        %v780 = vadd.f32 %v538, %v779
        %v781 = vpop.f32.mrb[0].mxu0
        %v782 = vadd.f32 %v542, %v781
        %v783 = vpop.f32.mrb[0].mxu0
        %v784 = vadd.f32 %v538, %v783
        %v785 = vpop.f32.mrb[0].mxu0
        %v786 = vadd.f32 %v542, %v785
        %787 = vmatprep.mubr.bf16.mxu0 0
        %788 = vmatmul.mubr.bf16.gmra.mrb[0].mxu0 %v497
        %v789 = vpop.f32.mrb[0].mxu0
        %v790 = vadd.f32 %v538, %v789
        %v791 = vpop.f32.mrb[0].mxu0
        %v792 = vadd.f32 %v542, %v791
        %v793 = vpop.f32.mrb[0].mxu0
        %v794 = vadd.f32 %v538, %v793
        %v795 = vpop.f32.mrb[0].mxu0
        %v796 = vadd.f32 %v542, %v795
        %797 = vmatprep.mubr.bf16.mxu0 0
        %798 = vmatmul.mubr.bf16.gmra.mrb[0].mxu0 %v498
        %v799 = vpop.f32.mrb[0].mxu0
        %v800 = vadd.f32 %v538, %v799
        %v801 = vpop.f32.mrb[0].mxu0
        %v802 = vadd.f32 %v542, %v801
        %v803 = vpop.f32.mrb[0].mxu0
        %v804 = vadd.f32 %v538, %v803
        %v805 = vpop.f32.mrb[0].mxu0
        %v806 = vadd.f32 %v542, %v805
        %807 = vmatprep.mubr.bf16.mxu0 0
        %808 = vmatmul.mubr.bf16.gmra.mrb[0].mxu0 %v499
        %v809 = vpop.f32.mrb[0].mxu0
        %v810 = vadd.f32 %v538, %v809
        %v811 = vpop.f32.mrb[0].mxu0
        %v812 = vadd.f32 %v542, %v811
        %v813 = vpop.f32.mrb[0].mxu0
        %v814 = vadd.f32 %v538, %v813
        %v815 = vpop.f32.mrb[0].mxu0
        %v816 = vadd.f32 %v542, %v815
        %817 = vmatprep.mubr.bf16.mxu0 0
        %818 = vmatmul.mubr.bf16.gmra.mrb[0].mxu0 %v500
        %v819 = vpop.f32.mrb[0].mxu0
        %v820 = vadd.f32 %v538, %v819
        %v821 = vpop.f32.mrb[0].mxu0
        %v822 = vadd.f32 %v542, %v821
        %v823 = vpop.f32.mrb[0].mxu0
        %v824 = vadd.f32 %v538, %v823
        %v825 = vpop.f32.mrb[0].mxu0
        %v826 = vadd.f32 %v542, %v825
        %827 = vdwg.mxu0
        %828 = vmatprep.subr.bf16.mxu0 %v654
        %829 = vmatpush1.bf16.msra.mxu0 %v653
        %830 = vmatprep.subr.bf16.mxu0 %v658
        %831 = vmatpush1.bf16.msra.mxu0 %v657
        %832 = vmatprep.subr.bf16.mxu0 %v662
        %833 = vmatpush1.bf16.msra.mxu0 %v661
        %834 = vmatprep.subr.bf16.mxu0 %v666
        %835 = vmatpush1.bf16.msra.mxu0 %v665
        %836 = vmatprep.subr.bf16.mxu0 %v670
        %837 = vmatpush1.bf16.msra.mxu0 %v669
        %838 = vmatprep.subr.bf16.mxu0 %v674
        %839 = vmatpush1.bf16.msra.mxu0 %v673
        %840 = vmatprep.subr.bf16.mxu0 %v678
        %841 = vmatpush1.bf16.msra.mxu0 %v677
        %842 = vmatprep.subr.bf16.mxu0 %v682
        %843 = vmatpush1.bf16.msra.mxu0 %v681
        %844 = vmatprep.subr.bf16.mxu0 0
        %845 = vmatpush1.bf16.msra.mxu0 0
        %846 = vmatprep.subr.bf16.mxu0 0
        %847 = vmatpush1.bf16.msra.mxu0 0
        %848 = vmatprep.subr.bf16.mxu0 0
        %849 = vmatpush1.bf16.msra.mxu0 0
        %850 = vmatprep.subr.bf16.mxu0 0
        %851 = vmatpush1.bf16.msra.mxu0 0
        %852 = vmatprep.subr.bf16.mxu0 0
        %853 = vmatpush1.bf16.msra.mxu0 0
        %854 = vmatprep.subr.bf16.mxu0 0
        %855 = vmatpush1.bf16.msra.mxu0 0
        %856 = vmatprep.subr.bf16.mxu0 0
        %857 = vmatpush1.bf16.msra.mxu0 0
        %858 = vmatprep.subr.bf16.mxu0 0
        %859 = vmatpush1.bf16.msra.mxu0 0
        %860 = vmatprep.mubr.bf16.mxu0 0
        %861 = vmatmul.mubr.bf16.gmra.mrb[0].mxu0 %v493
        %v862 = vpop.f32.mrb[0].mxu0
        %v863 = vadd.f32 %v546, %v862
        %v864 = vpop.f32.mrb[0].mxu0
        %v865 = vadd.f32 %v550, %v864
        %v866 = vpop.f32.mrb[0].mxu0
        %v867 = vadd.f32 %v546, %v866
        %v868 = vpop.f32.mrb[0].mxu0
        %v869 = vadd.f32 %v550, %v868
        %870 = vmatprep.mubr.bf16.mxu0 0
        %871 = vmatmul.mubr.bf16.gmra.mrb[0].mxu0 %v494
        %v872 = vpop.f32.mrb[0].mxu0
        %v873 = vadd.f32 %v546, %v872
        %v874 = vpop.f32.mrb[0].mxu0
        %v875 = vadd.f32 %v550, %v874
        %v876 = vpop.f32.mrb[0].mxu0
        %v877 = vadd.f32 %v546, %v876
        %v878 = vpop.f32.mrb[0].mxu0
        %v879 = vadd.f32 %v550, %v878
        %880 = vmatprep.mubr.bf16.mxu0 0
        %881 = vmatmul.mubr.bf16.gmra.mrb[0].mxu0 %v495
        %v882 = vpop.f32.mrb[0].mxu0
        %v883 = vadd.f32 %v546, %v882
        %v884 = vpop.f32.mrb[0].mxu0
        %v885 = vadd.f32 %v550, %v884
        %v886 = vpop.f32.mrb[0].mxu0
        %v887 = vadd.f32 %v546, %v886
        %v888 = vpop.f32.mrb[0].mxu0
        %v889 = vadd.f32 %v550, %v888
        %890 = vmatprep.mubr.bf16.mxu0 0
        %891 = vmatmul.mubr.bf16.gmra.mrb[0].mxu0 %v496
        %v892 = vpop.f32.mrb[0].mxu0
        %v893 = vadd.f32 %v546, %v892
        %v894 = vpop.f32.mrb[0].mxu0
        %v895 = vadd.f32 %v550, %v894
        %v896 = vpop.f32.mrb[0].mxu0
        %v897 = vadd.f32 %v546, %v896
        %v898 = vpop.f32.mrb[0].mxu0
        %v899 = vadd.f32 %v550, %v898
        %900 = vmatprep.mubr.bf16.mxu0 0
        %901 = vmatmul.mubr.bf16.gmra.mrb[0].mxu0 %v497
        %v902 = vpop.f32.mrb[0].mxu0
        %v903 = vadd.f32 %v546, %v902
        %v904 = vpop.f32.mrb[0].mxu0
        %v905 = vadd.f32 %v550, %v904
        %v906 = vpop.f32.mrb[0].mxu0
        %v907 = vadd.f32 %v546, %v906
        %v908 = vpop.f32.mrb[0].mxu0
        %v909 = vadd.f32 %v550, %v908
        %910 = vmatprep.mubr.bf16.mxu0 0
        %911 = vmatmul.mubr.bf16.gmra.mrb[0].mxu0 %v498
        %v912 = vpop.f32.mrb[0].mxu0
        %v913 = vadd.f32 %v546, %v912
        %v914 = vpop.f32.mrb[0].mxu0
        %v915 = vadd.f32 %v550, %v914
        %v916 = vpop.f32.mrb[0].mxu0
        %v917 = vadd.f32 %v546, %v916
        %v918 = vpop.f32.mrb[0].mxu0
        %v919 = vadd.f32 %v550, %v918
        %920 = vmatprep.mubr.bf16.mxu0 0
        %921 = vmatmul.mubr.bf16.gmra.mrb[0].mxu0 %v499
        %v922 = vpop.f32.mrb[0].mxu0
        %v923 = vadd.f32 %v546, %v922
        %v924 = vpop.f32.mrb[0].mxu0
        %v925 = vadd.f32 %v550, %v924
        %v926 = vpop.f32.mrb[0].mxu0
        %v927 = vadd.f32 %v546, %v926
        %v928 = vpop.f32.mrb[0].mxu0
        %v929 = vadd.f32 %v550, %v928
        %930 = vmatprep.mubr.bf16.mxu0 0
        %931 = vmatmul.mubr.bf16.gmra.mrb[0].mxu0 %v500
        %v932 = vpop.f32.mrb[0].mxu0
        %v933 = vadd.f32 %v546, %v932
        %v934 = vpop.f32.mrb[0].mxu0
        %v935 = vadd.f32 %v550, %v934
        %v936 = vpop.f32.mrb[0].mxu0
        %v937 = vadd.f32 %v546, %v936
        %v938 = vpop.f32.mrb[0].mxu0
        %v939 = vadd.f32 %v550, %v938
        %940 = vdwg.mxu0
        %v941 = vsub.f32 0.0, %v750
        %v942 = vsub.f32 0.0, %v752
        %v943 = vsub.f32 0.0, %v863
        %v944 = vsub.f32 0.0, %v865
        %v945 = vsub.f32 0.0, %v754
        %v946 = vsub.f32 0.0, %v756
        %v947 = vsub.f32 0.0, %v867
        %v948 = vsub.f32 0.0, %v869
        %v949 = vsub.f32 0.0, %v760
        %v950 = vsub.f32 0.0, %v762
        %v951 = vsub.f32 0.0, %v873
        %v952 = vsub.f32 0.0, %v875
        %v953 = vsub.f32 0.0, %v764
        %v954 = vsub.f32 0.0, %v766
        %v955 = vsub.f32 0.0, %v877
        %v956 = vsub.f32 0.0, %v879
        %v957 = vsub.f32 0.0, %v770
        %v958 = vsub.f32 0.0, %v772
        %v959 = vsub.f32 0.0, %v883
        %v960 = vsub.f32 0.0, %v885
        %v961 = vsub.f32 0.0, %v774
        %v962 = vsub.f32 0.0, %v776
        %v963 = vsub.f32 0.0, %v887
        %v964 = vsub.f32 0.0, %v889
        %v965 = vsub.f32 0.0, %v780
        %v966 = vsub.f32 0.0, %v782
        %v967 = vsub.f32 0.0, %v893
        %v968 = vsub.f32 0.0, %v895
        %v969 = vsub.f32 0.0, %v784
        %v970 = vsub.f32 0.0, %v786
        %v971 = vsub.f32 0.0, %v897
        %v972 = vsub.f32 0.0, %v899
        %v973 = vsub.f32 0.0, %v790
        %v974 = vsub.f32 0.0, %v792
        %v975 = vsub.f32 0.0, %v903
        %v976 = vsub.f32 0.0, %v905
        %v977 = vsub.f32 0.0, %v794
        %v978 = vsub.f32 0.0, %v796
        %v979 = vsub.f32 0.0, %v907
        %v980 = vsub.f32 0.0, %v909
        %v981 = vsub.f32 0.0, %v800
        %v982 = vsub.f32 0.0, %v802
        %v983 = vsub.f32 0.0, %v913
        %v984 = vsub.f32 0.0, %v915
        %v985 = vsub.f32 0.0, %v804
        %v986 = vsub.f32 0.0, %v806
        %v987 = vsub.f32 0.0, %v917
        %v988 = vsub.f32 0.0, %v919
        %v989 = vsub.f32 0.0, %v810
        %v990 = vsub.f32 0.0, %v812
        %v991 = vsub.f32 0.0, %v923
        %v992 = vsub.f32 0.0, %v925
        %v993 = vsub.f32 0.0, %v814
        %v994 = vsub.f32 0.0, %v816
        %v995 = vsub.f32 0.0, %v927
        %v996 = vsub.f32 0.0, %v929
        %v997 = vsub.f32 0.0, %v820
        %v998 = vsub.f32 0.0, %v822
        %v999 = vsub.f32 0.0, %v933
        %v1000 = vsub.f32 0.0, %v935
        %v1001 = vsub.f32 0.0, %v824
        %v1002 = vsub.f32 0.0, %v826
        %v1003 = vsub.f32 0.0, %v937
        %v1004 = vsub.f32 0.0, %v939
        %v1005 = vmul.f32 %v941, 1.442695
        %v1006 = vpow.pop %v1005
        %v1007 = vmul.f32 %v942, 1.442695
        %v1008 = vpow.pop %v1007
        %v1009 = vmul.f32 %v943, 1.442695
        %v1010 = vpow.pop %v1009
        %v1011 = vmul.f32 %v944, 1.442695
        %v1012 = vpow.pop %v1011
        %v1013 = vmul.f32 %v945, 1.442695
        %v1014 = vpow.pop %v1013
        %v1015 = vmul.f32 %v946, 1.442695
        %v1016 = vpow.pop %v1015
        %v1017 = vmul.f32 %v947, 1.442695
        %v1018 = vpow.pop %v1017
        %v1019 = vmul.f32 %v948, 1.442695
        %v1020 = vpow.pop %v1019
        %v1021 = vmul.f32 %v949, 1.442695
        %v1022 = vpow.pop %v1021
        %v1023 = vmul.f32 %v950, 1.442695
        %v1024 = vpow.pop %v1023
        %v1025 = vmul.f32 %v951, 1.442695
        %v1026 = vpow.pop %v1025
        %v1027 = vmul.f32 %v952, 1.442695
        %v1028 = vpow.pop %v1027
        %v1029 = vmul.f32 %v953, 1.442695
        %v1030 = vpow.pop %v1029
        %v1031 = vmul.f32 %v954, 1.442695
        %v1032 = vpow.pop %v1031
        %v1033 = vmul.f32 %v955, 1.442695
        %v1034 = vpow.pop %v1033
        %v1035 = vmul.f32 %v956, 1.442695
        %v1036 = vpow.pop %v1035
        %v1037 = vmul.f32 %v957, 1.442695
        %v1038 = vpow.pop %v1037
        %v1039 = vmul.f32 %v958, 1.442695
        %v1040 = vpow.pop %v1039
        %v1041 = vmul.f32 %v959, 1.442695
        %v1042 = vpow.pop %v1041
        %v1043 = vmul.f32 %v960, 1.442695
        %v1044 = vpow.pop %v1043
        %v1045 = vmul.f32 %v961, 1.442695
        %v1046 = vpow.pop %v1045
        %v1047 = vmul.f32 %v962, 1.442695
        %v1048 = vpow.pop %v1047
        %v1049 = vmul.f32 %v963, 1.442695
        %v1050 = vpow.pop %v1049
        %v1051 = vmul.f32 %v964, 1.442695
        %v1052 = vpow.pop %v1051
        %v1053 = vmul.f32 %v965, 1.442695
        %v1054 = vpow.pop %v1053
        %v1055 = vmul.f32 %v966, 1.442695
        %v1056 = vpow.pop %v1055
        %v1057 = vmul.f32 %v967, 1.442695
        %v1058 = vpow.pop %v1057
        %v1059 = vmul.f32 %v968, 1.442695
        %v1060 = vpow.pop %v1059
        %v1061 = vmul.f32 %v969, 1.442695
        %v1062 = vpow.pop %v1061
        %v1063 = vmul.f32 %v970, 1.442695
        %v1064 = vpow.pop %v1063
        %v1065 = vmul.f32 %v971, 1.442695
        %v1066 = vpow.pop %v1065
        %v1067 = vmul.f32 %v972, 1.442695
        %v1068 = vpow.pop %v1067
        %v1069 = vmul.f32 %v973, 1.442695
        %v1070 = vpow.pop %v1069
        %v1071 = vmul.f32 %v974, 1.442695
        %v1072 = vpow.pop %v1071
        %v1073 = vmul.f32 %v975, 1.442695
        %v1074 = vpow.pop %v1073
        %v1075 = vmul.f32 %v976, 1.442695
        %v1076 = vpow.pop %v1075
        %v1077 = vmul.f32 %v977, 1.442695
        %v1078 = vpow.pop %v1077
        %v1079 = vmul.f32 %v978, 1.442695
        %v1080 = vpow.pop %v1079
        %v1081 = vmul.f32 %v979, 1.442695
        %v1082 = vpow.pop %v1081
        %v1083 = vmul.f32 %v980, 1.442695
        %v1084 = vpow.pop %v1083
        %v1085 = vmul.f32 %v981, 1.442695
        %v1086 = vpow.pop %v1085
        %v1087 = vmul.f32 %v982, 1.442695
        %v1088 = vpow.pop %v1087
        %v1089 = vmul.f32 %v983, 1.442695
        %v1090 = vpow.pop %v1089
        %v1091 = vmul.f32 %v984, 1.442695
        %v1092 = vpow.pop %v1091
        %v1093 = vmul.f32 %v985, 1.442695
        %v1094 = vpow.pop %v1093
        %v1095 = vmul.f32 %v986, 1.442695
        %v1096 = vpow.pop %v1095
        %v1097 = vmul.f32 %v987, 1.442695
        %v1098 = vpow.pop %v1097
        %v1099 = vmul.f32 %v988, 1.442695
        %v1100 = vpow.pop %v1099
        %v1101 = vmul.f32 %v989, 1.442695
        %v1102 = vpow.pop %v1101
        %v1103 = vmul.f32 %v990, 1.442695
        %v1104 = vpow.pop %v1103
        %v1105 = vmul.f32 %v991, 1.442695
        %v1106 = vpow.pop %v1105
        %v1107 = vmul.f32 %v992, 1.442695
        %v1108 = vpow.pop %v1107
        %v1109 = vmul.f32 %v993, 1.442695
        %v1110 = vpow.pop %v1109
        %v1111 = vmul.f32 %v994, 1.442695
        %v1112 = vpow.pop %v1111
        %v1113 = vmul.f32 %v995, 1.442695
        %v1114 = vpow.pop %v1113
        %v1115 = vmul.f32 %v996, 1.442695
        %v1116 = vpow.pop %v1115
        %v1117 = vmul.f32 %v997, 1.442695
        %v1118 = vpow.pop %v1117
        %v1119 = vmul.f32 %v998, 1.442695
        %v1120 = vpow.pop %v1119
        %v1121 = vmul.f32 %v999, 1.442695
        %v1122 = vpow.pop %v1121
        %v1123 = vmul.f32 %v1000, 1.442695
        %v1124 = vpow.pop %v1123
        %v1125 = vmul.f32 %v1001, 1.442695
        %v1126 = vpow.pop %v1125
        %v1127 = vmul.f32 %v1002, 1.442695
        %v1128 = vpow.pop %v1127
        %v1129 = vmul.f32 %v1003, 1.442695
        %v1130 = vpow.pop %v1129
        %v1131 = vmul.f32 %v1004, 1.442695
        %v1132 = vpow.pop %v1131
        %v1133 = vadd.f32 %v1006, 1.0
        %v1134 = vadd.f32 %v1008, 1.0
        %v1135 = vadd.f32 %v1010, 1.0
        %v1136 = vadd.f32 %v1012, 1.0
        %v1137 = vadd.f32 %v1014, 1.0
        %v1138 = vadd.f32 %v1016, 1.0
        %v1139 = vadd.f32 %v1018, 1.0
        %v1140 = vadd.f32 %v1020, 1.0
        %v1141 = vadd.f32 %v1022, 1.0
        %v1142 = vadd.f32 %v1024, 1.0
        %v1143 = vadd.f32 %v1026, 1.0
        %v1144 = vadd.f32 %v1028, 1.0
        %v1145 = vadd.f32 %v1030, 1.0
        %v1146 = vadd.f32 %v1032, 1.0
        %v1147 = vadd.f32 %v1034, 1.0
        %v1148 = vadd.f32 %v1036, 1.0
        %v1149 = vadd.f32 %v1038, 1.0
        %v1150 = vadd.f32 %v1040, 1.0
        %v1151 = vadd.f32 %v1042, 1.0
        %v1152 = vadd.f32 %v1044, 1.0
        %v1153 = vadd.f32 %v1046, 1.0
        %v1154 = vadd.f32 %v1048, 1.0
        %v1155 = vadd.f32 %v1050, 1.0
        %v1156 = vadd.f32 %v1052, 1.0
        %v1157 = vadd.f32 %v1054, 1.0
        %v1158 = vadd.f32 %v1056, 1.0
        %v1159 = vadd.f32 %v1058, 1.0
        %v1160 = vadd.f32 %v1060, 1.0
        %v1161 = vadd.f32 %v1062, 1.0
        %v1162 = vadd.f32 %v1064, 1.0
        %v1163 = vadd.f32 %v1066, 1.0
        %v1164 = vadd.f32 %v1068, 1.0
        %v1165 = vadd.f32 %v1070, 1.0
        %v1166 = vadd.f32 %v1072, 1.0
        %v1167 = vadd.f32 %v1074, 1.0
        %v1168 = vadd.f32 %v1076, 1.0
        %v1169 = vadd.f32 %v1078, 1.0
        %v1170 = vadd.f32 %v1080, 1.0
        %v1171 = vadd.f32 %v1082, 1.0
        %v1172 = vadd.f32 %v1084, 1.0
        %v1173 = vadd.f32 %v1086, 1.0
        %v1174 = vadd.f32 %v1088, 1.0
        %v1175 = vadd.f32 %v1090, 1.0
        %v1176 = vadd.f32 %v1092, 1.0
        %v1177 = vadd.f32 %v1094, 1.0
        %v1178 = vadd.f32 %v1096, 1.0
        %v1179 = vadd.f32 %v1098, 1.0
        %v1180 = vadd.f32 %v1100, 1.0
        %v1181 = vadd.f32 %v1102, 1.0
        %v1182 = vadd.f32 %v1104, 1.0
        %v1183 = vadd.f32 %v1106, 1.0
        %v1184 = vadd.f32 %v1108, 1.0
        %v1185 = vadd.f32 %v1110, 1.0
        %v1186 = vadd.f32 %v1112, 1.0
        %v1187 = vadd.f32 %v1114, 1.0
        %v1188 = vadd.f32 %v1116, 1.0
        %v1189 = vadd.f32 %v1118, 1.0
        %v1190 = vadd.f32 %v1120, 1.0
        %v1191 = vadd.f32 %v1122, 1.0
        %v1192 = vadd.f32 %v1124, 1.0
        %v1193 = vadd.f32 %v1126, 1.0
        %v1194 = vadd.f32 %v1128, 1.0
        %v1195 = vadd.f32 %v1130, 1.0
        %v1196 = vadd.f32 %v1132, 1.0
        %v1197 = vrcp.pop %v1133
        %v1198 = vrcp.pop %v1134
        %v1199 = vrcp.pop %v1135
        %v1200 = vrcp.pop %v1136
        %v1201 = vrcp.pop %v1137
        %v1202 = vrcp.pop %v1138
        %v1203 = vrcp.pop %v1139
        %v1204 = vrcp.pop %v1140
        %v1205 = vrcp.pop %v1141
        %v1206 = vrcp.pop %v1142
        %v1207 = vrcp.pop %v1143
        %v1208 = vrcp.pop %v1144
        %v1209 = vrcp.pop %v1145
        %v1210 = vrcp.pop %v1146
        %v1211 = vrcp.pop %v1147
        %v1212 = vrcp.pop %v1148
        %v1213 = vrcp.pop %v1149
        %v1214 = vrcp.pop %v1150
        %v1215 = vrcp.pop %v1151
        %v1216 = vrcp.pop %v1152
        %v1217 = vrcp.pop %v1153
        %v1218 = vrcp.pop %v1154
        %v1219 = vrcp.pop %v1155
        %v1220 = vrcp.pop %v1156
        %v1221 = vrcp.pop %v1157
        %v1222 = vrcp.pop %v1158
        %v1223 = vrcp.pop %v1159
        %v1224 = vrcp.pop %v1160
        %v1225 = vrcp.pop %v1161
        %v1226 = vrcp.pop %v1162
        %v1227 = vrcp.pop %v1163
        %v1228 = vrcp.pop %v1164
        %v1229 = vrcp.pop %v1165
        %v1230 = vrcp.pop %v1166
        %v1231 = vrcp.pop %v1167
        %v1232 = vrcp.pop %v1168
        %v1233 = vrcp.pop %v1169
        %v1234 = vrcp.pop %v1170
        %v1235 = vrcp.pop %v1171
        %v1236 = vrcp.pop %v1172
        %v1237 = vrcp.pop %v1173
        %v1238 = vrcp.pop %v1174
        %v1239 = vrcp.pop %v1175
        %v1240 = vrcp.pop %v1176
        %v1241 = vrcp.pop %v1177
        %v1242 = vrcp.pop %v1178
        %v1243 = vrcp.pop %v1179
        %v1244 = vrcp.pop %v1180
        %v1245 = vrcp.pop %v1181
        %v1246 = vrcp.pop %v1182
        %v1247 = vrcp.pop %v1183
        %v1248 = vrcp.pop %v1184
        %v1249 = vrcp.pop %v1185
        %v1250 = vrcp.pop %v1186
        %v1251 = vrcp.pop %v1187
        %v1252 = vrcp.pop %v1188
        %v1253 = vrcp.pop %v1189
        %v1254 = vrcp.pop %v1190
        %v1255 = vrcp.pop %v1191
        %v1256 = vrcp.pop %v1192
        %v1257 = vrcp.pop %v1193
        %v1258 = vrcp.pop %v1194
        %v1259 = vrcp.pop %v1195
        %v1260 = vrcp.pop %v1196
        %v1261 = vmul.f32 %v750, %v1197
        %v1262 = vmul.f32 %v752, %v1198
        %v1263 = vmul.f32 %v863, %v1199
        %v1264 = vmul.f32 %v865, %v1200
        %v1265 = vmul.f32 %v754, %v1201
        %v1266 = vmul.f32 %v756, %v1202
        %v1267 = vmul.f32 %v867, %v1203
        %v1268 = vmul.f32 %v869, %v1204
        %v1269 = vmul.f32 %v760, %v1205
        %v1270 = vmul.f32 %v762, %v1206
        %v1271 = vmul.f32 %v873, %v1207
        %v1272 = vmul.f32 %v875, %v1208
        %v1273 = vmul.f32 %v764, %v1209
        %v1274 = vmul.f32 %v766, %v1210
        %v1275 = vmul.f32 %v877, %v1211
        %v1276 = vmul.f32 %v879, %v1212
        %v1277 = vmul.f32 %v770, %v1213
        %v1278 = vmul.f32 %v772, %v1214
        %v1279 = vmul.f32 %v883, %v1215
        %v1280 = vmul.f32 %v885, %v1216
        %v1281 = vmul.f32 %v774, %v1217
        %v1282 = vmul.f32 %v776, %v1218
        %v1283 = vmul.f32 %v887, %v1219
        %v1284 = vmul.f32 %v889, %v1220
        %v1285 = vmul.f32 %v780, %v1221
        %v1286 = vmul.f32 %v782, %v1222
        %v1287 = vmul.f32 %v893, %v1223
        %v1288 = vmul.f32 %v895, %v1224
        %v1289 = vmul.f32 %v784, %v1225
        %v1290 = vmul.f32 %v786, %v1226
        %v1291 = vmul.f32 %v897, %v1227
        %v1292 = vmul.f32 %v899, %v1228
        %v1293 = vmul.f32 %v790, %v1229
        %v1294 = vmul.f32 %v792, %v1230
        %v1295 = vmul.f32 %v903, %v1231
        %v1296 = vmul.f32 %v905, %v1232
        %v1297 = vmul.f32 %v794, %v1233
        %v1298 = vmul.f32 %v796, %v1234
        %v1299 = vmul.f32 %v907, %v1235
        %v1300 = vmul.f32 %v909, %v1236
        %v1301 = vmul.f32 %v800, %v1237
        %v1302 = vmul.f32 %v802, %v1238
        %v1303 = vmul.f32 %v913, %v1239
        %v1304 = vmul.f32 %v915, %v1240
        %v1305 = vmul.f32 %v804, %v1241
        %v1306 = vmul.f32 %v806, %v1242
        %v1307 = vmul.f32 %v917, %v1243
        %v1308 = vmul.f32 %v919, %v1244
        %v1309 = vmul.f32 %v810, %v1245
        %v1310 = vmul.f32 %v812, %v1246
        %v1311 = vmul.f32 %v923, %v1247
        %v1312 = vmul.f32 %v925, %v1248
        %v1313 = vmul.f32 %v814, %v1249
        %v1314 = vmul.f32 %v816, %v1250
        %v1315 = vmul.f32 %v927, %v1251
        %v1316 = vmul.f32 %v929, %v1252
        %v1317 = vmul.f32 %v820, %v1253
        %v1318 = vmul.f32 %v822, %v1254
        %v1319 = vmul.f32 %v933, %v1255
        %v1320 = vmul.f32 %v935, %v1256
        %v1321 = vmul.f32 %v824, %v1257
        %v1322 = vmul.f32 %v826, %v1258
        %v1323 = vmul.f32 %v937, %v1259
        %v1324 = vmul.f32 %v939, %v1260
        %v1325 = vpack.c.bf16 %v1265, %v1261
        %v1326 = vpack.c.bf16 %v1266, %v1262
        %v1327 = vpack.c.bf16 %v1267, %v1263
        %v1328 = vpack.c.bf16 %v1268, %v1264
        %v1329 = vpack.c.bf16 %v1273, %v1269
        %v1330 = vpack.c.bf16 %v1274, %v1270
        %v1331 = vpack.c.bf16 %v1275, %v1271
        %v1332 = vpack.c.bf16 %v1276, %v1272
        %v1333 = vpack.c.bf16 %v1281, %v1277
        %v1334 = vpack.c.bf16 %v1282, %v1278
        %v1335 = vpack.c.bf16 %v1283, %v1279
        %v1336 = vpack.c.bf16 %v1284, %v1280
        %v1337 = vpack.c.bf16 %v1289, %v1285
        %v1338 = vpack.c.bf16 %v1290, %v1286
        %v1339 = vpack.c.bf16 %v1291, %v1287
        %v1340 = vpack.c.bf16 %v1292, %v1288
        %v1341 = vpack.c.bf16 %v1297, %v1293
        %v1342 = vpack.c.bf16 %v1298, %v1294
        %v1343 = vpack.c.bf16 %v1299, %v1295
        %v1344 = vpack.c.bf16 %v1300, %v1296
        %v1345 = vpack.c.bf16 %v1305, %v1301
        %v1346 = vpack.c.bf16 %v1306, %v1302
        %v1347 = vpack.c.bf16 %v1307, %v1303
        %v1348 = vpack.c.bf16 %v1308, %v1304
        %v1349 = vpack.c.bf16 %v1313, %v1309
        %v1350 = vpack.c.bf16 %v1314, %v1310
        %v1351 = vpack.c.bf16 %v1315, %v1311
        %v1352 = vpack.c.bf16 %v1316, %v1312
        %v1353 = vpack.c.bf16 %v1321, %v1317
        %v1354 = vpack.c.bf16 %v1322, %v1318
        %v1355 = vpack.c.bf16 %v1323, %v1319
        %v1356 = vpack.c.bf16 %v1324, %v1320
        %v1357 = vld [vmem:[#allocation8] sm:$0xf]
        %v1358 = vld [vmem:[#allocation8 + $0x4] sm:$0xf]
        %v1359 = vld [vmem:[#allocation8 + $0x8] sm:$0xf]
        %v1360 = vld [vmem:[#allocation8 + $0xc] sm:$0xf]
        %v1361 = vld [vmem:[#allocation8 + $0x10] sm:$0xf]
        %v1362 = vld [vmem:[#allocation8 + $0x14] sm:$0xf]
        %v1363 = vld [vmem:[#allocation8 + $0x18] sm:$0xf]
        %v1364 = vld [vmem:[#allocation8 + $0x1c] sm:$0xf]
        %v1365 = vld [vmem:[#allocation8 + $0x20] sm:$0xf]
        %v1366 = vld [vmem:[#allocation8 + $0x24] sm:$0xf]
        %v1367 = vld [vmem:[#allocation8 + $0x28] sm:$0xf]
        %v1368 = vld [vmem:[#allocation8 + $0x2c] sm:$0xf]
        %v1369 = vld [vmem:[#allocation8 + $0x30] sm:$0xf]
        %v1370 = vld [vmem:[#allocation8 + $0x34] sm:$0xf]
        %v1371 = vld [vmem:[#allocation8 + $0x38] sm:$0xf]
        %v1372 = vld [vmem:[#allocation8 + $0x3c] sm:$0xf]
        %v1373 = vld [vmem:[#allocation8 + $0x40] sm:$0xf]
        %v1374 = vld [vmem:[#allocation8 + $0x44] sm:$0xf]
        %v1375 = vld [vmem:[#allocation8 + $0x48] sm:$0xf]
        %v1376 = vld [vmem:[#allocation8 + $0x4c] sm:$0xf]
        %v1377 = vld [vmem:[#allocation8 + $0x50] sm:$0xf]
        %v1378 = vld [vmem:[#allocation8 + $0x54] sm:$0xf]
        %v1379 = vld [vmem:[#allocation8 + $0x58] sm:$0xf]
        %v1380 = vld [vmem:[#allocation8 + $0x5c] sm:$0xf]
        %v1381 = vld [vmem:[#allocation8 + $0x60] sm:$0xf]
        %v1382 = vld [vmem:[#allocation8 + $0x64] sm:$0xf]
        %v1383 = vld [vmem:[#allocation8 + $0x68] sm:$0xf]
        %v1384 = vld [vmem:[#allocation8 + $0x6c] sm:$0xf]
        %v1385 = vld [vmem:[#allocation8 + $0x70] sm:$0xf]
        %v1386 = vld [vmem:[#allocation8 + $0x74] sm:$0xf]
        %v1387 = vld [vmem:[#allocation8 + $0x78] sm:$0xf]
        %v1388 = vld [vmem:[#allocation8 + $0x7c] sm:$0xf]
        %v1389 = vld [vmem:[#allocation8 + $0x80] sm:$0xf]
        %v1390 = vld [vmem:[#allocation8 + $0x84] sm:$0xf]
        %v1391 = vld [vmem:[#allocation8 + $0x88] sm:$0xf]
        %v1392 = vld [vmem:[#allocation8 + $0x8c] sm:$0xf]
        %v1393 = vld [vmem:[#allocation8 + $0x90] sm:$0xf]
        %v1394 = vld [vmem:[#allocation8 + $0x94] sm:$0xf]
        %v1395 = vld [vmem:[#allocation8 + $0x98] sm:$0xf]
        %v1396 = vld [vmem:[#allocation8 + $0x9c] sm:$0xf]
        %v1397 = vld [vmem:[#allocation8 + $0xa0] sm:$0xf]
        %v1398 = vld [vmem:[#allocation8 + $0xa4] sm:$0xf]
        %v1399 = vld [vmem:[#allocation8 + $0xa8] sm:$0xf]
        %v1400 = vld [vmem:[#allocation8 + $0xac] sm:$0xf]
        %v1401 = vld [vmem:[#allocation8 + $0xb0] sm:$0xf]
        %v1402 = vld [vmem:[#allocation8 + $0xb4] sm:$0xf]
        %v1403 = vld [vmem:[#allocation8 + $0xb8] sm:$0xf]
        %v1404 = vld [vmem:[#allocation8 + $0xbc] sm:$0xf]
        %v1405 = vld [vmem:[#allocation8 + $0xc0] sm:$0xf]
        %v1406 = vld [vmem:[#allocation8 + $0xc4] sm:$0xf]
        %v1407 = vld [vmem:[#allocation8 + $0xc8] sm:$0xf]
        %v1408 = vld [vmem:[#allocation8 + $0xcc] sm:$0xf]
        %v1409 = vld [vmem:[#allocation8 + $0xd0] sm:$0xf]
        %v1410 = vld [vmem:[#allocation8 + $0xd4] sm:$0xf]
        %v1411 = vld [vmem:[#allocation8 + $0xd8] sm:$0xf]
        %v1412 = vld [vmem:[#allocation8 + $0xdc] sm:$0xf]
        %v1413 = vld [vmem:[#allocation8 + $0xe0] sm:$0xf]
        %v1414 = vld [vmem:[#allocation8 + $0xe4] sm:$0xf]
        %v1415 = vld [vmem:[#allocation8 + $0xe8] sm:$0xf]
        %v1416 = vld [vmem:[#allocation8 + $0xec] sm:$0xf]
        %v1417 = vld [vmem:[#allocation8 + $0xf0] sm:$0xf]
        %v1418 = vld [vmem:[#allocation8 + $0xf4] sm:$0xf]
        %v1419 = vld [vmem:[#allocation8 + $0xf8] sm:$0xf]
        %v1420 = vld [vmem:[#allocation8 + $0xfc] sm:$0xf]
        %v1421 = vld [vmem:[#allocation10] sm:$0x1]
        %v1423 = vlaneseq
        %v1424 = vshrl.u32 %v1423, 7
        %v1425 = vsub.s32 0, %v1424
        %v1426 = vrot.slane %v1421, %v1425
        %v1492 = vunpack.c.l.b16 %v1357
        %v1493 = vunpack.c.l.b16 %v1358
        %v1494 = vunpack.c.l.b16 %v1359
        %v1495 = vunpack.c.l.b16 %v1360
        %v1496 = vunpack.c.l.b16 %v1361
        %v1497 = vunpack.c.l.b16 %v1362
        %v1498 = vunpack.c.l.b16 %v1363
        %v1499 = vunpack.c.l.b16 %v1364
        %v1500 = vunpack.c.l.b16 %v1365
        %v1501 = vunpack.c.l.b16 %v1366
        %v1502 = vunpack.c.l.b16 %v1367
        %v1503 = vunpack.c.l.b16 %v1368
        %v1504 = vunpack.c.l.b16 %v1369
        %v1505 = vunpack.c.l.b16 %v1370
        %v1506 = vunpack.c.l.b16 %v1371
        %v1507 = vunpack.c.l.b16 %v1372
        %v1508 = vunpack.c.l.b16 %v1373
        %v1509 = vunpack.c.l.b16 %v1374
        %v1510 = vunpack.c.l.b16 %v1375
        %v1511 = vunpack.c.l.b16 %v1376
        %v1512 = vunpack.c.l.b16 %v1377
        %v1513 = vunpack.c.l.b16 %v1378
        %v1514 = vunpack.c.l.b16 %v1379
        %v1515 = vunpack.c.l.b16 %v1380
        %v1516 = vunpack.c.l.b16 %v1381
        %v1517 = vunpack.c.l.b16 %v1382
        %v1518 = vunpack.c.l.b16 %v1383
        %v1519 = vunpack.c.l.b16 %v1384
        %v1520 = vunpack.c.l.b16 %v1385
        %v1521 = vunpack.c.l.b16 %v1386
        %v1522 = vunpack.c.l.b16 %v1387
        %v1523 = vunpack.c.l.b16 %v1388
        %v1524 = vunpack.c.l.b16 %v1389
        %v1525 = vunpack.c.l.b16 %v1390
        %v1526 = vunpack.c.l.b16 %v1391
        %v1527 = vunpack.c.l.b16 %v1392
        %v1528 = vunpack.c.l.b16 %v1393
        %v1529 = vunpack.c.l.b16 %v1394
        %v1530 = vunpack.c.l.b16 %v1395
        %v1531 = vunpack.c.l.b16 %v1396
        %v1532 = vunpack.c.l.b16 %v1397
        %v1533 = vunpack.c.l.b16 %v1398
        %v1534 = vunpack.c.l.b16 %v1399
        %v1535 = vunpack.c.l.b16 %v1400
        %v1536 = vunpack.c.l.b16 %v1401
        %v1537 = vunpack.c.l.b16 %v1402
        %v1538 = vunpack.c.l.b16 %v1403
        %v1539 = vunpack.c.l.b16 %v1404
        %v1540 = vunpack.c.l.b16 %v1405
        %v1541 = vunpack.c.l.b16 %v1406
        %v1542 = vunpack.c.l.b16 %v1407
        %v1543 = vunpack.c.l.b16 %v1408
        %v1544 = vunpack.c.l.b16 %v1409
        %v1545 = vunpack.c.l.b16 %v1410
        %v1546 = vunpack.c.l.b16 %v1411
        %v1547 = vunpack.c.l.b16 %v1412
        %v1548 = vunpack.c.l.b16 %v1413
        %v1549 = vunpack.c.l.b16 %v1414
        %v1550 = vunpack.c.l.b16 %v1415
        %v1551 = vunpack.c.l.b16 %v1416
        %v1552 = vunpack.c.l.b16 %v1417
        %v1553 = vunpack.c.l.b16 %v1418
        %v1554 = vunpack.c.l.b16 %v1419
        %v1555 = vunpack.c.l.b16 %v1420
        %v1556 = vpack.c.b16 %v1493, %v1492
        %v1557 = vpack.c.b16 %v1495, %v1494
        %v1558 = vpack.c.b16 %v1497, %v1496
        %v1559 = vpack.c.b16 %v1499, %v1498
        %v1560 = vpack.c.b16 %v1501, %v1500
        %v1561 = vpack.c.b16 %v1503, %v1502
        %v1562 = vpack.c.b16 %v1505, %v1504
        %v1563 = vpack.c.b16 %v1507, %v1506
        %v1564 = vpack.c.b16 %v1509, %v1508
        %v1565 = vpack.c.b16 %v1511, %v1510
        %v1566 = vpack.c.b16 %v1513, %v1512
        %v1567 = vpack.c.b16 %v1515, %v1514
        %v1568 = vpack.c.b16 %v1517, %v1516
        %v1569 = vpack.c.b16 %v1519, %v1518
        %v1570 = vpack.c.b16 %v1521, %v1520
        %v1571 = vpack.c.b16 %v1523, %v1522
        %v1572 = vpack.c.b16 %v1525, %v1524
        %v1573 = vpack.c.b16 %v1527, %v1526
        %v1574 = vpack.c.b16 %v1529, %v1528
        %v1575 = vpack.c.b16 %v1531, %v1530
        %v1576 = vpack.c.b16 %v1533, %v1532
        %v1577 = vpack.c.b16 %v1535, %v1534
        %v1578 = vpack.c.b16 %v1537, %v1536
        %v1579 = vpack.c.b16 %v1539, %v1538
        %v1580 = vpack.c.b16 %v1541, %v1540
        %v1581 = vpack.c.b16 %v1543, %v1542
        %v1582 = vpack.c.b16 %v1545, %v1544
        %v1583 = vpack.c.b16 %v1547, %v1546
        %v1584 = vpack.c.b16 %v1549, %v1548
        %v1585 = vpack.c.b16 %v1551, %v1550
        %v1586 = vpack.c.b16 %v1553, %v1552
        %v1587 = vpack.c.b16 %v1555, %v1554
        %1620 = vmatprep.subr.bf16.mxu0 0
        %1621 = vmatpush1.bf16.msra.mxu0 %v1556
        %1622 = vmatprep.subr.bf16.mxu0 0
        %1623 = vmatpush1.bf16.msra.mxu0 %v1557
        %1624 = vmatprep.subr.bf16.mxu0 0
        %1625 = vmatpush1.bf16.msra.mxu0 %v1558
        %1626 = vmatprep.subr.bf16.mxu0 0
        %1627 = vmatpush1.bf16.msra.mxu0 %v1559
        %1628 = vmatprep.subr.bf16.mxu0 0
        %1629 = vmatpush1.bf16.msra.mxu0 %v1560
        %1630 = vmatprep.subr.bf16.mxu0 0
        %1631 = vmatpush1.bf16.msra.mxu0 %v1561
        %1632 = vmatprep.subr.bf16.mxu0 0
        %1633 = vmatpush1.bf16.msra.mxu0 %v1562
        %1634 = vmatprep.subr.bf16.mxu0 0
        %1635 = vmatpush1.bf16.msra.mxu0 %v1563
        %1636 = vmatprep.subr.bf16.mxu0 0
        %1637 = vmatpush1.bf16.msra.mxu0 %v1564
        %1638 = vmatprep.subr.bf16.mxu0 0
        %1639 = vmatpush1.bf16.msra.mxu0 %v1565
        %1640 = vmatprep.subr.bf16.mxu0 0
        %1641 = vmatpush1.bf16.msra.mxu0 %v1566
        %1642 = vmatprep.subr.bf16.mxu0 0
        %1643 = vmatpush1.bf16.msra.mxu0 %v1567
        %1644 = vmatprep.subr.bf16.mxu0 0
        %1645 = vmatpush1.bf16.msra.mxu0 %v1568
        %1646 = vmatprep.subr.bf16.mxu0 0
        %1647 = vmatpush1.bf16.msra.mxu0 %v1569
        %1648 = vmatprep.subr.bf16.mxu0 0
        %1649 = vmatpush1.bf16.msra.mxu0 %v1570
        %1650 = vmatprep.subr.bf16.mxu0 0
        %1651 = vmatpush1.bf16.msra.mxu0 %v1571
        %1652 = vmatprep.mubr.bf16.mxu0 %v1326
        %1653 = vmatmul.mubr.bf16.gmra.mrb[0].mxu0 %v1325
        %v1654 = vpop.f32.mrb[0].mxu0
        %v1655 = vadd.f32 %v1426, %v1654
        %v1656 = vpop.f32.mrb[0].mxu0
        %v1657 = vpop.f32.mrb[0].mxu0
        %v1658 = vadd.f32 %v1426, %v1657
        %v1659 = vpop.f32.mrb[0].mxu0
        %1660 = vmatprep.mubr.bf16.mxu0 %v1330
        %1661 = vmatmul.mubr.bf16.gmra.mrb[0].mxu0 %v1329
        %v1662 = vpop.f32.mrb[0].mxu0
        %v1663 = vadd.f32 %v1426, %v1662
        %v1664 = vpop.f32.mrb[0].mxu0
        %v1665 = vpop.f32.mrb[0].mxu0
        %v1666 = vadd.f32 %v1426, %v1665
        %v1667 = vpop.f32.mrb[0].mxu0
        %1668 = vmatprep.mubr.bf16.mxu0 %v1334
        %1669 = vmatmul.mubr.bf16.gmra.mrb[0].mxu0 %v1333
        %v1670 = vpop.f32.mrb[0].mxu0
        %v1671 = vadd.f32 %v1426, %v1670
        %v1672 = vpop.f32.mrb[0].mxu0
        %v1673 = vpop.f32.mrb[0].mxu0
        %v1674 = vadd.f32 %v1426, %v1673
        %v1675 = vpop.f32.mrb[0].mxu0
        %1676 = vmatprep.mubr.bf16.mxu0 %v1338
        %1677 = vmatmul.mubr.bf16.gmra.mrb[0].mxu0 %v1337
        %v1678 = vpop.f32.mrb[0].mxu0
        %v1679 = vadd.f32 %v1426, %v1678
        %v1680 = vpop.f32.mrb[0].mxu0
        %v1681 = vpop.f32.mrb[0].mxu0
        %v1682 = vadd.f32 %v1426, %v1681
        %v1683 = vpop.f32.mrb[0].mxu0
        %1684 = vmatprep.mubr.bf16.mxu0 %v1342
        %1685 = vmatmul.mubr.bf16.gmra.mrb[0].mxu0 %v1341
        %v1686 = vpop.f32.mrb[0].mxu0
        %v1687 = vadd.f32 %v1426, %v1686
        %v1688 = vpop.f32.mrb[0].mxu0
        %v1689 = vpop.f32.mrb[0].mxu0
        %v1690 = vadd.f32 %v1426, %v1689
        %v1691 = vpop.f32.mrb[0].mxu0
        %1692 = vmatprep.mubr.bf16.mxu0 %v1346
        %1693 = vmatmul.mubr.bf16.gmra.mrb[0].mxu0 %v1345
        %v1694 = vpop.f32.mrb[0].mxu0
        %v1695 = vadd.f32 %v1426, %v1694
        %v1696 = vpop.f32.mrb[0].mxu0
        %v1697 = vpop.f32.mrb[0].mxu0
        %v1698 = vadd.f32 %v1426, %v1697
        %v1699 = vpop.f32.mrb[0].mxu0
        %1700 = vmatprep.mubr.bf16.mxu0 %v1350
        %1701 = vmatmul.mubr.bf16.gmra.mrb[0].mxu0 %v1349
        %v1702 = vpop.f32.mrb[0].mxu0
        %v1703 = vadd.f32 %v1426, %v1702
        %v1704 = vpop.f32.mrb[0].mxu0
        %v1705 = vpop.f32.mrb[0].mxu0
        %v1706 = vadd.f32 %v1426, %v1705
        %v1707 = vpop.f32.mrb[0].mxu0
        %1708 = vmatprep.mubr.bf16.mxu0 %v1354
        %1709 = vmatmul.mubr.bf16.gmra.mrb[0].mxu0 %v1353
        %v1710 = vpop.f32.mrb[0].mxu0
        %v1711 = vadd.f32 %v1426, %v1710
        %v1712 = vpop.f32.mrb[0].mxu0
        %v1713 = vpop.f32.mrb[0].mxu0
        %v1714 = vadd.f32 %v1426, %v1713
        %v1715 = vpop.f32.mrb[0].mxu0
        %1716 = vdwg.mxu0
        %1717 = vmatprep.subr.bf16.mxu0 0
        %1718 = vmatpush1.bf16.msra.mxu0 %v1572
        %1719 = vmatprep.subr.bf16.mxu0 0
        %1720 = vmatpush1.bf16.msra.mxu0 %v1573
        %1721 = vmatprep.subr.bf16.mxu0 0
        %1722 = vmatpush1.bf16.msra.mxu0 %v1574
        %1723 = vmatprep.subr.bf16.mxu0 0
        %1724 = vmatpush1.bf16.msra.mxu0 %v1575
        %1725 = vmatprep.subr.bf16.mxu0 0
        %1726 = vmatpush1.bf16.msra.mxu0 %v1576
        %1727 = vmatprep.subr.bf16.mxu0 0
        %1728 = vmatpush1.bf16.msra.mxu0 %v1577
        %1729 = vmatprep.subr.bf16.mxu0 0
        %1730 = vmatpush1.bf16.msra.mxu0 %v1578
        %1731 = vmatprep.subr.bf16.mxu0 0
        %1732 = vmatpush1.bf16.msra.mxu0 %v1579
        %1733 = vmatprep.subr.bf16.mxu0 0
        %1734 = vmatpush1.bf16.msra.mxu0 %v1580
        %1735 = vmatprep.subr.bf16.mxu0 0
        %1736 = vmatpush1.bf16.msra.mxu0 %v1581
        %1737 = vmatprep.subr.bf16.mxu0 0
        %1738 = vmatpush1.bf16.msra.mxu0 %v1582
        %1739 = vmatprep.subr.bf16.mxu0 0
        %1740 = vmatpush1.bf16.msra.mxu0 %v1583
        %1741 = vmatprep.subr.bf16.mxu0 0
        %1742 = vmatpush1.bf16.msra.mxu0 %v1584
        %1743 = vmatprep.subr.bf16.mxu0 0
        %1744 = vmatpush1.bf16.msra.mxu0 %v1585
        %1745 = vmatprep.subr.bf16.mxu0 0
        %1746 = vmatpush1.bf16.msra.mxu0 %v1586
        %1747 = vmatprep.subr.bf16.mxu0 0
        %1748 = vmatpush1.bf16.msra.mxu0 %v1587
        %1749 = vmatprep.mubr.bf16.mxu0 %v1328
        %1750 = vmatmul.mubr.bf16.gmra.mrb[0].mxu0 %v1327
        %v1751 = vpop.f32.mrb[0].mxu0
        %v1752 = vadd.f32 %v1655, %v1751
        %v1753 = vpop.f32.mrb[0].mxu0
        %v1754 = vpop.f32.mrb[0].mxu0
        %v1755 = vadd.f32 %v1658, %v1754
        %v1756 = vpop.f32.mrb[0].mxu0
        %1757 = vmatprep.mubr.bf16.mxu0 %v1332
        %1758 = vmatmul.mubr.bf16.gmra.mrb[0].mxu0 %v1331
        %v1759 = vpop.f32.mrb[0].mxu0
        %v1760 = vadd.f32 %v1663, %v1759
        %v1761 = vpop.f32.mrb[0].mxu0
        %v1762 = vpop.f32.mrb[0].mxu0
        %v1763 = vadd.f32 %v1666, %v1762
        %v1764 = vpop.f32.mrb[0].mxu0
        %1765 = vmatprep.mubr.bf16.mxu0 %v1336
        %1766 = vmatmul.mubr.bf16.gmra.mrb[0].mxu0 %v1335
        %v1767 = vpop.f32.mrb[0].mxu0
        %v1768 = vadd.f32 %v1671, %v1767
        %v1769 = vpop.f32.mrb[0].mxu0
        %v1770 = vpop.f32.mrb[0].mxu0
        %v1771 = vadd.f32 %v1674, %v1770
        %v1772 = vpop.f32.mrb[0].mxu0
        %1773 = vmatprep.mubr.bf16.mxu0 %v1340
        %1774 = vmatmul.mubr.bf16.gmra.mrb[0].mxu0 %v1339
        %v1775 = vpop.f32.mrb[0].mxu0
        %v1776 = vadd.f32 %v1679, %v1775
        %v1777 = vpop.f32.mrb[0].mxu0
        %v1778 = vpop.f32.mrb[0].mxu0
        %v1779 = vadd.f32 %v1682, %v1778
        %v1780 = vpop.f32.mrb[0].mxu0
        %1781 = vmatprep.mubr.bf16.mxu0 %v1344
        %1782 = vmatmul.mubr.bf16.gmra.mrb[0].mxu0 %v1343
        %v1783 = vpop.f32.mrb[0].mxu0
        %v1784 = vadd.f32 %v1687, %v1783
        %v1785 = vpop.f32.mrb[0].mxu0
        %v1786 = vpop.f32.mrb[0].mxu0
        %v1787 = vadd.f32 %v1690, %v1786
        %v1788 = vpop.f32.mrb[0].mxu0
        %1789 = vmatprep.mubr.bf16.mxu0 %v1348
        %1790 = vmatmul.mubr.bf16.gmra.mrb[0].mxu0 %v1347
        %v1791 = vpop.f32.mrb[0].mxu0
        %v1792 = vadd.f32 %v1695, %v1791
        %v1793 = vpop.f32.mrb[0].mxu0
        %v1794 = vpop.f32.mrb[0].mxu0
        %v1795 = vadd.f32 %v1698, %v1794
        %v1796 = vpop.f32.mrb[0].mxu0
        %1797 = vmatprep.mubr.bf16.mxu0 %v1352
        %1798 = vmatmul.mubr.bf16.gmra.mrb[0].mxu0 %v1351
        %v1799 = vpop.f32.mrb[0].mxu0
        %v1800 = vadd.f32 %v1703, %v1799
        %v1801 = vpop.f32.mrb[0].mxu0
        %v1802 = vpop.f32.mrb[0].mxu0
        %v1803 = vadd.f32 %v1706, %v1802
        %v1804 = vpop.f32.mrb[0].mxu0
        %1805 = vmatprep.mubr.bf16.mxu0 %v1356
        %1806 = vmatmul.mubr.bf16.gmra.mrb[0].mxu0 %v1355
        %v1807 = vpop.f32.mrb[0].mxu0
        %v1808 = vadd.f32 %v1711, %v1807
        %v1809 = vpop.f32.mrb[0].mxu0
        %v1810 = vpop.f32.mrb[0].mxu0
        %v1811 = vadd.f32 %v1714, %v1810
        %v1812 = vpop.f32.mrb[0].mxu0
        %1813 = vdwg.mxu0
        %1814 = vst [vmem:[%s296] sm:$0xff] %v1752
        %1815 = vst [vmem:[%s296 + $0x8] sm:$0xff] %v1755
        %1816 = vst [vmem:[%s296 + $0x10] sm:$0xff] %v1760
        %1817 = vst [vmem:[%s296 + $0x18] sm:$0xff] %v1763
        %1818 = vst [vmem:[%s296 + $0x20] sm:$0xff] %v1768
        %1819 = vst [vmem:[%s296 + $0x28] sm:$0xff] %v1771
        %1820 = vst [vmem:[%s296 + $0x30] sm:$0xff] %v1776
        %1821 = vst [vmem:[%s296 + $0x38] sm:$0xff] %v1779
        %1822 = vst [vmem:[%s296 + $0x40] sm:$0xff] %v1784
        %1823 = vst [vmem:[%s296 + $0x48] sm:$0xff] %v1787
        %1824 = vst [vmem:[%s296 + $0x50] sm:$0xff] %v1792
        %1825 = vst [vmem:[%s296 + $0x58] sm:$0xff] %v1795
        %1826 = vst [vmem:[%s296 + $0x60] sm:$0xff] %v1800
        %1827 = vst [vmem:[%s296 + $0x68] sm:$0xff] %v1803
        %1828 = vst [vmem:[%s296 + $0x70] sm:$0xff] %v1808
        %1829 = vst [vmem:[%s296 + $0x78] sm:$0xff] %v1811
        %s1830 = sand.u32 %s142, 1
        %s1831 = scalar_lea.sflag [#allocation4], %s1830
        %s1832 = sand.u32 %s142, 1
        %s1833 = smul.addr %s1832, 128
        %s1834 = scalar_lea.vmem [#allocation11], %s1833
        // Predicated region
        $region61: #{tpu_custom_call.1} parent=39 // pred_check
          %p1835 = pneg %p152
        $region62: #{tpu_custom_call.1} parent=39 // pred_check_branch
          %1837 = sbr.rel (%p1835) target = $region64
        $region63: #{tpu_custom_call.1} parent=39 // pred_region
          %s1838 = smul.u32 16, %s24
          %s1840 = ssub.s32 2048, 2048
          %1841 = vsyncadd %s1831, %s1840
          %s1842 = smul.addr %s1838, 128
          %s1843 = scalar_lea.hbm %s5, %s1842
          %s1844 = sshll.u32 %s1834, 4
          %s1845 = int_to_ptr.vmem [resolvable:$true] %s1844
          %1850 = dma.vmem_to_hbm [thread:$0]  %s1845, 2048, %s1843, %s1831, 128, 128, 8
        $region64: #{tpu_custom_call.1} parent=39 // pred_fallthru
          _
      $region40: #{tpu_custom_call.1} parent=5 // pred_fallthru
        _
      %p1851 = scmp.le.s32.totalorder 2, %s19
      // Predicated region
      $region65: #{tpu_custom_call.1} parent=5 // pred_check
        %p1852 = pneg %p1851
      $region66: #{tpu_custom_call.1} parent=5 // pred_check_branch
        %1854 = sbr.rel (%p1852) target = $region68
      $region67: #{tpu_custom_call.1} parent=5 // pred_region
        %s1855 = ssub.s32 %s19, 2
        // Predicated region
        $region69: #{tpu_custom_call.1} parent=67 // pred_check
          %p1856 = pneg %p158
        $region70: #{tpu_custom_call.1} parent=67 // pred_check_branch
          %1858 = sbr.rel (%p1856) target = $region72
        $region71: #{tpu_custom_call.1} parent=67 // pred_region
          %s1859 = sand.u32 %s143, 1
          %s1860 = scalar_lea.sflag [#allocation4], %s1859
          %s1861 = sand.u32 %s143, 1
          %s1862 = smul.addr %s1861, 128
          %s1863 = scalar_lea.vmem [#allocation11], %s1862
          %1864 = dma.done %s1860, 2048
        $region72: #{tpu_custom_call.1} parent=67 // pred_fallthru
          _
      $region68: #{tpu_custom_call.1} parent=5 // pred_fallthru
        _
    $region6: #{tpu_custom_call.1} parent=1 // loop_footer
      %s23 = sadd.s32 1, %s19
    $region7: #{tpu_custom_call.1} parent=1 // loop_footer_branch
      %18 = sbr.rel target = $region3
    $region8: #{tpu_custom_call.1} parent=1 // loop_exit
      _
    %1865 = vsyncpa [#allocation3], 1
    %s1866 = scalar_lea.sflag [#allocation3], 1
    %1867 = vsyncpa %s1866, 1
    %1868 = vsyncpa [#allocation6], 1
    %1869 = vsyncpa [#allocation9], 1
    %1870 = vsyncpa [#allocation4], 1
    %s1871 = scalar_lea.sflag [#allocation4], 1
    %1872 = vsyncpa %s1871, 1

</llo_original>
